<compile_context>
chip_gen: v5e
topology: v5e:2x2
jax: 0.10.0
libtpu: 0.0.40
codegen_flags: <defaults>
</compile_context>

<pallas_src>
import functools

import jax
import jax.numpy as jnp
from jax import lax
from jax.experimental import pallas as pl
from jax.experimental.pallas import tpu as pltpu


def _round_up(n, m):
    return ((n + m - 1) // m) * m


# ----------------------------------------------------------------------------
# Fused kernel: 4-layer GRU encoder + conditioner MLP + affine flow.
#   xf  : (S, TB, H)        time-major input tile (concat(x, feat) zero-padded to H)
#   y   : (TB, Fout)        abs->rel'd flat future, zero-padded lanes >= F
#   wih3/whh3 : (L, H, 3H)  bf16 fused gate weights [r|z|n]
#   bih3/bhh3 : (L, 1, 3H)  f32
#   w0..w2, b0..b2          conditioner MLP (bf16 weights / f32 bias)
#   wh  : (Hd, 2*Fout) bf16 fused [mu | log_sigma] head (zero-padded columns)
#   out : (TB, Fout)        packed [ z | delta_logpz | 0 ]  (lane F holds delta_logpz)
#   seq : VMEM (S, TB, H)   previous-layer output sequence
#   gi  : VMEM (S, TB, 3H)  staged input-side gate pre-activations for the current layer
# ----------------------------------------------------------------------------
def _trajflow_kernel(xf_ref, y_ref, wih_ref, whh_ref, bih_ref, bhh_ref,
                     w0_ref, b0_ref, w1_ref, b1_ref, w2_ref, b2_ref,
                     wh_ref, bh_ref, out_ref, seq_ref, gi_ref, *, f):
    S, TB, H = xf_ref.shape
    NL = wih_ref.shape[0]
    H3 = wih_ref.shape[2]
    Fout = out_ref.shape[1]

    # Two independent batch sub-chains hide MXU latency in the serial recurrence.
    two_chains = (TB >= 16) and (TB % 16 == 0)
    half = TB // 2 if two_chains else TB

    def make_steps(whh, bhh_b):
        def step0(gi):
            # t == 0: h is exactly zero -> hidden-side pre-activation is just the bias.
            rz = jax.nn.sigmoid(gi[:, :2 * H] + bhh_b[:, :2 * H])   # fused r|z sigmoid
            r, zg = rz[:, :H], rz[:, H:]
            n = jnp.tanh(gi[:, 2 * H:] + r * bhh_b[:, 2 * H:])
            return (1.0 - zg) * n

        def step(h, gi):
            gh = jnp.dot(h.astype(jnp.bfloat16), whh,
                         preferred_element_type=jnp.float32) + bhh_b
            rz = jax.nn.sigmoid(gi[:, :2 * H] + gh[:, :2 * H])      # fused r|z sigmoid
            r, zg = rz[:, :H], rz[:, H:]
            n = jnp.tanh(gi[:, 2 * H:] + r * gh[:, 2 * H:])
            return (1.0 - zg) * n + zg * h
        return step0, step

    emb = None
    for l in range(NL):                                   # static layer loop
        # Load the whole previous-layer sequence BEFORE the recurrence overwrites seq_ref.
        x_seq = (xf_ref[...] if l == 0 else seq_ref[...]).reshape(S * TB, H)
        wih = wih_ref[l]                                   # (H, 3H) bf16
        whh = whh_ref[l]                                   # (H, 3H) bf16
        bih = bih_ref[l]                                   # (1, 3H) f32
        bhh = bhh_ref[l]                                   # (1, 3H) f32

        # Hoisted input-side projection: ONE (S*TB, H) x (H, 3H) matmul (f32 acc) with the
        # input bias folded in; staged in VMEM so only (TB,3H) slices are live per step.
        gi_all = jnp.dot(x_seq.astype(jnp.bfloat16), wih,
                         preferred_element_type=jnp.float32) + bih   # (S*TB, 3H)
        gi_ref[...] = gi_all.reshape(S, TB, H3)

        # Hoisted hidden-side bias broadcast (broadcast_in_dim is not CSE'd by JAX).
        bhh_b = jnp.broadcast_to(bhh, (half, H3))
        step0, step = make_steps(whh, bhh_b)
        last = (l == NL - 1)

        # TODO(synk): if seq_len grows beyond ~16, switch this fully-unrolled loop to
        # lax.fori_loop(..., unroll=2..4) over gi_ref slices.
        if two_chains:
            gi0 = gi_ref[0]
            h_a = step0(gi0[:half, :])
            h_b = step0(gi0[half:, :])
            if not last:
                seq_ref[0, :half, :] = h_a
                seq_ref[0, half:, :] = h_b
            for t in range(1, S):
                gi = gi_ref[t]
                h_a = step(h_a, gi[:half, :])              # chain A
                h_b = step(h_b, gi[half:, :])              # chain B (independent -> overlap)
                if not last:
                    seq_ref[t, :half, :] = h_a
                    seq_ref[t, half:, :] = h_b
            if last:
                # Stitch the final hidden state through seq_ref (cheap VMEM staging).
                seq_ref[0, :half, :] = h_a
                seq_ref[0, half:, :] = h_b
                emb = seq_ref[0]
        else:
            h = step0(gi_ref[0])
            if not last:
                seq_ref[0] = h
            for t in range(1, S):
                h = step(h, gi_ref[t])
                if not last:
                    seq_ref[t] = h                          # feeds the next layer
            if last:
                emb = h

    # ---- conditional affine flow (fused into the same kernel) ----
    h1 = jnp.tanh(jnp.dot(emb.astype(jnp.bfloat16), w0_ref[...],
                          preferred_element_type=jnp.float32) + b0_ref[...])
    h2 = jnp.tanh(jnp.dot(h1.astype(jnp.bfloat16), w1_ref[...],
                          preferred_element_type=jnp.float32) + b1_ref[...])
    h3 = jnp.tanh(jnp.dot(h2.astype(jnp.bfloat16), w2_ref[...],
                          preferred_element_type=jnp.float32) + b2_ref[...])
    head = jnp.dot(h3.astype(jnp.bfloat16), wh_ref[...],
                   preferred_element_type=jnp.float32) + bh_ref[...]   # (TB, 2*Fout)
    mu = head[:, :Fout]                                    # lane-aligned slices
    s = head[:, Fout:]

    yv = y_ref[...]                                        # (TB, Fout), pad lanes are 0
    z = (yv - mu) * jnp.exp(-s)                            # pad lanes: (0-0)*exp(0) = 0
    # delta_logpz = sum(log_sigma)  (log p(y) = log p(z) - delta_logpz); pad lanes of s are 0.
    dlp = jnp.sum(s, axis=-1, keepdims=True)               # (TB, 1)

    # Packed, lane-dense output: z in lanes [0, f), delta_logpz at lane f, zeros elsewhere.
    lane = lax.broadcasted_iota(jnp.int32, (TB, Fout), 1)
    out_ref[...] = jnp.where(lane == f, jnp.broadcast_to(dlp, (TB, Fout)), z)


def _trajflow_call(xf_tm, y_flat, gru_p, flow_p, *, tb, f):
    S, Bp, H = xf_tm.shape
    L, _, H3 = gru_p["wih3"].shape
    Fout = y_flat.shape[1]
    Hd = flow_p["w0"].shape[1]
    assert Bp % tb == 0
    return pl.pallas_call(
        functools.partial(_trajflow_kernel, f=f),
        out_shape=jax.ShapeDtypeStruct((Bp, Fout), jnp.float32),
        grid_spec=pltpu.PrefetchScalarGridSpec(
            num_scalar_prefetch=0,
            grid=(Bp // tb,),
            in_specs=[
                pl.BlockSpec((S, tb, H), lambda b: (0, b, 0)),
                pl.BlockSpec((tb, Fout), lambda b: (b, 0)),
                pl.BlockSpec((L, H, H3), lambda b: (0, 0, 0)),
                pl.BlockSpec((L, H, H3), lambda b: (0, 0, 0)),
                pl.BlockSpec((L, 1, H3), lambda b: (0, 0, 0)),
                pl.BlockSpec((L, 1, H3), lambda b: (0, 0, 0)),
                pl.BlockSpec((H, Hd), lambda b: (0, 0)),
                pl.BlockSpec((1, Hd), lambda b: (0, 0)),
                pl.BlockSpec((Hd, Hd), lambda b: (0, 0)),
                pl.BlockSpec((1, Hd), lambda b: (0, 0)),
                pl.BlockSpec((Hd, Hd), lambda b: (0, 0)),
                pl.BlockSpec((1, Hd), lambda b: (0, 0)),
                pl.BlockSpec((Hd, 2 * Fout), lambda b: (0, 0)),
                pl.BlockSpec((1, 2 * Fout), lambda b: (0, 0)),
            ],
            out_specs=pl.BlockSpec((tb, Fout), lambda b: (b, 0)),
            scratch_shapes=[pltpu.VMEM((S, tb, H), jnp.float32),
                            pltpu.VMEM((S, tb, H3), jnp.float32)],
        ),
        compiler_params=pltpu.CompilerParams(
            dimension_semantics=("parallel",),
            vmem_limit_bytes=32 * 1024 * 1024),
    )(xf_tm, y_flat,
      gru_p["wih3"], gru_p["whh3"], gru_p["bih3"], gru_p["bhh3"],
      flow_p["w0"], flow_p["b0"], flow_p["w1"], flow_p["b1"],
      flow_p["w2"], flow_p["b2"], flow_p["whead"], flow_p["bhead"])


# ----------------------------------------------------------------------------
# TrajFlow wrapper (marginal=False, causal_encoder=GRU, flow=affine surrogate).
# ----------------------------------------------------------------------------
class TrajFlowPallas:
    def __init__(self, seq_len, input_dim, feature_dim, embedding_dim, hidden_dim,
                 num_layers=4, marginal=False, seed=0):
        assert not marginal, "only marginal=False path is implemented"
        self.seq_len = seq_len
        self.input_dim = input_dim
        self.feature_dim = feature_dim
        self.embedding_dim = embedding_dim
        self.hidden_dim = hidden_dim
        self.alpha = 10.0
        self.marginal = marginal

        H = embedding_dim
        H3 = 3 * H
        Hd = hidden_dim
        F = seq_len * input_dim
        Fout = _round_up(F + 1, 128)       # z lanes [0,F), delta_logpz at lane F
        self.F = F
        self.Fout = Fout
        in_cat = input_dim + feature_dim
        assert in_cat <= H, "concat(x, feat) width must fit into embedding_dim pad"

        key = jax.random.PRNGKey(seed)
        ks = jax.random.split(key, 12)
        sc = lambda fan: 1.0 / jnp.sqrt(jnp.float32(fan))

        # Fused GRU gate weights, order [r | z | n].
        wih3 = sc(H) * jax.random.normal(ks[0], (num_layers, H, H3), jnp.float32)
        # Layer-0 real input width is in_cat; zero the padded rows so the zero-padded
        # input columns are exactly neutralized (re-apply if external weights are loaded).
        wih3 = wih3.at[0, in_cat:, :].set(0.0)
        self.gru_params = dict(
            wih3=wih3.astype(jnp.bfloat16),
            whh3=(sc(H) * jax.random.normal(ks[1], (num_layers, H, H3),
                                            jnp.float32)).astype(jnp.bfloat16),
            bih3=sc(H) * jax.random.normal(ks[2], (num_layers, 1, H3), jnp.float32),
            bhh3=sc(H) * jax.random.normal(ks[3], (num_layers, 1, H3), jnp.float32),
        )

        # Conditional affine flow head, zero-padded to lane-dense 2*Fout columns.
        wmu = sc(Hd) * jax.random.normal(ks[7], (Hd, F), jnp.float32)
        ws = 0.1 * sc(Hd) * jax.random.normal(ks[8], (Hd, F), jnp.float32)
        whead = jnp.zeros((Hd, 2 * Fout), jnp.float32)
        whead = whead.at[:, :F].set(wmu)
        whead = whead.at[:, Fout:Fout + F].set(ws)
        self.flow_params = dict(
            w0=(sc(H) * jax.random.normal(ks[4], (H, Hd), jnp.float32)).astype(jnp.bfloat16),
            b0=jnp.zeros((1, Hd), jnp.float32),
            w1=(sc(Hd) * jax.random.normal(ks[5], (Hd, Hd), jnp.float32)).astype(jnp.bfloat16),
            b1=jnp.zeros((1, Hd), jnp.float32),
            w2=(sc(Hd) * jax.random.normal(ks[6], (Hd, Hd), jnp.float32)).astype(jnp.bfloat16),
            b2=jnp.zeros((1, Hd), jnp.float32),
            whead=whead.astype(jnp.bfloat16),              # (Hd, 2*Fout)
            bhead=jnp.zeros((1, 2 * Fout), jnp.float32),
        )

    def _pick_tile(self, B):
        Bp8 = _round_up(max(B, 1), 8)
        if Bp8 <= 8:
            tb = Bp8
        else:
            # >= 2 grid iterations whenever possible (v7x: 2 TensorCores), per-tile rows
            # capped at 256 (v6e/v7x MXU M-fill); tiles stay multiples of 8 (sublanes).
            ntiles = max(2, -(-Bp8 // 256))
            tb = _round_up(-(-Bp8 // ntiles), 8)
        Bp = _round_up(Bp8, tb)
        return tb, Bp

    def forward(self, x, y, feat):
        x = x.astype(jnp.float32)
        y = y.astype(jnp.float32)
        feat = feat.astype(jnp.float32)
        B, S, D = y.shape
        F = S * D
        assert F == self.F
        H = self.embedding_dim
        Fout = self.Fout

        tb, Bp = self._pick_tile(B)
        pad_b = Bp - B

        # ---- abs -> rel as a tiny wrapper prepass (removes the in-kernel (F,F) shift
        # matmul and the whole x_t input stream: the diff cancels x_t after step 0). ----
        x_t = x[:, -1:, :]                                             # (B, 1, D)
        y_rel = y - x_t
        y_rel = jnp.concatenate([y_rel[:, :1], y_rel[:, 1:] - y_rel[:, :-1]],
                                axis=1) * self.alpha
        y_flat = jnp.pad(y_rel.reshape(B, F), ((0, pad_b), (0, Fout - F)))

        # ---- causal-encoder input: time-major, feature width zero-padded to H ----
        xf = jnp.concatenate([x, feat], axis=-1)                       # (B, S_obs, in_cat)
        # t = linspace(0, 2, 2*S)[:S] only feeds the CDE encoder.
        # TODO(synk): t is unused by the GRU causal encoder (matches reference GRU path).
        xf = jnp.pad(xf, ((0, pad_b), (0, 0), (0, H - xf.shape[-1])))  # (Bp, S_obs, H)
        xf_tm = jnp.transpose(xf, (1, 0, 2))                           # (S_obs, Bp, H)

        out = _trajflow_call(xf_tm, y_flat, self.gru_params, self.flow_params,
                             tb=tb, f=F)                               # (Bp, Fout)
        z = out[:B, :F].reshape(B, S, D)
        delta_logpz = out[:B, F:F + 1]                                 # (B, 1)
        return z, delta_logpz


# ----------------------------------------------------------------------------
# Pure-JAX f32 reference (same surrogate math) for a loose correctness check.
# ----------------------------------------------------------------------------
def _reference_forward(model, x, y, feat):
    B, S, D = y.shape
    F = S * D
    H = model.embedding_dim
    x_t = x[:, -1:, :]
    y_rel = y - x_t
    y_rel = jnp.concatenate([y_rel[:, :1], y_rel[:, 1:] - y_rel[:, :-1]],
                            axis=1) * model.alpha
    y_flat = y_rel.reshape(B, F)

    xf = jnp.concatenate([x, feat], axis=-1)
    xf = jnp.pad(xf, ((0, 0), (0, 0), (0, H - xf.shape[-1])))
    gp = model.gru_params
    NL = gp["wih3"].shape[0]
    h_seq = xf
    h = jnp.zeros((B, H), jnp.float32)
    for l in range(NL):
        wih = gp["wih3"][l].astype(jnp.float32)
        whh = gp["whh3"][l].astype(jnp.float32)
        bih = gp["bih3"][l]
        bhh = gp["bhh3"][l]
        h = jnp.zeros((B, H), jnp.float32)
        outs = []
        for t in range(h_seq.shape[1]):
            gi = h_seq[:, t, :] @ wih + bih
            gh = h @ whh + bhh
            r = jax.nn.sigmoid(gi[:, :H] + gh[:, :H])
            zg = jax.nn.sigmoid(gi[:, H:2 * H] + gh[:, H:2 * H])
            n = jnp.tanh(gi[:, 2 * H:] + r * gh[:, 2 * H:])
            h = (1.0 - zg) * n + zg * h
            outs.append(h)
        h_seq = jnp.stack(outs, axis=1)
    emb = h

    fp = model.flow_params
    hh = jnp.tanh(emb @ fp["w0"].astype(jnp.float32) + fp["b0"])
    hh = jnp.tanh(hh @ fp["w1"].astype(jnp.float32) + fp["b1"])
    hh = jnp.tanh(hh @ fp["w2"].astype(jnp.float32) + fp["b2"])
    head = hh @ fp["whead"].astype(jnp.float32) + fp["bhead"]
    Fout = model.Fout
    mu = head[:, :F]
    s = head[:, Fout:Fout + F]
    z = (y_flat - mu) * jnp.exp(-s)
    dlp = jnp.sum(s, axis=-1, keepdims=True)
    return z.reshape(B, S, D), dlp


if __name__ == "__main__":
    # Small deterministic shapes: batch=2, obs/pred seq=8, input_dim=2, feature_dim=2,
    # embedding_dim=32, hidden_dim=64.
    B, S, D, FEAT = 2, 8, 2, 2
    EMB, HID = 32, 64

    key = jax.random.PRNGKey(0)
    kx, ky, kf = jax.random.split(key, 3)
    x = jax.random.normal(kx, (B, S, D), jnp.float32)
    y = jax.random.normal(ky, (B, S, D), jnp.float32)
    feat = jax.random.normal(kf, (B, S, FEAT), jnp.float32)

    model = TrajFlowPallas(seq_len=S, input_dim=D, feature_dim=FEAT,
                           embedding_dim=EMB, hidden_dim=HID)

    z, delta_logpz = model.forward(x, y, feat)
    jax.block_until_ready(z)
    jax.block_until_ready(delta_logpz)

    assert z.shape == (B, S, D) and z.dtype == jnp.float32
    assert delta_logpz.shape == (B, 1)
    assert bool(jnp.all(jnp.isfinite(z))) and bool(jnp.all(jnp.isfinite(delta_logpz)))

    # Loose check against the f32 pure-JAX reference (kernel uses bf16 weights/activations
    # at matmul inputs, so tolerances are intentionally generous).
    z_ref, dlp_ref = _reference_forward(model, x, y, feat)

    def _scaled_err(a, b):
        return float(jnp.max(jnp.abs(a - b)) / (1.0 + jnp.max(jnp.abs(b))))

    assert _scaled_err(z, z_ref) < 2e-2, _scaled_err(z, z_ref)
    assert _scaled_err(delta_logpz, dlp_ref) < 5e-2, _scaled_err(delta_logpz, dlp_ref)

    print("KERNEL_OK")
</pallas_src>

<mosaic_0001>
module attributes {stable_mosaic.version = 11 : i64} {
  func.func @_trajflow_kernel(%arg0: i32, %arg1: memref<8x8x32xf32, #tpu.memory_space<vmem>>, %arg2: memref<8x128xf32, #tpu.memory_space<vmem>>, %arg3: memref<4x32x96xbf16, #tpu.memory_space<vmem>>, %arg4: memref<4x32x96xbf16, #tpu.memory_space<vmem>>, %arg5: memref<4x1x96xf32, #tpu.memory_space<vmem>>, %arg6: memref<4x1x96xf32, #tpu.memory_space<vmem>>, %arg7: memref<32x64xbf16, #tpu.memory_space<vmem>>, %arg8: memref<1x64xf32, #tpu.memory_space<vmem>>, %arg9: memref<64x64xbf16, #tpu.memory_space<vmem>>, %arg10: memref<1x64xf32, #tpu.memory_space<vmem>>, %arg11: memref<64x64xbf16, #tpu.memory_space<vmem>>, %arg12: memref<1x64xf32, #tpu.memory_space<vmem>>, %arg13: memref<64x256xbf16, #tpu.memory_space<vmem>>, %arg14: memref<1x256xf32, #tpu.memory_space<vmem>>, %arg15: memref<8x128xf32, #tpu.memory_space<vmem>>, %arg16: memref<8x8x32xf32, #tpu.memory_space<vmem>>, %arg17: memref<8x8x96xf32, #tpu.memory_space<vmem>>) attributes {dimension_semantics = [#tpu.dimension_semantics<parallel>], iteration_bounds = array<i64: 1>, scalar_prefetch = 0 : i64, scratch_operands = 2 : i64, tpu.core_type = #tpu.core_type<tc>, window_params = [{transform_indices = @transform_0, window_bounds = array<i64: 8, 8, 32>}, {transform_indices = @transform_1, window_bounds = array<i64: 8, 128>}, {pipeline_mode = #tpu.pipeline_mode<synchronous>, transform_indices = @transform_2, window_bounds = array<i64: 4, 32, 96>}, {pipeline_mode = #tpu.pipeline_mode<synchronous>, transform_indices = @transform_3, window_bounds = array<i64: 4, 32, 96>}, {pipeline_mode = #tpu.pipeline_mode<synchronous>, transform_indices = @transform_4, window_bounds = array<i64: 4, 1, 96>}, {pipeline_mode = #tpu.pipeline_mode<synchronous>, transform_indices = @transform_5, window_bounds = array<i64: 4, 1, 96>}, {pipeline_mode = #tpu.pipeline_mode<synchronous>, transform_indices = @transform_6, window_bounds = array<i64: 32, 64>}, {pipeline_mode = #tpu.pipeline_mode<synchronous>, transform_indices = @transform_7, window_bounds = array<i64: 1, 64>}, {pipeline_mode = #tpu.pipeline_mode<synchronous>, transform_indices = @transform_8, window_bounds = array<i64: 64, 64>}, {pipeline_mode = #tpu.pipeline_mode<synchronous>, transform_indices = @transform_9, window_bounds = array<i64: 1, 64>}, {pipeline_mode = #tpu.pipeline_mode<synchronous>, transform_indices = @transform_10, window_bounds = array<i64: 64, 64>}, {pipeline_mode = #tpu.pipeline_mode<synchronous>, transform_indices = @transform_11, window_bounds = array<i64: 1, 64>}, {pipeline_mode = #tpu.pipeline_mode<synchronous>, transform_indices = @transform_12, window_bounds = array<i64: 64, 256>}, {pipeline_mode = #tpu.pipeline_mode<synchronous>, transform_indices = @transform_13, window_bounds = array<i64: 1, 256>}, {transform_indices = @transform_14, window_bounds = array<i64: 8, 128>}]} {
    %c0 = arith.constant 0 : index
    %c0_0 = arith.constant 0 : index
    %c0_1 = arith.constant 0 : index
    %0 = vector.load %arg1[%c0, %c0_0, %c0_1] : memref<8x8x32xf32, #tpu.memory_space<vmem>>, vector<8x8x32xf32>
    %1 = vector.shape_cast %0 : vector<8x8x32xf32> to vector<64x32xf32>
    %c0_2 = arith.constant 0 : index
    %c0_3 = arith.constant 0 : index
    %c0_4 = arith.constant 0 : index
    %2 = vector.load %arg3[%c0_2, %c0_3, %c0_4] : memref<4x32x96xbf16, #tpu.memory_space<vmem>>, vector<1x32x96xbf16>
    %3 = vector.shape_cast %2 : vector<1x32x96xbf16> to vector<32x96xbf16>
    %c0_5 = arith.constant 0 : index
    %c0_6 = arith.constant 0 : index
    %c0_7 = arith.constant 0 : index
    %4 = vector.load %arg4[%c0_5, %c0_6, %c0_7] : memref<4x32x96xbf16, #tpu.memory_space<vmem>>, vector<1x32x96xbf16>
    %5 = vector.shape_cast %4 : vector<1x32x96xbf16> to vector<32x96xbf16>
    %c0_8 = arith.constant 0 : index
    %c0_9 = arith.constant 0 : index
    %c0_10 = arith.constant 0 : index
    %6 = vector.load %arg5[%c0_8, %c0_9, %c0_10] : memref<4x1x96xf32, #tpu.memory_space<vmem>>, vector<1x1x96xf32>
    %7 = vector.shape_cast %6 : vector<1x1x96xf32> to vector<1x96xf32>
    %c0_11 = arith.constant 0 : index
    %c0_12 = arith.constant 0 : index
    %c0_13 = arith.constant 0 : index
    %8 = vector.load %arg6[%c0_11, %c0_12, %c0_13] : memref<4x1x96xf32, #tpu.memory_space<vmem>>, vector<1x1x96xf32>
    %9 = vector.shape_cast %8 : vector<1x1x96xf32> to vector<1x96xf32>
    %10 = arith.truncf %1 : vector<64x32xf32> to vector<64x32xbf16>
    %cst = arith.constant dense<0.000000e+00> : vector<64x96xf32>
    %11 = tpu.matmul %10, %3, %cst {dimension_numbers = #tpu.dot_dimension_numbers<[1], [0], [0], [1], [0, 0, 1, 1], [], []>} : vector<64x32xbf16>, vector<32x96xbf16>, vector<64x96xf32> -> vector<64x96xf32>
    %12 = vector.broadcast %7 : vector<1x96xf32> to vector<64x96xf32>
    %13 = arith.addf %11, %12 : vector<64x96xf32>
    %14 = vector.shape_cast %13 : vector<64x96xf32> to vector<8x8x96xf32>
    %c0_14 = arith.constant 0 : index
    %c0_15 = arith.constant 0 : index
    %c0_16 = arith.constant 0 : index
    %15 = vector.load %arg17[%c0_14, %c0_15, %c0_16] : memref<8x8x96xf32, #tpu.memory_space<vmem>>, vector<8x8x96xf32>
    tpu.vector_store %arg17[%c0_14, %c0_15, %c0_16], %14 {strides = array<i32>} : memref<8x8x96xf32, #tpu.memory_space<vmem>>, vector<8x8x96xf32>,
    %16 = vector.shape_cast %9 : vector<1x96xf32> to vector<1x96xf32>
    %17 = vector.broadcast %16 : vector<1x96xf32> to vector<8x96xf32>
    %c0_17 = arith.constant 0 : index
    %c0_18 = arith.constant 0 : index
    %c0_19 = arith.constant 0 : index
    %18 = vector.load %arg17[%c0_17, %c0_18, %c0_19] : memref<8x8x96xf32, #tpu.memory_space<vmem>>, vector<1x8x96xf32>
    %19 = vector.shape_cast %18 : vector<1x8x96xf32> to vector<8x96xf32>
    %20 = vector.extract_strided_slice %19 {offsets = [0, 0], sizes = [8, 64], strides = [1, 1]} : vector<8x96xf32> to vector<8x64xf32>
    %21 = vector.extract_strided_slice %17 {offsets = [0, 0], sizes = [8, 64], strides = [1, 1]} : vector<8x96xf32> to vector<8x64xf32>
    %22 = arith.addf %20, %21 : vector<8x64xf32>
    %23 = arith.negf %22 : vector<8x64xf32>
    %24 = math.exp %23 : vector<8x64xf32>
    %cst_20 = arith.constant 1.000000e+00 : f32
    %25 = vector.broadcast %cst_20 : f32 to vector<8x64xf32>
    %26 = arith.addf %25, %24 : vector<8x64xf32>
    %27 = arith.divf %25, %26 : vector<8x64xf32>
    %28 = vector.extract_strided_slice %27 {offsets = [0, 0], sizes = [8, 32], strides = [1, 1]} : vector<8x64xf32> to vector<8x32xf32>
    %29 = vector.extract_strided_slice %27 {offsets = [0, 32], sizes = [8, 32], strides = [1, 1]} : vector<8x64xf32> to vector<8x32xf32>
    %30 = vector.extract_strided_slice %19 {offsets = [0, 64], sizes = [8, 32], strides = [1, 1]} : vector<8x96xf32> to vector<8x32xf32>
    %31 = vector.extract_strided_slice %17 {offsets = [0, 64], sizes = [8, 32], strides = [1, 1]} : vector<8x96xf32> to vector<8x32xf32>
    %32 = arith.mulf %28, %31 : vector<8x32xf32>
    %33 = arith.addf %30, %32 : vector<8x32xf32>
    %34 = math.tanh %33 : vector<8x32xf32>
    %cst_21 = arith.constant 1.000000e+00 : f32
    %35 = vector.broadcast %cst_21 : f32 to vector<8x32xf32>
    %36 = arith.subf %35, %29 : vector<8x32xf32>
    %37 = arith.mulf %36, %34 : vector<8x32xf32>
    %c0_22 = arith.constant 0 : index
    %c0_23 = arith.constant 0 : index
    %c0_24 = arith.constant 0 : index
    %38 = vector.load %arg16[%c0_22, %c0_23, %c0_24] : memref<8x8x32xf32, #tpu.memory_space<vmem>>, vector<1x8x32xf32>
    %39 = vector.shape_cast %38 : vector<1x8x32xf32> to vector<8x32xf32>
    %40 = vector.shape_cast %37 : vector<8x32xf32> to vector<1x8x32xf32>
    tpu.vector_store %arg16[%c0_22, %c0_23, %c0_24], %40 {strides = array<i32>} : memref<8x8x32xf32, #tpu.memory_space<vmem>>, vector<1x8x32xf32>,
    %c1 = arith.constant 1 : index
    %c0_25 = arith.constant 0 : index
    %c0_26 = arith.constant 0 : index
    %41 = vector.load %arg17[%c1, %c0_25, %c0_26] : memref<8x8x96xf32, #tpu.memory_space<vmem>>, vector<1x8x96xf32>
    %42 = vector.shape_cast %41 : vector<1x8x96xf32> to vector<8x96xf32>
    %43 = arith.truncf %37 : vector<8x32xf32> to vector<8x32xbf16>
    %cst_27 = arith.constant dense<0.000000e+00> : vector<8x96xf32>
    %44 = tpu.matmul %43, %5, %cst_27 {dimension_numbers = #tpu.dot_dimension_numbers<[1], [0], [0], [1], [0, 0, 1, 1], [], []>} : vector<8x32xbf16>, vector<32x96xbf16>, vector<8x96xf32> -> vector<8x96xf32>
    %45 = arith.addf %44, %17 : vector<8x96xf32>
    %46 = vector.extract_strided_slice %42 {offsets = [0, 0], sizes = [8, 64], strides = [1, 1]} : vector<8x96xf32> to vector<8x64xf32>
    %47 = vector.extract_strided_slice %45 {offsets = [0, 0], sizes = [8, 64], strides = [1, 1]} : vector<8x96xf32> to vector<8x64xf32>
    %48 = arith.addf %46, %47 : vector<8x64xf32>
    %49 = arith.negf %48 : vector<8x64xf32>
    %50 = math.exp %49 : vector<8x64xf32>
    %cst_28 = arith.constant 1.000000e+00 : f32
    %51 = vector.broadcast %cst_28 : f32 to vector<8x64xf32>
    %52 = arith.addf %51, %50 : vector<8x64xf32>
    %53 = arith.divf %51, %52 : vector<8x64xf32>
    %54 = vector.extract_strided_slice %53 {offsets = [0, 0], sizes = [8, 32], strides = [1, 1]} : vector<8x64xf32> to vector<8x32xf32>
    %55 = vector.extract_strided_slice %53 {offsets = [0, 32], sizes = [8, 32], strides = [1, 1]} : vector<8x64xf32> to vector<8x32xf32>
    %56 = vector.extract_strided_slice %42 {offsets = [0, 64], sizes = [8, 32], strides = [1, 1]} : vector<8x96xf32> to vector<8x32xf32>
    %57 = vector.extract_strided_slice %45 {offsets = [0, 64], sizes = [8, 32], strides = [1, 1]} : vector<8x96xf32> to vector<8x32xf32>
    %58 = arith.mulf %54, %57 : vector<8x32xf32>
    %59 = arith.addf %56, %58 : vector<8x32xf32>
    %60 = math.tanh %59 : vector<8x32xf32>
    %cst_29 = arith.constant 1.000000e+00 : f32
    %61 = vector.broadcast %cst_29 : f32 to vector<8x32xf32>
    %62 = arith.subf %61, %55 : vector<8x32xf32>
    %63 = arith.mulf %62, %60 : vector<8x32xf32>
    %64 = arith.mulf %55, %37 : vector<8x32xf32>
    %65 = arith.addf %63, %64 : vector<8x32xf32>
    %c1_30 = arith.constant 1 : index
    %c0_31 = arith.constant 0 : index
    %c0_32 = arith.constant 0 : index
    %66 = vector.load %arg16[%c1_30, %c0_31, %c0_32] : memref<8x8x32xf32, #tpu.memory_space<vmem>>, vector<1x8x32xf32>
    %67 = vector.shape_cast %66 : vector<1x8x32xf32> to vector<8x32xf32>
    %68 = vector.shape_cast %65 : vector<8x32xf32> to vector<1x8x32xf32>
    tpu.vector_store %arg16[%c1_30, %c0_31, %c0_32], %68 {strides = array<i32>} : memref<8x8x32xf32, #tpu.memory_space<vmem>>, vector<1x8x32xf32>,
    %c2 = arith.constant 2 : index
    %c0_33 = arith.constant 0 : index
    %c0_34 = arith.constant 0 : index
    %69 = vector.load %arg17[%c2, %c0_33, %c0_34] : memref<8x8x96xf32, #tpu.memory_space<vmem>>, vector<1x8x96xf32>
    %70 = vector.shape_cast %69 : vector<1x8x96xf32> to vector<8x96xf32>
    %71 = arith.truncf %65 : vector<8x32xf32> to vector<8x32xbf16>
    %cst_35 = arith.constant dense<0.000000e+00> : vector<8x96xf32>
    %72 = tpu.matmul %71, %5, %cst_35 {dimension_numbers = #tpu.dot_dimension_numbers<[1], [0], [0], [1], [0, 0, 1, 1], [], []>} : vector<8x32xbf16>, vector<32x96xbf16>, vector<8x96xf32> -> vector<8x96xf32>
    %73 = arith.addf %72, %17 : vector<8x96xf32>
    %74 = vector.extract_strided_slice %70 {offsets = [0, 0], sizes = [8, 64], strides = [1, 1]} : vector<8x96xf32> to vector<8x64xf32>
    %75 = vector.extract_strided_slice %73 {offsets = [0, 0], sizes = [8, 64], strides = [1, 1]} : vector<8x96xf32> to vector<8x64xf32>
    %76 = arith.addf %74, %75 : vector<8x64xf32>
    %77 = arith.negf %76 : vector<8x64xf32>
    %78 = math.exp %77 : vector<8x64xf32>
    %cst_36 = arith.constant 1.000000e+00 : f32
    %79 = vector.broadcast %cst_36 : f32 to vector<8x64xf32>
    %80 = arith.addf %79, %78 : vector<8x64xf32>
    %81 = arith.divf %79, %80 : vector<8x64xf32>
    %82 = vector.extract_strided_slice %81 {offsets = [0, 0], sizes = [8, 32], strides = [1, 1]} : vector<8x64xf32> to vector<8x32xf32>
    %83 = vector.extract_strided_slice %81 {offsets = [0, 32], sizes = [8, 32], strides = [1, 1]} : vector<8x64xf32> to vector<8x32xf32>
    %84 = vector.extract_strided_slice %70 {offsets = [0, 64], sizes = [8, 32], strides = [1, 1]} : vector<8x96xf32> to vector<8x32xf32>
    %85 = vector.extract_strided_slice %73 {offsets = [0, 64], sizes = [8, 32], strides = [1, 1]} : vector<8x96xf32> to vector<8x32xf32>
    %86 = arith.mulf %82, %85 : vector<8x32xf32>
    %87 = arith.addf %84, %86 : vector<8x32xf32>
    %88 = math.tanh %87 : vector<8x32xf32>
    %cst_37 = arith.constant 1.000000e+00 : f32
    %89 = vector.broadcast %cst_37 : f32 to vector<8x32xf32>
    %90 = arith.subf %89, %83 : vector<8x32xf32>
    %91 = arith.mulf %90, %88 : vector<8x32xf32>
    %92 = arith.mulf %83, %65 : vector<8x32xf32>
    %93 = arith.addf %91, %92 : vector<8x32xf32>
    %c2_38 = arith.constant 2 : index
    %c0_39 = arith.constant 0 : index
    %c0_40 = arith.constant 0 : index
    %94 = vector.load %arg16[%c2_38, %c0_39, %c0_40] : memref<8x8x32xf32, #tpu.memory_space<vmem>>, vector<1x8x32xf32>
    %95 = vector.shape_cast %94 : vector<1x8x32xf32> to vector<8x32xf32>
    %96 = vector.shape_cast %93 : vector<8x32xf32> to vector<1x8x32xf32>
    tpu.vector_store %arg16[%c2_38, %c0_39, %c0_40], %96 {strides = array<i32>} : memref<8x8x32xf32, #tpu.memory_space<vmem>>, vector<1x8x32xf32>,
    %c3 = arith.constant 3 : index
    %c0_41 = arith.constant 0 : index
    %c0_42 = arith.constant 0 : index
    %97 = vector.load %arg17[%c3, %c0_41, %c0_42] : memref<8x8x96xf32, #tpu.memory_space<vmem>>, vector<1x8x96xf32>
    %98 = vector.shape_cast %97 : vector<1x8x96xf32> to vector<8x96xf32>
    %99 = arith.truncf %93 : vector<8x32xf32> to vector<8x32xbf16>
    %cst_43 = arith.constant dense<0.000000e+00> : vector<8x96xf32>
    %100 = tpu.matmul %99, %5, %cst_43 {dimension_numbers = #tpu.dot_dimension_numbers<[1], [0], [0], [1], [0, 0, 1, 1], [], []>} : vector<8x32xbf16>, vector<32x96xbf16>, vector<8x96xf32> -> vector<8x96xf32>
    %101 = arith.addf %100, %17 : vector<8x96xf32>
    %102 = vector.extract_strided_slice %98 {offsets = [0, 0], sizes = [8, 64], strides = [1, 1]} : vector<8x96xf32> to vector<8x64xf32>
    %103 = vector.extract_strided_slice %101 {offsets = [0, 0], sizes = [8, 64], strides = [1, 1]} : vector<8x96xf32> to vector<8x64xf32>
    %104 = arith.addf %102, %103 : vector<8x64xf32>
    %105 = arith.negf %104 : vector<8x64xf32>
    %106 = math.exp %105 : vector<8x64xf32>
    %cst_44 = arith.constant 1.000000e+00 : f32
    %107 = vector.broadcast %cst_44 : f32 to vector<8x64xf32>
    %108 = arith.addf %107, %106 : vector<8x64xf32>
    %109 = arith.divf %107, %108 : vector<8x64xf32>
    %110 = vector.extract_strided_slice %109 {offsets = [0, 0], sizes = [8, 32], strides = [1, 1]} : vector<8x64xf32> to vector<8x32xf32>
    %111 = vector.extract_strided_slice %109 {offsets = [0, 32], sizes = [8, 32], strides = [1, 1]} : vector<8x64xf32> to vector<8x32xf32>
    %112 = vector.extract_strided_slice %98 {offsets = [0, 64], sizes = [8, 32], strides = [1, 1]} : vector<8x96xf32> to vector<8x32xf32>
    %113 = vector.extract_strided_slice %101 {offsets = [0, 64], sizes = [8, 32], strides = [1, 1]} : vector<8x96xf32> to vector<8x32xf32>
    %114 = arith.mulf %110, %113 : vector<8x32xf32>
    %115 = arith.addf %112, %114 : vector<8x32xf32>
    %116 = math.tanh %115 : vector<8x32xf32>
    %cst_45 = arith.constant 1.000000e+00 : f32
    %117 = vector.broadcast %cst_45 : f32 to vector<8x32xf32>
    %118 = arith.subf %117, %111 : vector<8x32xf32>
    %119 = arith.mulf %118, %116 : vector<8x32xf32>
    %120 = arith.mulf %111, %93 : vector<8x32xf32>
    %121 = arith.addf %119, %120 : vector<8x32xf32>
    %c3_46 = arith.constant 3 : index
    %c0_47 = arith.constant 0 : index
    %c0_48 = arith.constant 0 : index
    %122 = vector.load %arg16[%c3_46, %c0_47, %c0_48] : memref<8x8x32xf32, #tpu.memory_space<vmem>>, vector<1x8x32xf32>
    %123 = vector.shape_cast %122 : vector<1x8x32xf32> to vector<8x32xf32>
    %124 = vector.shape_cast %121 : vector<8x32xf32> to vector<1x8x32xf32>
    tpu.vector_store %arg16[%c3_46, %c0_47, %c0_48], %124 {strides = array<i32>} : memref<8x8x32xf32, #tpu.memory_space<vmem>>, vector<1x8x32xf32>,
    %c4 = arith.constant 4 : index
    %c0_49 = arith.constant 0 : index
    %c0_50 = arith.constant 0 : index
    %125 = vector.load %arg17[%c4, %c0_49, %c0_50] : memref<8x8x96xf32, #tpu.memory_space<vmem>>, vector<1x8x96xf32>
    %126 = vector.shape_cast %125 : vector<1x8x96xf32> to vector<8x96xf32>
    %127 = arith.truncf %121 : vector<8x32xf32> to vector<8x32xbf16>
    %cst_51 = arith.constant dense<0.000000e+00> : vector<8x96xf32>
    %128 = tpu.matmul %127, %5, %cst_51 {dimension_numbers = #tpu.dot_dimension_numbers<[1], [0], [0], [1], [0, 0, 1, 1], [], []>} : vector<8x32xbf16>, vector<32x96xbf16>, vector<8x96xf32> -> vector<8x96xf32>
    %129 = arith.addf %128, %17 : vector<8x96xf32>
    %130 = vector.extract_strided_slice %126 {offsets = [0, 0], sizes = [8, 64], strides = [1, 1]} : vector<8x96xf32> to vector<8x64xf32>
    %131 = vector.extract_strided_slice %129 {offsets = [0, 0], sizes = [8, 64], strides = [1, 1]} : vector<8x96xf32> to vector<8x64xf32>
    %132 = arith.addf %130, %131 : vector<8x64xf32>
    %133 = arith.negf %132 : vector<8x64xf32>
    %134 = math.exp %133 : vector<8x64xf32>
    %cst_52 = arith.constant 1.000000e+00 : f32
    %135 = vector.broadcast %cst_52 : f32 to vector<8x64xf32>
    %136 = arith.addf %135, %134 : vector<8x64xf32>
    %137 = arith.divf %135, %136 : vector<8x64xf32>
    %138 = vector.extract_strided_slice %137 {offsets = [0, 0], sizes = [8, 32], strides = [1, 1]} : vector<8x64xf32> to vector<8x32xf32>
    %139 = vector.extract_strided_slice %137 {offsets = [0, 32], sizes = [8, 32], strides = [1, 1]} : vector<8x64xf32> to vector<8x32xf32>
    %140 = vector.extract_strided_slice %126 {offsets = [0, 64], sizes = [8, 32], strides = [1, 1]} : vector<8x96xf32> to vector<8x32xf32>
    %141 = vector.extract_strided_slice %129 {offsets = [0, 64], sizes = [8, 32], strides = [1, 1]} : vector<8x96xf32> to vector<8x32xf32>
    %142 = arith.mulf %138, %141 : vector<8x32xf32>
    %143 = arith.addf %140, %142 : vector<8x32xf32>
    %144 = math.tanh %143 : vector<8x32xf32>
    %cst_53 = arith.constant 1.000000e+00 : f32
    %145 = vector.broadcast %cst_53 : f32 to vector<8x32xf32>
    %146 = arith.subf %145, %139 : vector<8x32xf32>
    %147 = arith.mulf %146, %144 : vector<8x32xf32>
    %148 = arith.mulf %139, %121 : vector<8x32xf32>
    %149 = arith.addf %147, %148 : vector<8x32xf32>
    %c4_54 = arith.constant 4 : index
    %c0_55 = arith.constant 0 : index
    %c0_56 = arith.constant 0 : index
    %150 = vector.load %arg16[%c4_54, %c0_55, %c0_56] : memref<8x8x32xf32, #tpu.memory_space<vmem>>, vector<1x8x32xf32>
    %151 = vector.shape_cast %150 : vector<1x8x32xf32> to vector<8x32xf32>
    %152 = vector.shape_cast %149 : vector<8x32xf32> to vector<1x8x32xf32>
    tpu.vector_store %arg16[%c4_54, %c0_55, %c0_56], %152 {strides = array<i32>} : memref<8x8x32xf32, #tpu.memory_space<vmem>>, vector<1x8x32xf32>,
    %c5 = arith.constant 5 : index
    %c0_57 = arith.constant 0 : index
    %c0_58 = arith.constant 0 : index
    %153 = vector.load %arg17[%c5, %c0_57, %c0_58] : memref<8x8x96xf32, #tpu.memory_space<vmem>>, vector<1x8x96xf32>
    %154 = vector.shape_cast %153 : vector<1x8x96xf32> to vector<8x96xf32>
    %155 = arith.truncf %149 : vector<8x32xf32> to vector<8x32xbf16>
    %cst_59 = arith.constant dense<0.000000e+00> : vector<8x96xf32>
    %156 = tpu.matmul %155, %5, %cst_59 {dimension_numbers = #tpu.dot_dimension_numbers<[1], [0], [0], [1], [0, 0, 1, 1], [], []>} : vector<8x32xbf16>, vector<32x96xbf16>, vector<8x96xf32> -> vector<8x96xf32>
    %157 = arith.addf %156, %17 : vector<8x96xf32>
    %158 = vector.extract_strided_slice %154 {offsets = [0, 0], sizes = [8, 64], strides = [1, 1]} : vector<8x96xf32> to vector<8x64xf32>
    %159 = vector.extract_strided_slice %157 {offsets = [0, 0], sizes = [8, 64], strides = [1, 1]} : vector<8x96xf32> to vector<8x64xf32>
    %160 = arith.addf %158, %159 : vector<8x64xf32>
    %161 = arith.negf %160 : vector<8x64xf32>
    %162 = math.exp %161 : vector<8x64xf32>
    %cst_60 = arith.constant 1.000000e+00 : f32
    %163 = vector.broadcast %cst_60 : f32 to vector<8x64xf32>
    %164 = arith.addf %163, %162 : vector<8x64xf32>
    %165 = arith.divf %163, %164 : vector<8x64xf32>
    %166 = vector.extract_strided_slice %165 {offsets = [0, 0], sizes = [8, 32], strides = [1, 1]} : vector<8x64xf32> to vector<8x32xf32>
    %167 = vector.extract_strided_slice %165 {offsets = [0, 32], sizes = [8, 32], strides = [1, 1]} : vector<8x64xf32> to vector<8x32xf32>
    %168 = vector.extract_strided_slice %154 {offsets = [0, 64], sizes = [8, 32], strides = [1, 1]} : vector<8x96xf32> to vector<8x32xf32>
    %169 = vector.extract_strided_slice %157 {offsets = [0, 64], sizes = [8, 32], strides = [1, 1]} : vector<8x96xf32> to vector<8x32xf32>
    %170 = arith.mulf %166, %169 : vector<8x32xf32>
    %171 = arith.addf %168, %170 : vector<8x32xf32>
    %172 = math.tanh %171 : vector<8x32xf32>
    %cst_61 = arith.constant 1.000000e+00 : f32
    %173 = vector.broadcast %cst_61 : f32 to vector<8x32xf32>
    %174 = arith.subf %173, %167 : vector<8x32xf32>
    %175 = arith.mulf %174, %172 : vector<8x32xf32>
    %176 = arith.mulf %167, %149 : vector<8x32xf32>
    %177 = arith.addf %175, %176 : vector<8x32xf32>
    %c5_62 = arith.constant 5 : index
    %c0_63 = arith.constant 0 : index
    %c0_64 = arith.constant 0 : index
    %178 = vector.load %arg16[%c5_62, %c0_63, %c0_64] : memref<8x8x32xf32, #tpu.memory_space<vmem>>, vector<1x8x32xf32>
    %179 = vector.shape_cast %178 : vector<1x8x32xf32> to vector<8x32xf32>
    %180 = vector.shape_cast %177 : vector<8x32xf32> to vector<1x8x32xf32>
    tpu.vector_store %arg16[%c5_62, %c0_63, %c0_64], %180 {strides = array<i32>} : memref<8x8x32xf32, #tpu.memory_space<vmem>>, vector<1x8x32xf32>,
    %c6 = arith.constant 6 : index
    %c0_65 = arith.constant 0 : index
    %c0_66 = arith.constant 0 : index
    %181 = vector.load %arg17[%c6, %c0_65, %c0_66] : memref<8x8x96xf32, #tpu.memory_space<vmem>>, vector<1x8x96xf32>
    %182 = vector.shape_cast %181 : vector<1x8x96xf32> to vector<8x96xf32>
    %183 = arith.truncf %177 : vector<8x32xf32> to vector<8x32xbf16>
    %cst_67 = arith.constant dense<0.000000e+00> : vector<8x96xf32>
    %184 = tpu.matmul %183, %5, %cst_67 {dimension_numbers = #tpu.dot_dimension_numbers<[1], [0], [0], [1], [0, 0, 1, 1], [], []>} : vector<8x32xbf16>, vector<32x96xbf16>, vector<8x96xf32> -> vector<8x96xf32>
    %185 = arith.addf %184, %17 : vector<8x96xf32>
    %186 = vector.extract_strided_slice %182 {offsets = [0, 0], sizes = [8, 64], strides = [1, 1]} : vector<8x96xf32> to vector<8x64xf32>
    %187 = vector.extract_strided_slice %185 {offsets = [0, 0], sizes = [8, 64], strides = [1, 1]} : vector<8x96xf32> to vector<8x64xf32>
    %188 = arith.addf %186, %187 : vector<8x64xf32>
    %189 = arith.negf %188 : vector<8x64xf32>
    %190 = math.exp %189 : vector<8x64xf32>
    %cst_68 = arith.constant 1.000000e+00 : f32
    %191 = vector.broadcast %cst_68 : f32 to vector<8x64xf32>
    %192 = arith.addf %191, %190 : vector<8x64xf32>
    %193 = arith.divf %191, %192 : vector<8x64xf32>
    %194 = vector.extract_strided_slice %193 {offsets = [0, 0], sizes = [8, 32], strides = [1, 1]} : vector<8x64xf32> to vector<8x32xf32>
    %195 = vector.extract_strided_slice %193 {offsets = [0, 32], sizes = [8, 32], strides = [1, 1]} : vector<8x64xf32> to vector<8x32xf32>
    %196 = vector.extract_strided_slice %182 {offsets = [0, 64], sizes = [8, 32], strides = [1, 1]} : vector<8x96xf32> to vector<8x32xf32>
    %197 = vector.extract_strided_slice %185 {offsets = [0, 64], sizes = [8, 32], strides = [1, 1]} : vector<8x96xf32> to vector<8x32xf32>
    %198 = arith.mulf %194, %197 : vector<8x32xf32>
    %199 = arith.addf %196, %198 : vector<8x32xf32>
    %200 = math.tanh %199 : vector<8x32xf32>
    %cst_69 = arith.constant 1.000000e+00 : f32
    %201 = vector.broadcast %cst_69 : f32 to vector<8x32xf32>
    %202 = arith.subf %201, %195 : vector<8x32xf32>
    %203 = arith.mulf %202, %200 : vector<8x32xf32>
    %204 = arith.mulf %195, %177 : vector<8x32xf32>
    %205 = arith.addf %203, %204 : vector<8x32xf32>
    %c6_70 = arith.constant 6 : index
    %c0_71 = arith.constant 0 : index
    %c0_72 = arith.constant 0 : index
    %206 = vector.load %arg16[%c6_70, %c0_71, %c0_72] : memref<8x8x32xf32, #tpu.memory_space<vmem>>, vector<1x8x32xf32>
    %207 = vector.shape_cast %206 : vector<1x8x32xf32> to vector<8x32xf32>
    %208 = vector.shape_cast %205 : vector<8x32xf32> to vector<1x8x32xf32>
    tpu.vector_store %arg16[%c6_70, %c0_71, %c0_72], %208 {strides = array<i32>} : memref<8x8x32xf32, #tpu.memory_space<vmem>>, vector<1x8x32xf32>,
    %c7 = arith.constant 7 : index
    %c0_73 = arith.constant 0 : index
    %c0_74 = arith.constant 0 : index
    %209 = vector.load %arg17[%c7, %c0_73, %c0_74] : memref<8x8x96xf32, #tpu.memory_space<vmem>>, vector<1x8x96xf32>
    %210 = vector.shape_cast %209 : vector<1x8x96xf32> to vector<8x96xf32>
    %211 = arith.truncf %205 : vector<8x32xf32> to vector<8x32xbf16>
    %cst_75 = arith.constant dense<0.000000e+00> : vector<8x96xf32>
    %212 = tpu.matmul %211, %5, %cst_75 {dimension_numbers = #tpu.dot_dimension_numbers<[1], [0], [0], [1], [0, 0, 1, 1], [], []>} : vector<8x32xbf16>, vector<32x96xbf16>, vector<8x96xf32> -> vector<8x96xf32>
    %213 = arith.addf %212, %17 : vector<8x96xf32>
    %214 = vector.extract_strided_slice %210 {offsets = [0, 0], sizes = [8, 64], strides = [1, 1]} : vector<8x96xf32> to vector<8x64xf32>
    %215 = vector.extract_strided_slice %213 {offsets = [0, 0], sizes = [8, 64], strides = [1, 1]} : vector<8x96xf32> to vector<8x64xf32>
    %216 = arith.addf %214, %215 : vector<8x64xf32>
    %217 = arith.negf %216 : vector<8x64xf32>
    %218 = math.exp %217 : vector<8x64xf32>
    %cst_76 = arith.constant 1.000000e+00 : f32
    %219 = vector.broadcast %cst_76 : f32 to vector<8x64xf32>
    %220 = arith.addf %219, %218 : vector<8x64xf32>
    %221 = arith.divf %219, %220 : vector<8x64xf32>
    %222 = vector.extract_strided_slice %221 {offsets = [0, 0], sizes = [8, 32], strides = [1, 1]} : vector<8x64xf32> to vector<8x32xf32>
    %223 = vector.extract_strided_slice %221 {offsets = [0, 32], sizes = [8, 32], strides = [1, 1]} : vector<8x64xf32> to vector<8x32xf32>
    %224 = vector.extract_strided_slice %210 {offsets = [0, 64], sizes = [8, 32], strides = [1, 1]} : vector<8x96xf32> to vector<8x32xf32>
    %225 = vector.extract_strided_slice %213 {offsets = [0, 64], sizes = [8, 32], strides = [1, 1]} : vector<8x96xf32> to vector<8x32xf32>
    %226 = arith.mulf %222, %225 : vector<8x32xf32>
    %227 = arith.addf %224, %226 : vector<8x32xf32>
    %228 = math.tanh %227 : vector<8x32xf32>
    %cst_77 = arith.constant 1.000000e+00 : f32
    %229 = vector.broadcast %cst_77 : f32 to vector<8x32xf32>
    %230 = arith.subf %229, %223 : vector<8x32xf32>
    %231 = arith.mulf %230, %228 : vector<8x32xf32>
    %232 = arith.mulf %223, %205 : vector<8x32xf32>
    %233 = arith.addf %231, %232 : vector<8x32xf32>
    %c7_78 = arith.constant 7 : index
    %c0_79 = arith.constant 0 : index
    %c0_80 = arith.constant 0 : index
    %234 = vector.load %arg16[%c7_78, %c0_79, %c0_80] : memref<8x8x32xf32, #tpu.memory_space<vmem>>, vector<1x8x32xf32>
    %235 = vector.shape_cast %234 : vector<1x8x32xf32> to vector<8x32xf32>
    %236 = vector.shape_cast %233 : vector<8x32xf32> to vector<1x8x32xf32>
    tpu.vector_store %arg16[%c7_78, %c0_79, %c0_80], %236 {strides = array<i32>} : memref<8x8x32xf32, #tpu.memory_space<vmem>>, vector<1x8x32xf32>,
    %c0_81 = arith.constant 0 : index
    %c0_82 = arith.constant 0 : index
    %c0_83 = arith.constant 0 : index
    %237 = vector.load %arg16[%c0_81, %c0_82, %c0_83] : memref<8x8x32xf32, #tpu.memory_space<vmem>>, vector<8x8x32xf32>
    %238 = vector.shape_cast %237 : vector<8x8x32xf32> to vector<64x32xf32>
    %c1_84 = arith.constant 1 : index
    %c0_85 = arith.constant 0 : index
    %c0_86 = arith.constant 0 : index
    %239 = vector.load %arg3[%c1_84, %c0_85, %c0_86] : memref<4x32x96xbf16, #tpu.memory_space<vmem>>, vector<1x32x96xbf16>
    %240 = vector.shape_cast %239 : vector<1x32x96xbf16> to vector<32x96xbf16>
    %c1_87 = arith.constant 1 : index
    %c0_88 = arith.constant 0 : index
    %c0_89 = arith.constant 0 : index
    %241 = vector.load %arg4[%c1_87, %c0_88, %c0_89] : memref<4x32x96xbf16, #tpu.memory_space<vmem>>, vector<1x32x96xbf16>
    %242 = vector.shape_cast %241 : vector<1x32x96xbf16> to vector<32x96xbf16>
    %c1_90 = arith.constant 1 : index
    %c0_91 = arith.constant 0 : index
    %c0_92 = arith.constant 0 : index
    %243 = vector.load %arg5[%c1_90, %c0_91, %c0_92] : memref<4x1x96xf32, #tpu.memory_space<vmem>>, vector<1x1x96xf32>
    %244 = vector.shape_cast %243 : vector<1x1x96xf32> to vector<1x96xf32>
    %c1_93 = arith.constant 1 : index
    %c0_94 = arith.constant 0 : index
    %c0_95 = arith.constant 0 : index
    %245 = vector.load %arg6[%c1_93, %c0_94, %c0_95] : memref<4x1x96xf32, #tpu.memory_space<vmem>>, vector<1x1x96xf32>
    %246 = vector.shape_cast %245 : vector<1x1x96xf32> to vector<1x96xf32>
    %247 = arith.truncf %238 : vector<64x32xf32> to vector<64x32xbf16>
    %cst_96 = arith.constant dense<0.000000e+00> : vector<64x96xf32>
    %248 = tpu.matmul %247, %240, %cst_96 {dimension_numbers = #tpu.dot_dimension_numbers<[1], [0], [0], [1], [0, 0, 1, 1], [], []>} : vector<64x32xbf16>, vector<32x96xbf16>, vector<64x96xf32> -> vector<64x96xf32>
    %249 = vector.broadcast %244 : vector<1x96xf32> to vector<64x96xf32>
    %250 = arith.addf %248, %249 : vector<64x96xf32>
    %251 = vector.shape_cast %250 : vector<64x96xf32> to vector<8x8x96xf32>
    %c0_97 = arith.constant 0 : index
    %c0_98 = arith.constant 0 : index
    %c0_99 = arith.constant 0 : index
    %252 = vector.load %arg17[%c0_97, %c0_98, %c0_99] : memref<8x8x96xf32, #tpu.memory_space<vmem>>, vector<8x8x96xf32>
    tpu.vector_store %arg17[%c0_97, %c0_98, %c0_99], %251 {strides = array<i32>} : memref<8x8x96xf32, #tpu.memory_space<vmem>>, vector<8x8x96xf32>,
    %253 = vector.shape_cast %246 : vector<1x96xf32> to vector<1x96xf32>
    %254 = vector.broadcast %253 : vector<1x96xf32> to vector<8x96xf32>
    %c0_100 = arith.constant 0 : index
    %c0_101 = arith.constant 0 : index
    %c0_102 = arith.constant 0 : index
    %255 = vector.load %arg17[%c0_100, %c0_101, %c0_102] : memref<8x8x96xf32, #tpu.memory_space<vmem>>, vector<1x8x96xf32>
    %256 = vector.shape_cast %255 : vector<1x8x96xf32> to vector<8x96xf32>
    %257 = vector.extract_strided_slice %256 {offsets = [0, 0], sizes = [8, 64], strides = [1, 1]} : vector<8x96xf32> to vector<8x64xf32>
    %258 = vector.extract_strided_slice %254 {offsets = [0, 0], sizes = [8, 64], strides = [1, 1]} : vector<8x96xf32> to vector<8x64xf32>
    %259 = arith.addf %257, %258 : vector<8x64xf32>
    %260 = arith.negf %259 : vector<8x64xf32>
    %261 = math.exp %260 : vector<8x64xf32>
    %cst_103 = arith.constant 1.000000e+00 : f32
    %262 = vector.broadcast %cst_103 : f32 to vector<8x64xf32>
    %263 = arith.addf %262, %261 : vector<8x64xf32>
    %264 = arith.divf %262, %263 : vector<8x64xf32>
    %265 = vector.extract_strided_slice %264 {offsets = [0, 0], sizes = [8, 32], strides = [1, 1]} : vector<8x64xf32> to vector<8x32xf32>
    %266 = vector.extract_strided_slice %264 {offsets = [0, 32], sizes = [8, 32], strides = [1, 1]} : vector<8x64xf32> to vector<8x32xf32>
    %267 = vector.extract_strided_slice %256 {offsets = [0, 64], sizes = [8, 32], strides = [1, 1]} : vector<8x96xf32> to vector<8x32xf32>
    %268 = vector.extract_strided_slice %254 {offsets = [0, 64], sizes = [8, 32], strides = [1, 1]} : vector<8x96xf32> to vector<8x32xf32>
    %269 = arith.mulf %265, %268 : vector<8x32xf32>
    %270 = arith.addf %267, %269 : vector<8x32xf32>
    %271 = math.tanh %270 : vector<8x32xf32>
    %cst_104 = arith.constant 1.000000e+00 : f32
    %272 = vector.broadcast %cst_104 : f32 to vector<8x32xf32>
    %273 = arith.subf %272, %266 : vector<8x32xf32>
    %274 = arith.mulf %273, %271 : vector<8x32xf32>
    %c0_105 = arith.constant 0 : index
    %c0_106 = arith.constant 0 : index
    %c0_107 = arith.constant 0 : index
    %275 = vector.load %arg16[%c0_105, %c0_106, %c0_107] : memref<8x8x32xf32, #tpu.memory_space<vmem>>, vector<1x8x32xf32>
    %276 = vector.shape_cast %275 : vector<1x8x32xf32> to vector<8x32xf32>
    %277 = vector.shape_cast %274 : vector<8x32xf32> to vector<1x8x32xf32>
    tpu.vector_store %arg16[%c0_105, %c0_106, %c0_107], %277 {strides = array<i32>} : memref<8x8x32xf32, #tpu.memory_space<vmem>>, vector<1x8x32xf32>,
    %c1_108 = arith.constant 1 : index
    %c0_109 = arith.constant 0 : index
    %c0_110 = arith.constant 0 : index
    %278 = vector.load %arg17[%c1_108, %c0_109, %c0_110] : memref<8x8x96xf32, #tpu.memory_space<vmem>>, vector<1x8x96xf32>
    %279 = vector.shape_cast %278 : vector<1x8x96xf32> to vector<8x96xf32>
    %280 = arith.truncf %274 : vector<8x32xf32> to vector<8x32xbf16>
    %cst_111 = arith.constant dense<0.000000e+00> : vector<8x96xf32>
    %281 = tpu.matmul %280, %242, %cst_111 {dimension_numbers = #tpu.dot_dimension_numbers<[1], [0], [0], [1], [0, 0, 1, 1], [], []>} : vector<8x32xbf16>, vector<32x96xbf16>, vector<8x96xf32> -> vector<8x96xf32>
    %282 = arith.addf %281, %254 : vector<8x96xf32>
    %283 = vector.extract_strided_slice %279 {offsets = [0, 0], sizes = [8, 64], strides = [1, 1]} : vector<8x96xf32> to vector<8x64xf32>
    %284 = vector.extract_strided_slice %282 {offsets = [0, 0], sizes = [8, 64], strides = [1, 1]} : vector<8x96xf32> to vector<8x64xf32>
    %285 = arith.addf %283, %284 : vector<8x64xf32>
    %286 = arith.negf %285 : vector<8x64xf32>
    %287 = math.exp %286 : vector<8x64xf32>
    %cst_112 = arith.constant 1.000000e+00 : f32
    %288 = vector.broadcast %cst_112 : f32 to vector<8x64xf32>
    %289 = arith.addf %288, %287 : vector<8x64xf32>
    %290 = arith.divf %288, %289 : vector<8x64xf32>
    %291 = vector.extract_strided_slice %290 {offsets = [0, 0], sizes = [8, 32], strides = [1, 1]} : vector<8x64xf32> to vector<8x32xf32>
    %292 = vector.extract_strided_slice %290 {offsets = [0, 32], sizes = [8, 32], strides = [1, 1]} : vector<8x64xf32> to vector<8x32xf32>
    %293 = vector.extract_strided_slice %279 {offsets = [0, 64], sizes = [8, 32], strides = [1, 1]} : vector<8x96xf32> to vector<8x32xf32>
    %294 = vector.extract_strided_slice %282 {offsets = [0, 64], sizes = [8, 32], strides = [1, 1]} : vector<8x96xf32> to vector<8x32xf32>
    %295 = arith.mulf %291, %294 : vector<8x32xf32>
    %296 = arith.addf %293, %295 : vector<8x32xf32>
    %297 = math.tanh %296 : vector<8x32xf32>
    %cst_113 = arith.constant 1.000000e+00 : f32
    %298 = vector.broadcast %cst_113 : f32 to vector<8x32xf32>
    %299 = arith.subf %298, %292 : vector<8x32xf32>
    %300 = arith.mulf %299, %297 : vector<8x32xf32>
    %301 = arith.mulf %292, %274 : vector<8x32xf32>
    %302 = arith.addf %300, %301 : vector<8x32xf32>
    %c1_114 = arith.constant 1 : index
    %c0_115 = arith.constant 0 : index
    %c0_116 = arith.constant 0 : index
    %303 = vector.load %arg16[%c1_114, %c0_115, %c0_116] : memref<8x8x32xf32, #tpu.memory_space<vmem>>, vector<1x8x32xf32>
    %304 = vector.shape_cast %303 : vector<1x8x32xf32> to vector<8x32xf32>
    %305 = vector.shape_cast %302 : vector<8x32xf32> to vector<1x8x32xf32>
    tpu.vector_store %arg16[%c1_114, %c0_115, %c0_116], %305 {strides = array<i32>} : memref<8x8x32xf32, #tpu.memory_space<vmem>>, vector<1x8x32xf32>,
    %c2_117 = arith.constant 2 : index
    %c0_118 = arith.constant 0 : index
    %c0_119 = arith.constant 0 : index
    %306 = vector.load %arg17[%c2_117, %c0_118, %c0_119] : memref<8x8x96xf32, #tpu.memory_space<vmem>>, vector<1x8x96xf32>
    %307 = vector.shape_cast %306 : vector<1x8x96xf32> to vector<8x96xf32>
    %308 = arith.truncf %302 : vector<8x32xf32> to vector<8x32xbf16>
    %cst_120 = arith.constant dense<0.000000e+00> : vector<8x96xf32>
    %309 = tpu.matmul %308, %242, %cst_120 {dimension_numbers = #tpu.dot_dimension_numbers<[1], [0], [0], [1], [0, 0, 1, 1], [], []>} : vector<8x32xbf16>, vector<32x96xbf16>, vector<8x96xf32> -> vector<8x96xf32>
    %310 = arith.addf %309, %254 : vector<8x96xf32>
    %311 = vector.extract_strided_slice %307 {offsets = [0, 0], sizes = [8, 64], strides = [1, 1]} : vector<8x96xf32> to vector<8x64xf32>
    %312 = vector.extract_strided_slice %310 {offsets = [0, 0], sizes = [8, 64], strides = [1, 1]} : vector<8x96xf32> to vector<8x64xf32>
    %313 = arith.addf %311, %312 : vector<8x64xf32>
    %314 = arith.negf %313 : vector<8x64xf32>
    %315 = math.exp %314 : vector<8x64xf32>
    %cst_121 = arith.constant 1.000000e+00 : f32
    %316 = vector.broadcast %cst_121 : f32 to vector<8x64xf32>
    %317 = arith.addf %316, %315 : vector<8x64xf32>
    %318 = arith.divf %316, %317 : vector<8x64xf32>
    %319 = vector.extract_strided_slice %318 {offsets = [0, 0], sizes = [8, 32], strides = [1, 1]} : vector<8x64xf32> to vector<8x32xf32>
    %320 = vector.extract_strided_slice %318 {offsets = [0, 32], sizes = [8, 32], strides = [1, 1]} : vector<8x64xf32> to vector<8x32xf32>
    %321 = vector.extract_strided_slice %307 {offsets = [0, 64], sizes = [8, 32], strides = [1, 1]} : vector<8x96xf32> to vector<8x32xf32>
    %322 = vector.extract_strided_slice %310 {offsets = [0, 64], sizes = [8, 32], strides = [1, 1]} : vector<8x96xf32> to vector<8x32xf32>
    %323 = arith.mulf %319, %322 : vector<8x32xf32>
    %324 = arith.addf %321, %323 : vector<8x32xf32>
    %325 = math.tanh %324 : vector<8x32xf32>
    %cst_122 = arith.constant 1.000000e+00 : f32
    %326 = vector.broadcast %cst_122 : f32 to vector<8x32xf32>
    %327 = arith.subf %326, %320 : vector<8x32xf32>
    %328 = arith.mulf %327, %325 : vector<8x32xf32>
    %329 = arith.mulf %320, %302 : vector<8x32xf32>
    %330 = arith.addf %328, %329 : vector<8x32xf32>
    %c2_123 = arith.constant 2 : index
    %c0_124 = arith.constant 0 : index
    %c0_125 = arith.constant 0 : index
    %331 = vector.load %arg16[%c2_123, %c0_124, %c0_125] : memref<8x8x32xf32, #tpu.memory_space<vmem>>, vector<1x8x32xf32>
    %332 = vector.shape_cast %331 : vector<1x8x32xf32> to vector<8x32xf32>
    %333 = vector.shape_cast %330 : vector<8x32xf32> to vector<1x8x32xf32>
    tpu.vector_store %arg16[%c2_123, %c0_124, %c0_125], %333 {strides = array<i32>} : memref<8x8x32xf32, #tpu.memory_space<vmem>>, vector<1x8x32xf32>,
    %c3_126 = arith.constant 3 : index
    %c0_127 = arith.constant 0 : index
    %c0_128 = arith.constant 0 : index
    %334 = vector.load %arg17[%c3_126, %c0_127, %c0_128] : memref<8x8x96xf32, #tpu.memory_space<vmem>>, vector<1x8x96xf32>
    %335 = vector.shape_cast %334 : vector<1x8x96xf32> to vector<8x96xf32>
    %336 = arith.truncf %330 : vector<8x32xf32> to vector<8x32xbf16>
    %cst_129 = arith.constant dense<0.000000e+00> : vector<8x96xf32>
    %337 = tpu.matmul %336, %242, %cst_129 {dimension_numbers = #tpu.dot_dimension_numbers<[1], [0], [0], [1], [0, 0, 1, 1], [], []>} : vector<8x32xbf16>, vector<32x96xbf16>, vector<8x96xf32> -> vector<8x96xf32>
    %338 = arith.addf %337, %254 : vector<8x96xf32>
    %339 = vector.extract_strided_slice %335 {offsets = [0, 0], sizes = [8, 64], strides = [1, 1]} : vector<8x96xf32> to vector<8x64xf32>
    %340 = vector.extract_strided_slice %338 {offsets = [0, 0], sizes = [8, 64], strides = [1, 1]} : vector<8x96xf32> to vector<8x64xf32>
    %341 = arith.addf %339, %340 : vector<8x64xf32>
    %342 = arith.negf %341 : vector<8x64xf32>
    %343 = math.exp %342 : vector<8x64xf32>
    %cst_130 = arith.constant 1.000000e+00 : f32
    %344 = vector.broadcast %cst_130 : f32 to vector<8x64xf32>
    %345 = arith.addf %344, %343 : vector<8x64xf32>
    %346 = arith.divf %344, %345 : vector<8x64xf32>
    %347 = vector.extract_strided_slice %346 {offsets = [0, 0], sizes = [8, 32], strides = [1, 1]} : vector<8x64xf32> to vector<8x32xf32>
    %348 = vector.extract_strided_slice %346 {offsets = [0, 32], sizes = [8, 32], strides = [1, 1]} : vector<8x64xf32> to vector<8x32xf32>
    %349 = vector.extract_strided_slice %335 {offsets = [0, 64], sizes = [8, 32], strides = [1, 1]} : vector<8x96xf32> to vector<8x32xf32>
    %350 = vector.extract_strided_slice %338 {offsets = [0, 64], sizes = [8, 32], strides = [1, 1]} : vector<8x96xf32> to vector<8x32xf32>
    %351 = arith.mulf %347, %350 : vector<8x32xf32>
    %352 = arith.addf %349, %351 : vector<8x32xf32>
    %353 = math.tanh %352 : vector<8x32xf32>
    %cst_131 = arith.constant 1.000000e+00 : f32
    %354 = vector.broadcast %cst_131 : f32 to vector<8x32xf32>
    %355 = arith.subf %354, %348 : vector<8x32xf32>
    %356 = arith.mulf %355, %353 : vector<8x32xf32>
    %357 = arith.mulf %348, %330 : vector<8x32xf32>
    %358 = arith.addf %356, %357 : vector<8x32xf32>
    %c3_132 = arith.constant 3 : index
    %c0_133 = arith.constant 0 : index
    %c0_134 = arith.constant 0 : index
    %359 = vector.load %arg16[%c3_132, %c0_133, %c0_134] : memref<8x8x32xf32, #tpu.memory_space<vmem>>, vector<1x8x32xf32>
    %360 = vector.shape_cast %359 : vector<1x8x32xf32> to vector<8x32xf32>
    %361 = vector.shape_cast %358 : vector<8x32xf32> to vector<1x8x32xf32>
    tpu.vector_store %arg16[%c3_132, %c0_133, %c0_134], %361 {strides = array<i32>} : memref<8x8x32xf32, #tpu.memory_space<vmem>>, vector<1x8x32xf32>,
    %c4_135 = arith.constant 4 : index
    %c0_136 = arith.constant 0 : index
    %c0_137 = arith.constant 0 : index
    %362 = vector.load %arg17[%c4_135, %c0_136, %c0_137] : memref<8x8x96xf32, #tpu.memory_space<vmem>>, vector<1x8x96xf32>
    %363 = vector.shape_cast %362 : vector<1x8x96xf32> to vector<8x96xf32>
    %364 = arith.truncf %358 : vector<8x32xf32> to vector<8x32xbf16>
    %cst_138 = arith.constant dense<0.000000e+00> : vector<8x96xf32>
    %365 = tpu.matmul %364, %242, %cst_138 {dimension_numbers = #tpu.dot_dimension_numbers<[1], [0], [0], [1], [0, 0, 1, 1], [], []>} : vector<8x32xbf16>, vector<32x96xbf16>, vector<8x96xf32> -> vector<8x96xf32>
    %366 = arith.addf %365, %254 : vector<8x96xf32>
    %367 = vector.extract_strided_slice %363 {offsets = [0, 0], sizes = [8, 64], strides = [1, 1]} : vector<8x96xf32> to vector<8x64xf32>
    %368 = vector.extract_strided_slice %366 {offsets = [0, 0], sizes = [8, 64], strides = [1, 1]} : vector<8x96xf32> to vector<8x64xf32>
    %369 = arith.addf %367, %368 : vector<8x64xf32>
    %370 = arith.negf %369 : vector<8x64xf32>
    %371 = math.exp %370 : vector<8x64xf32>
    %cst_139 = arith.constant 1.000000e+00 : f32
    %372 = vector.broadcast %cst_139 : f32 to vector<8x64xf32>
    %373 = arith.addf %372, %371 : vector<8x64xf32>
    %374 = arith.divf %372, %373 : vector<8x64xf32>
    %375 = vector.extract_strided_slice %374 {offsets = [0, 0], sizes = [8, 32], strides = [1, 1]} : vector<8x64xf32> to vector<8x32xf32>
    %376 = vector.extract_strided_slice %374 {offsets = [0, 32], sizes = [8, 32], strides = [1, 1]} : vector<8x64xf32> to vector<8x32xf32>
    %377 = vector.extract_strided_slice %363 {offsets = [0, 64], sizes = [8, 32], strides = [1, 1]} : vector<8x96xf32> to vector<8x32xf32>
    %378 = vector.extract_strided_slice %366 {offsets = [0, 64], sizes = [8, 32], strides = [1, 1]} : vector<8x96xf32> to vector<8x32xf32>
    %379 = arith.mulf %375, %378 : vector<8x32xf32>
    %380 = arith.addf %377, %379 : vector<8x32xf32>
    %381 = math.tanh %380 : vector<8x32xf32>
    %cst_140 = arith.constant 1.000000e+00 : f32
    %382 = vector.broadcast %cst_140 : f32 to vector<8x32xf32>
    %383 = arith.subf %382, %376 : vector<8x32xf32>
    %384 = arith.mulf %383, %381 : vector<8x32xf32>
    %385 = arith.mulf %376, %358 : vector<8x32xf32>
    %386 = arith.addf %384, %385 : vector<8x32xf32>
    %c4_141 = arith.constant 4 : index
    %c0_142 = arith.constant 0 : index
    %c0_143 = arith.constant 0 : index
    %387 = vector.load %arg16[%c4_141, %c0_142, %c0_143] : memref<8x8x32xf32, #tpu.memory_space<vmem>>, vector<1x8x32xf32>
    %388 = vector.shape_cast %387 : vector<1x8x32xf32> to vector<8x32xf32>
    %389 = vector.shape_cast %386 : vector<8x32xf32> to vector<1x8x32xf32>
    tpu.vector_store %arg16[%c4_141, %c0_142, %c0_143], %389 {strides = array<i32>} : memref<8x8x32xf32, #tpu.memory_space<vmem>>, vector<1x8x32xf32>,
    %c5_144 = arith.constant 5 : index
    %c0_145 = arith.constant 0 : index
    %c0_146 = arith.constant 0 : index
    %390 = vector.load %arg17[%c5_144, %c0_145, %c0_146] : memref<8x8x96xf32, #tpu.memory_space<vmem>>, vector<1x8x96xf32>
    %391 = vector.shape_cast %390 : vector<1x8x96xf32> to vector<8x96xf32>
    %392 = arith.truncf %386 : vector<8x32xf32> to vector<8x32xbf16>
    %cst_147 = arith.constant dense<0.000000e+00> : vector<8x96xf32>
    %393 = tpu.matmul %392, %242, %cst_147 {dimension_numbers = #tpu.dot_dimension_numbers<[1], [0], [0], [1], [0, 0, 1, 1], [], []>} : vector<8x32xbf16>, vector<32x96xbf16>, vector<8x96xf32> -> vector<8x96xf32>
    %394 = arith.addf %393, %254 : vector<8x96xf32>
    %395 = vector.extract_strided_slice %391 {offsets = [0, 0], sizes = [8, 64], strides = [1, 1]} : vector<8x96xf32> to vector<8x64xf32>
    %396 = vector.extract_strided_slice %394 {offsets = [0, 0], sizes = [8, 64], strides = [1, 1]} : vector<8x96xf32> to vector<8x64xf32>
    %397 = arith.addf %395, %396 : vector<8x64xf32>
    %398 = arith.negf %397 : vector<8x64xf32>
    %399 = math.exp %398 : vector<8x64xf32>
    %cst_148 = arith.constant 1.000000e+00 : f32
    %400 = vector.broadcast %cst_148 : f32 to vector<8x64xf32>
    %401 = arith.addf %400, %399 : vector<8x64xf32>
    %402 = arith.divf %400, %401 : vector<8x64xf32>
    %403 = vector.extract_strided_slice %402 {offsets = [0, 0], sizes = [8, 32], strides = [1, 1]} : vector<8x64xf32> to vector<8x32xf32>
    %404 = vector.extract_strided_slice %402 {offsets = [0, 32], sizes = [8, 32], strides = [1, 1]} : vector<8x64xf32> to vector<8x32xf32>
    %405 = vector.extract_strided_slice %391 {offsets = [0, 64], sizes = [8, 32], strides = [1, 1]} : vector<8x96xf32> to vector<8x32xf32>
    %406 = vector.extract_strided_slice %394 {offsets = [0, 64], sizes = [8, 32], strides = [1, 1]} : vector<8x96xf32> to vector<8x32xf32>
    %407 = arith.mulf %403, %406 : vector<8x32xf32>
    %408 = arith.addf %405, %407 : vector<8x32xf32>
    %409 = math.tanh %408 : vector<8x32xf32>
    %cst_149 = arith.constant 1.000000e+00 : f32
    %410 = vector.broadcast %cst_149 : f32 to vector<8x32xf32>
    %411 = arith.subf %410, %404 : vector<8x32xf32>
    %412 = arith.mulf %411, %409 : vector<8x32xf32>
    %413 = arith.mulf %404, %386 : vector<8x32xf32>
    %414 = arith.addf %412, %413 : vector<8x32xf32>
    %c5_150 = arith.constant 5 : index
    %c0_151 = arith.constant 0 : index
    %c0_152 = arith.constant 0 : index
    %415 = vector.load %arg16[%c5_150, %c0_151, %c0_152] : memref<8x8x32xf32, #tpu.memory_space<vmem>>, vector<1x8x32xf32>
    %416 = vector.shape_cast %415 : vector<1x8x32xf32> to vector<8x32xf32>
    %417 = vector.shape_cast %414 : vector<8x32xf32> to vector<1x8x32xf32>
    tpu.vector_store %arg16[%c5_150, %c0_151, %c0_152], %417 {strides = array<i32>} : memref<8x8x32xf32, #tpu.memory_space<vmem>>, vector<1x8x32xf32>,
    %c6_153 = arith.constant 6 : index
    %c0_154 = arith.constant 0 : index
    %c0_155 = arith.constant 0 : index
    %418 = vector.load %arg17[%c6_153, %c0_154, %c0_155] : memref<8x8x96xf32, #tpu.memory_space<vmem>>, vector<1x8x96xf32>
    %419 = vector.shape_cast %418 : vector<1x8x96xf32> to vector<8x96xf32>
    %420 = arith.truncf %414 : vector<8x32xf32> to vector<8x32xbf16>
    %cst_156 = arith.constant dense<0.000000e+00> : vector<8x96xf32>
    %421 = tpu.matmul %420, %242, %cst_156 {dimension_numbers = #tpu.dot_dimension_numbers<[1], [0], [0], [1], [0, 0, 1, 1], [], []>} : vector<8x32xbf16>, vector<32x96xbf16>, vector<8x96xf32> -> vector<8x96xf32>
    %422 = arith.addf %421, %254 : vector<8x96xf32>
    %423 = vector.extract_strided_slice %419 {offsets = [0, 0], sizes = [8, 64], strides = [1, 1]} : vector<8x96xf32> to vector<8x64xf32>
    %424 = vector.extract_strided_slice %422 {offsets = [0, 0], sizes = [8, 64], strides = [1, 1]} : vector<8x96xf32> to vector<8x64xf32>
    %425 = arith.addf %423, %424 : vector<8x64xf32>
    %426 = arith.negf %425 : vector<8x64xf32>
    %427 = math.exp %426 : vector<8x64xf32>
    %cst_157 = arith.constant 1.000000e+00 : f32
    %428 = vector.broadcast %cst_157 : f32 to vector<8x64xf32>
    %429 = arith.addf %428, %427 : vector<8x64xf32>
    %430 = arith.divf %428, %429 : vector<8x64xf32>
    %431 = vector.extract_strided_slice %430 {offsets = [0, 0], sizes = [8, 32], strides = [1, 1]} : vector<8x64xf32> to vector<8x32xf32>
    %432 = vector.extract_strided_slice %430 {offsets = [0, 32], sizes = [8, 32], strides = [1, 1]} : vector<8x64xf32> to vector<8x32xf32>
    %433 = vector.extract_strided_slice %419 {offsets = [0, 64], sizes = [8, 32], strides = [1, 1]} : vector<8x96xf32> to vector<8x32xf32>
    %434 = vector.extract_strided_slice %422 {offsets = [0, 64], sizes = [8, 32], strides = [1, 1]} : vector<8x96xf32> to vector<8x32xf32>
    %435 = arith.mulf %431, %434 : vector<8x32xf32>
    %436 = arith.addf %433, %435 : vector<8x32xf32>
    %437 = math.tanh %436 : vector<8x32xf32>
    %cst_158 = arith.constant 1.000000e+00 : f32
    %438 = vector.broadcast %cst_158 : f32 to vector<8x32xf32>
    %439 = arith.subf %438, %432 : vector<8x32xf32>
    %440 = arith.mulf %439, %437 : vector<8x32xf32>
    %441 = arith.mulf %432, %414 : vector<8x32xf32>
    %442 = arith.addf %440, %441 : vector<8x32xf32>
    %c6_159 = arith.constant 6 : index
    %c0_160 = arith.constant 0 : index
    %c0_161 = arith.constant 0 : index
    %443 = vector.load %arg16[%c6_159, %c0_160, %c0_161] : memref<8x8x32xf32, #tpu.memory_space<vmem>>, vector<1x8x32xf32>
    %444 = vector.shape_cast %443 : vector<1x8x32xf32> to vector<8x32xf32>
    %445 = vector.shape_cast %442 : vector<8x32xf32> to vector<1x8x32xf32>
    tpu.vector_store %arg16[%c6_159, %c0_160, %c0_161], %445 {strides = array<i32>} : memref<8x8x32xf32, #tpu.memory_space<vmem>>, vector<1x8x32xf32>,
    %c7_162 = arith.constant 7 : index
    %c0_163 = arith.constant 0 : index
    %c0_164 = arith.constant 0 : index
    %446 = vector.load %arg17[%c7_162, %c0_163, %c0_164] : memref<8x8x96xf32, #tpu.memory_space<vmem>>, vector<1x8x96xf32>
    %447 = vector.shape_cast %446 : vector<1x8x96xf32> to vector<8x96xf32>
    %448 = arith.truncf %442 : vector<8x32xf32> to vector<8x32xbf16>
    %cst_165 = arith.constant dense<0.000000e+00> : vector<8x96xf32>
    %449 = tpu.matmul %448, %242, %cst_165 {dimension_numbers = #tpu.dot_dimension_numbers<[1], [0], [0], [1], [0, 0, 1, 1], [], []>} : vector<8x32xbf16>, vector<32x96xbf16>, vector<8x96xf32> -> vector<8x96xf32>
    %450 = arith.addf %449, %254 : vector<8x96xf32>
    %451 = vector.extract_strided_slice %447 {offsets = [0, 0], sizes = [8, 64], strides = [1, 1]} : vector<8x96xf32> to vector<8x64xf32>
    %452 = vector.extract_strided_slice %450 {offsets = [0, 0], sizes = [8, 64], strides = [1, 1]} : vector<8x96xf32> to vector<8x64xf32>
    %453 = arith.addf %451, %452 : vector<8x64xf32>
    %454 = arith.negf %453 : vector<8x64xf32>
    %455 = math.exp %454 : vector<8x64xf32>
    %cst_166 = arith.constant 1.000000e+00 : f32
    %456 = vector.broadcast %cst_166 : f32 to vector<8x64xf32>
    %457 = arith.addf %456, %455 : vector<8x64xf32>
    %458 = arith.divf %456, %457 : vector<8x64xf32>
    %459 = vector.extract_strided_slice %458 {offsets = [0, 0], sizes = [8, 32], strides = [1, 1]} : vector<8x64xf32> to vector<8x32xf32>
    %460 = vector.extract_strided_slice %458 {offsets = [0, 32], sizes = [8, 32], strides = [1, 1]} : vector<8x64xf32> to vector<8x32xf32>
    %461 = vector.extract_strided_slice %447 {offsets = [0, 64], sizes = [8, 32], strides = [1, 1]} : vector<8x96xf32> to vector<8x32xf32>
    %462 = vector.extract_strided_slice %450 {offsets = [0, 64], sizes = [8, 32], strides = [1, 1]} : vector<8x96xf32> to vector<8x32xf32>
    %463 = arith.mulf %459, %462 : vector<8x32xf32>
    %464 = arith.addf %461, %463 : vector<8x32xf32>
    %465 = math.tanh %464 : vector<8x32xf32>
    %cst_167 = arith.constant 1.000000e+00 : f32
    %466 = vector.broadcast %cst_167 : f32 to vector<8x32xf32>
    %467 = arith.subf %466, %460 : vector<8x32xf32>
    %468 = arith.mulf %467, %465 : vector<8x32xf32>
    %469 = arith.mulf %460, %442 : vector<8x32xf32>
    %470 = arith.addf %468, %469 : vector<8x32xf32>
    %c7_168 = arith.constant 7 : index
    %c0_169 = arith.constant 0 : index
    %c0_170 = arith.constant 0 : index
    %471 = vector.load %arg16[%c7_168, %c0_169, %c0_170] : memref<8x8x32xf32, #tpu.memory_space<vmem>>, vector<1x8x32xf32>
    %472 = vector.shape_cast %471 : vector<1x8x32xf32> to vector<8x32xf32>
    %473 = vector.shape_cast %470 : vector<8x32xf32> to vector<1x8x32xf32>
    tpu.vector_store %arg16[%c7_168, %c0_169, %c0_170], %473 {strides = array<i32>} : memref<8x8x32xf32, #tpu.memory_space<vmem>>, vector<1x8x32xf32>,
    %c0_171 = arith.constant 0 : index
    %c0_172 = arith.constant 0 : index
    %c0_173 = arith.constant 0 : index
    %474 = vector.load %arg16[%c0_171, %c0_172, %c0_173] : memref<8x8x32xf32, #tpu.memory_space<vmem>>, vector<8x8x32xf32>
    %475 = vector.shape_cast %474 : vector<8x8x32xf32> to vector<64x32xf32>
    %c2_174 = arith.constant 2 : index
    %c0_175 = arith.constant 0 : index
    %c0_176 = arith.constant 0 : index
    %476 = vector.load %arg3[%c2_174, %c0_175, %c0_176] : memref<4x32x96xbf16, #tpu.memory_space<vmem>>, vector<1x32x96xbf16>
    %477 = vector.shape_cast %476 : vector<1x32x96xbf16> to vector<32x96xbf16>
    %c2_177 = arith.constant 2 : index
    %c0_178 = arith.constant 0 : index
    %c0_179 = arith.constant 0 : index
    %478 = vector.load %arg4[%c2_177, %c0_178, %c0_179] : memref<4x32x96xbf16, #tpu.memory_space<vmem>>, vector<1x32x96xbf16>
    %479 = vector.shape_cast %478 : vector<1x32x96xbf16> to vector<32x96xbf16>
    %c2_180 = arith.constant 2 : index
    %c0_181 = arith.constant 0 : index
    %c0_182 = arith.constant 0 : index
    %480 = vector.load %arg5[%c2_180, %c0_181, %c0_182] : memref<4x1x96xf32, #tpu.memory_space<vmem>>, vector<1x1x96xf32>
    %481 = vector.shape_cast %480 : vector<1x1x96xf32> to vector<1x96xf32>
    %c2_183 = arith.constant 2 : index
    %c0_184 = arith.constant 0 : index
    %c0_185 = arith.constant 0 : index
    %482 = vector.load %arg6[%c2_183, %c0_184, %c0_185] : memref<4x1x96xf32, #tpu.memory_space<vmem>>, vector<1x1x96xf32>
    %483 = vector.shape_cast %482 : vector<1x1x96xf32> to vector<1x96xf32>
    %484 = arith.truncf %475 : vector<64x32xf32> to vector<64x32xbf16>
    %cst_186 = arith.constant dense<0.000000e+00> : vector<64x96xf32>
    %485 = tpu.matmul %484, %477, %cst_186 {dimension_numbers = #tpu.dot_dimension_numbers<[1], [0], [0], [1], [0, 0, 1, 1], [], []>} : vector<64x32xbf16>, vector<32x96xbf16>, vector<64x96xf32> -> vector<64x96xf32>
    %486 = vector.broadcast %481 : vector<1x96xf32> to vector<64x96xf32>
    %487 = arith.addf %485, %486 : vector<64x96xf32>
    %488 = vector.shape_cast %487 : vector<64x96xf32> to vector<8x8x96xf32>
    %c0_187 = arith.constant 0 : index
    %c0_188 = arith.constant 0 : index
    %c0_189 = arith.constant 0 : index
    %489 = vector.load %arg17[%c0_187, %c0_188, %c0_189] : memref<8x8x96xf32, #tpu.memory_space<vmem>>, vector<8x8x96xf32>
    tpu.vector_store %arg17[%c0_187, %c0_188, %c0_189], %488 {strides = array<i32>} : memref<8x8x96xf32, #tpu.memory_space<vmem>>, vector<8x8x96xf32>,
    %490 = vector.shape_cast %483 : vector<1x96xf32> to vector<1x96xf32>
    %491 = vector.broadcast %490 : vector<1x96xf32> to vector<8x96xf32>
    %c0_190 = arith.constant 0 : index
    %c0_191 = arith.constant 0 : index
    %c0_192 = arith.constant 0 : index
    %492 = vector.load %arg17[%c0_190, %c0_191, %c0_192] : memref<8x8x96xf32, #tpu.memory_space<vmem>>, vector<1x8x96xf32>
    %493 = vector.shape_cast %492 : vector<1x8x96xf32> to vector<8x96xf32>
    %494 = vector.extract_strided_slice %493 {offsets = [0, 0], sizes = [8, 64], strides = [1, 1]} : vector<8x96xf32> to vector<8x64xf32>
    %495 = vector.extract_strided_slice %491 {offsets = [0, 0], sizes = [8, 64], strides = [1, 1]} : vector<8x96xf32> to vector<8x64xf32>
    %496 = arith.addf %494, %495 : vector<8x64xf32>
    %497 = arith.negf %496 : vector<8x64xf32>
    %498 = math.exp %497 : vector<8x64xf32>
    %cst_193 = arith.constant 1.000000e+00 : f32
    %499 = vector.broadcast %cst_193 : f32 to vector<8x64xf32>
    %500 = arith.addf %499, %498 : vector<8x64xf32>
    %501 = arith.divf %499, %500 : vector<8x64xf32>
    %502 = vector.extract_strided_slice %501 {offsets = [0, 0], sizes = [8, 32], strides = [1, 1]} : vector<8x64xf32> to vector<8x32xf32>
    %503 = vector.extract_strided_slice %501 {offsets = [0, 32], sizes = [8, 32], strides = [1, 1]} : vector<8x64xf32> to vector<8x32xf32>
    %504 = vector.extract_strided_slice %493 {offsets = [0, 64], sizes = [8, 32], strides = [1, 1]} : vector<8x96xf32> to vector<8x32xf32>
    %505 = vector.extract_strided_slice %491 {offsets = [0, 64], sizes = [8, 32], strides = [1, 1]} : vector<8x96xf32> to vector<8x32xf32>
    %506 = arith.mulf %502, %505 : vector<8x32xf32>
    %507 = arith.addf %504, %506 : vector<8x32xf32>
    %508 = math.tanh %507 : vector<8x32xf32>
    %cst_194 = arith.constant 1.000000e+00 : f32
    %509 = vector.broadcast %cst_194 : f32 to vector<8x32xf32>
    %510 = arith.subf %509, %503 : vector<8x32xf32>
    %511 = arith.mulf %510, %508 : vector<8x32xf32>
    %c0_195 = arith.constant 0 : index
    %c0_196 = arith.constant 0 : index
    %c0_197 = arith.constant 0 : index
    %512 = vector.load %arg16[%c0_195, %c0_196, %c0_197] : memref<8x8x32xf32, #tpu.memory_space<vmem>>, vector<1x8x32xf32>
    %513 = vector.shape_cast %512 : vector<1x8x32xf32> to vector<8x32xf32>
    %514 = vector.shape_cast %511 : vector<8x32xf32> to vector<1x8x32xf32>
    tpu.vector_store %arg16[%c0_195, %c0_196, %c0_197], %514 {strides = array<i32>} : memref<8x8x32xf32, #tpu.memory_space<vmem>>, vector<1x8x32xf32>,
    %c1_198 = arith.constant 1 : index
    %c0_199 = arith.constant 0 : index
    %c0_200 = arith.constant 0 : index
    %515 = vector.load %arg17[%c1_198, %c0_199, %c0_200] : memref<8x8x96xf32, #tpu.memory_space<vmem>>, vector<1x8x96xf32>
    %516 = vector.shape_cast %515 : vector<1x8x96xf32> to vector<8x96xf32>
    %517 = arith.truncf %511 : vector<8x32xf32> to vector<8x32xbf16>
    %cst_201 = arith.constant dense<0.000000e+00> : vector<8x96xf32>
    %518 = tpu.matmul %517, %479, %cst_201 {dimension_numbers = #tpu.dot_dimension_numbers<[1], [0], [0], [1], [0, 0, 1, 1], [], []>} : vector<8x32xbf16>, vector<32x96xbf16>, vector<8x96xf32> -> vector<8x96xf32>
    %519 = arith.addf %518, %491 : vector<8x96xf32>
    %520 = vector.extract_strided_slice %516 {offsets = [0, 0], sizes = [8, 64], strides = [1, 1]} : vector<8x96xf32> to vector<8x64xf32>
    %521 = vector.extract_strided_slice %519 {offsets = [0, 0], sizes = [8, 64], strides = [1, 1]} : vector<8x96xf32> to vector<8x64xf32>
    %522 = arith.addf %520, %521 : vector<8x64xf32>
    %523 = arith.negf %522 : vector<8x64xf32>
    %524 = math.exp %523 : vector<8x64xf32>
    %cst_202 = arith.constant 1.000000e+00 : f32
    %525 = vector.broadcast %cst_202 : f32 to vector<8x64xf32>
    %526 = arith.addf %525, %524 : vector<8x64xf32>
    %527 = arith.divf %525, %526 : vector<8x64xf32>
    %528 = vector.extract_strided_slice %527 {offsets = [0, 0], sizes = [8, 32], strides = [1, 1]} : vector<8x64xf32> to vector<8x32xf32>
    %529 = vector.extract_strided_slice %527 {offsets = [0, 32], sizes = [8, 32], strides = [1, 1]} : vector<8x64xf32> to vector<8x32xf32>
    %530 = vector.extract_strided_slice %516 {offsets = [0, 64], sizes = [8, 32], strides = [1, 1]} : vector<8x96xf32> to vector<8x32xf32>
    %531 = vector.extract_strided_slice %519 {offsets = [0, 64], sizes = [8, 32], strides = [1, 1]} : vector<8x96xf32> to vector<8x32xf32>
    %532 = arith.mulf %528, %531 : vector<8x32xf32>
    %533 = arith.addf %530, %532 : vector<8x32xf32>
    %534 = math.tanh %533 : vector<8x32xf32>
    %cst_203 = arith.constant 1.000000e+00 : f32
    %535 = vector.broadcast %cst_203 : f32 to vector<8x32xf32>
    %536 = arith.subf %535, %529 : vector<8x32xf32>
    %537 = arith.mulf %536, %534 : vector<8x32xf32>
    %538 = arith.mulf %529, %511 : vector<8x32xf32>
    %539 = arith.addf %537, %538 : vector<8x32xf32>
    %c1_204 = arith.constant 1 : index
    %c0_205 = arith.constant 0 : index
    %c0_206 = arith.constant 0 : index
    %540 = vector.load %arg16[%c1_204, %c0_205, %c0_206] : memref<8x8x32xf32, #tpu.memory_space<vmem>>, vector<1x8x32xf32>
    %541 = vector.shape_cast %540 : vector<1x8x32xf32> to vector<8x32xf32>
    %542 = vector.shape_cast %539 : vector<8x32xf32> to vector<1x8x32xf32>
    tpu.vector_store %arg16[%c1_204, %c0_205, %c0_206], %542 {strides = array<i32>} : memref<8x8x32xf32, #tpu.memory_space<vmem>>, vector<1x8x32xf32>,
    %c2_207 = arith.constant 2 : index
    %c0_208 = arith.constant 0 : index
    %c0_209 = arith.constant 0 : index
    %543 = vector.load %arg17[%c2_207, %c0_208, %c0_209] : memref<8x8x96xf32, #tpu.memory_space<vmem>>, vector<1x8x96xf32>
    %544 = vector.shape_cast %543 : vector<1x8x96xf32> to vector<8x96xf32>
    %545 = arith.truncf %539 : vector<8x32xf32> to vector<8x32xbf16>
    %cst_210 = arith.constant dense<0.000000e+00> : vector<8x96xf32>
    %546 = tpu.matmul %545, %479, %cst_210 {dimension_numbers = #tpu.dot_dimension_numbers<[1], [0], [0], [1], [0, 0, 1, 1], [], []>} : vector<8x32xbf16>, vector<32x96xbf16>, vector<8x96xf32> -> vector<8x96xf32>
    %547 = arith.addf %546, %491 : vector<8x96xf32>
    %548 = vector.extract_strided_slice %544 {offsets = [0, 0], sizes = [8, 64], strides = [1, 1]} : vector<8x96xf32> to vector<8x64xf32>
    %549 = vector.extract_strided_slice %547 {offsets = [0, 0], sizes = [8, 64], strides = [1, 1]} : vector<8x96xf32> to vector<8x64xf32>
    %550 = arith.addf %548, %549 : vector<8x64xf32>
    %551 = arith.negf %550 : vector<8x64xf32>
    %552 = math.exp %551 : vector<8x64xf32>
    %cst_211 = arith.constant 1.000000e+00 : f32
    %553 = vector.broadcast %cst_211 : f32 to vector<8x64xf32>
    %554 = arith.addf %553, %552 : vector<8x64xf32>
    %555 = arith.divf %553, %554 : vector<8x64xf32>
    %556 = vector.extract_strided_slice %555 {offsets = [0, 0], sizes = [8, 32], strides = [1, 1]} : vector<8x64xf32> to vector<8x32xf32>
    %557 = vector.extract_strided_slice %555 {offsets = [0, 32], sizes = [8, 32], strides = [1, 1]} : vector<8x64xf32> to vector<8x32xf32>
    %558 = vector.extract_strided_slice %544 {offsets = [0, 64], sizes = [8, 32], strides = [1, 1]} : vector<8x96xf32> to vector<8x32xf32>
    %559 = vector.extract_strided_slice %547 {offsets = [0, 64], sizes = [8, 32], strides = [1, 1]} : vector<8x96xf32> to vector<8x32xf32>
    %560 = arith.mulf %556, %559 : vector<8x32xf32>
    %561 = arith.addf %558, %560 : vector<8x32xf32>
    %562 = math.tanh %561 : vector<8x32xf32>
    %cst_212 = arith.constant 1.000000e+00 : f32
    %563 = vector.broadcast %cst_212 : f32 to vector<8x32xf32>
    %564 = arith.subf %563, %557 : vector<8x32xf32>
    %565 = arith.mulf %564, %562 : vector<8x32xf32>
    %566 = arith.mulf %557, %539 : vector<8x32xf32>
    %567 = arith.addf %565, %566 : vector<8x32xf32>
    %c2_213 = arith.constant 2 : index
    %c0_214 = arith.constant 0 : index
    %c0_215 = arith.constant 0 : index
    %568 = vector.load %arg16[%c2_213, %c0_214, %c0_215] : memref<8x8x32xf32, #tpu.memory_space<vmem>>, vector<1x8x32xf32>
    %569 = vector.shape_cast %568 : vector<1x8x32xf32> to vector<8x32xf32>
    %570 = vector.shape_cast %567 : vector<8x32xf32> to vector<1x8x32xf32>
    tpu.vector_store %arg16[%c2_213, %c0_214, %c0_215], %570 {strides = array<i32>} : memref<8x8x32xf32, #tpu.memory_space<vmem>>, vector<1x8x32xf32>,
    %c3_216 = arith.constant 3 : index
    %c0_217 = arith.constant 0 : index
    %c0_218 = arith.constant 0 : index
    %571 = vector.load %arg17[%c3_216, %c0_217, %c0_218] : memref<8x8x96xf32, #tpu.memory_space<vmem>>, vector<1x8x96xf32>
    %572 = vector.shape_cast %571 : vector<1x8x96xf32> to vector<8x96xf32>
    %573 = arith.truncf %567 : vector<8x32xf32> to vector<8x32xbf16>
    %cst_219 = arith.constant dense<0.000000e+00> : vector<8x96xf32>
    %574 = tpu.matmul %573, %479, %cst_219 {dimension_numbers = #tpu.dot_dimension_numbers<[1], [0], [0], [1], [0, 0, 1, 1], [], []>} : vector<8x32xbf16>, vector<32x96xbf16>, vector<8x96xf32> -> vector<8x96xf32>
    %575 = arith.addf %574, %491 : vector<8x96xf32>
    %576 = vector.extract_strided_slice %572 {offsets = [0, 0], sizes = [8, 64], strides = [1, 1]} : vector<8x96xf32> to vector<8x64xf32>
    %577 = vector.extract_strided_slice %575 {offsets = [0, 0], sizes = [8, 64], strides = [1, 1]} : vector<8x96xf32> to vector<8x64xf32>
    %578 = arith.addf %576, %577 : vector<8x64xf32>
    %579 = arith.negf %578 : vector<8x64xf32>
    %580 = math.exp %579 : vector<8x64xf32>
    %cst_220 = arith.constant 1.000000e+00 : f32
    %581 = vector.broadcast %cst_220 : f32 to vector<8x64xf32>
    %582 = arith.addf %581, %580 : vector<8x64xf32>
    %583 = arith.divf %581, %582 : vector<8x64xf32>
    %584 = vector.extract_strided_slice %583 {offsets = [0, 0], sizes = [8, 32], strides = [1, 1]} : vector<8x64xf32> to vector<8x32xf32>
    %585 = vector.extract_strided_slice %583 {offsets = [0, 32], sizes = [8, 32], strides = [1, 1]} : vector<8x64xf32> to vector<8x32xf32>
    %586 = vector.extract_strided_slice %572 {offsets = [0, 64], sizes = [8, 32], strides = [1, 1]} : vector<8x96xf32> to vector<8x32xf32>
    %587 = vector.extract_strided_slice %575 {offsets = [0, 64], sizes = [8, 32], strides = [1, 1]} : vector<8x96xf32> to vector<8x32xf32>
    %588 = arith.mulf %584, %587 : vector<8x32xf32>
    %589 = arith.addf %586, %588 : vector<8x32xf32>
    %590 = math.tanh %589 : vector<8x32xf32>
    %cst_221 = arith.constant 1.000000e+00 : f32
    %591 = vector.broadcast %cst_221 : f32 to vector<8x32xf32>
    %592 = arith.subf %591, %585 : vector<8x32xf32>
    %593 = arith.mulf %592, %590 : vector<8x32xf32>
    %594 = arith.mulf %585, %567 : vector<8x32xf32>
    %595 = arith.addf %593, %594 : vector<8x32xf32>
    %c3_222 = arith.constant 3 : index
    %c0_223 = arith.constant 0 : index
    %c0_224 = arith.constant 0 : index
    %596 = vector.load %arg16[%c3_222, %c0_223, %c0_224] : memref<8x8x32xf32, #tpu.memory_space<vmem>>, vector<1x8x32xf32>
    %597 = vector.shape_cast %596 : vector<1x8x32xf32> to vector<8x32xf32>
    %598 = vector.shape_cast %595 : vector<8x32xf32> to vector<1x8x32xf32>
    tpu.vector_store %arg16[%c3_222, %c0_223, %c0_224], %598 {strides = array<i32>} : memref<8x8x32xf32, #tpu.memory_space<vmem>>, vector<1x8x32xf32>,
    %c4_225 = arith.constant 4 : index
    %c0_226 = arith.constant 0 : index
    %c0_227 = arith.constant 0 : index
    %599 = vector.load %arg17[%c4_225, %c0_226, %c0_227] : memref<8x8x96xf32, #tpu.memory_space<vmem>>, vector<1x8x96xf32>
    %600 = vector.shape_cast %599 : vector<1x8x96xf32> to vector<8x96xf32>
    %601 = arith.truncf %595 : vector<8x32xf32> to vector<8x32xbf16>
    %cst_228 = arith.constant dense<0.000000e+00> : vector<8x96xf32>
    %602 = tpu.matmul %601, %479, %cst_228 {dimension_numbers = #tpu.dot_dimension_numbers<[1], [0], [0], [1], [0, 0, 1, 1], [], []>} : vector<8x32xbf16>, vector<32x96xbf16>, vector<8x96xf32> -> vector<8x96xf32>
    %603 = arith.addf %602, %491 : vector<8x96xf32>
    %604 = vector.extract_strided_slice %600 {offsets = [0, 0], sizes = [8, 64], strides = [1, 1]} : vector<8x96xf32> to vector<8x64xf32>
    %605 = vector.extract_strided_slice %603 {offsets = [0, 0], sizes = [8, 64], strides = [1, 1]} : vector<8x96xf32> to vector<8x64xf32>
    %606 = arith.addf %604, %605 : vector<8x64xf32>
    %607 = arith.negf %606 : vector<8x64xf32>
    %608 = math.exp %607 : vector<8x64xf32>
    %cst_229 = arith.constant 1.000000e+00 : f32
    %609 = vector.broadcast %cst_229 : f32 to vector<8x64xf32>
    %610 = arith.addf %609, %608 : vector<8x64xf32>
    %611 = arith.divf %609, %610 : vector<8x64xf32>
    %612 = vector.extract_strided_slice %611 {offsets = [0, 0], sizes = [8, 32], strides = [1, 1]} : vector<8x64xf32> to vector<8x32xf32>
    %613 = vector.extract_strided_slice %611 {offsets = [0, 32], sizes = [8, 32], strides = [1, 1]} : vector<8x64xf32> to vector<8x32xf32>
    %614 = vector.extract_strided_slice %600 {offsets = [0, 64], sizes = [8, 32], strides = [1, 1]} : vector<8x96xf32> to vector<8x32xf32>
    %615 = vector.extract_strided_slice %603 {offsets = [0, 64], sizes = [8, 32], strides = [1, 1]} : vector<8x96xf32> to vector<8x32xf32>
    %616 = arith.mulf %612, %615 : vector<8x32xf32>
    %617 = arith.addf %614, %616 : vector<8x32xf32>
    %618 = math.tanh %617 : vector<8x32xf32>
    %cst_230 = arith.constant 1.000000e+00 : f32
    %619 = vector.broadcast %cst_230 : f32 to vector<8x32xf32>
    %620 = arith.subf %619, %613 : vector<8x32xf32>
    %621 = arith.mulf %620, %618 : vector<8x32xf32>
    %622 = arith.mulf %613, %595 : vector<8x32xf32>
    %623 = arith.addf %621, %622 : vector<8x32xf32>
    %c4_231 = arith.constant 4 : index
    %c0_232 = arith.constant 0 : index
    %c0_233 = arith.constant 0 : index
    %624 = vector.load %arg16[%c4_231, %c0_232, %c0_233] : memref<8x8x32xf32, #tpu.memory_space<vmem>>, vector<1x8x32xf32>
    %625 = vector.shape_cast %624 : vector<1x8x32xf32> to vector<8x32xf32>
    %626 = vector.shape_cast %623 : vector<8x32xf32> to vector<1x8x32xf32>
    tpu.vector_store %arg16[%c4_231, %c0_232, %c0_233], %626 {strides = array<i32>} : memref<8x8x32xf32, #tpu.memory_space<vmem>>, vector<1x8x32xf32>,
    %c5_234 = arith.constant 5 : index
    %c0_235 = arith.constant 0 : index
    %c0_236 = arith.constant 0 : index
    %627 = vector.load %arg17[%c5_234, %c0_235, %c0_236] : memref<8x8x96xf32, #tpu.memory_space<vmem>>, vector<1x8x96xf32>
    %628 = vector.shape_cast %627 : vector<1x8x96xf32> to vector<8x96xf32>
    %629 = arith.truncf %623 : vector<8x32xf32> to vector<8x32xbf16>
    %cst_237 = arith.constant dense<0.000000e+00> : vector<8x96xf32>
    %630 = tpu.matmul %629, %479, %cst_237 {dimension_numbers = #tpu.dot_dimension_numbers<[1], [0], [0], [1], [0, 0, 1, 1], [], []>} : vector<8x32xbf16>, vector<32x96xbf16>, vector<8x96xf32> -> vector<8x96xf32>
    %631 = arith.addf %630, %491 : vector<8x96xf32>
    %632 = vector.extract_strided_slice %628 {offsets = [0, 0], sizes = [8, 64], strides = [1, 1]} : vector<8x96xf32> to vector<8x64xf32>
    %633 = vector.extract_strided_slice %631 {offsets = [0, 0], sizes = [8, 64], strides = [1, 1]} : vector<8x96xf32> to vector<8x64xf32>
    %634 = arith.addf %632, %633 : vector<8x64xf32>
    %635 = arith.negf %634 : vector<8x64xf32>
    %636 = math.exp %635 : vector<8x64xf32>
    %cst_238 = arith.constant 1.000000e+00 : f32
    %637 = vector.broadcast %cst_238 : f32 to vector<8x64xf32>
    %638 = arith.addf %637, %636 : vector<8x64xf32>
    %639 = arith.divf %637, %638 : vector<8x64xf32>
    %640 = vector.extract_strided_slice %639 {offsets = [0, 0], sizes = [8, 32], strides = [1, 1]} : vector<8x64xf32> to vector<8x32xf32>
    %641 = vector.extract_strided_slice %639 {offsets = [0, 32], sizes = [8, 32], strides = [1, 1]} : vector<8x64xf32> to vector<8x32xf32>
    %642 = vector.extract_strided_slice %628 {offsets = [0, 64], sizes = [8, 32], strides = [1, 1]} : vector<8x96xf32> to vector<8x32xf32>
    %643 = vector.extract_strided_slice %631 {offsets = [0, 64], sizes = [8, 32], strides = [1, 1]} : vector<8x96xf32> to vector<8x32xf32>
    %644 = arith.mulf %640, %643 : vector<8x32xf32>
    %645 = arith.addf %642, %644 : vector<8x32xf32>
    %646 = math.tanh %645 : vector<8x32xf32>
    %cst_239 = arith.constant 1.000000e+00 : f32
    %647 = vector.broadcast %cst_239 : f32 to vector<8x32xf32>
    %648 = arith.subf %647, %641 : vector<8x32xf32>
    %649 = arith.mulf %648, %646 : vector<8x32xf32>
    %650 = arith.mulf %641, %623 : vector<8x32xf32>
    %651 = arith.addf %649, %650 : vector<8x32xf32>
    %c5_240 = arith.constant 5 : index
    %c0_241 = arith.constant 0 : index
    %c0_242 = arith.constant 0 : index
    %652 = vector.load %arg16[%c5_240, %c0_241, %c0_242] : memref<8x8x32xf32, #tpu.memory_space<vmem>>, vector<1x8x32xf32>
    %653 = vector.shape_cast %652 : vector<1x8x32xf32> to vector<8x32xf32>
    %654 = vector.shape_cast %651 : vector<8x32xf32> to vector<1x8x32xf32>
    tpu.vector_store %arg16[%c5_240, %c0_241, %c0_242], %654 {strides = array<i32>} : memref<8x8x32xf32, #tpu.memory_space<vmem>>, vector<1x8x32xf32>,
    %c6_243 = arith.constant 6 : index
    %c0_244 = arith.constant 0 : index
    %c0_245 = arith.constant 0 : index
    %655 = vector.load %arg17[%c6_243, %c0_244, %c0_245] : memref<8x8x96xf32, #tpu.memory_space<vmem>>, vector<1x8x96xf32>
    %656 = vector.shape_cast %655 : vector<1x8x96xf32> to vector<8x96xf32>
    %657 = arith.truncf %651 : vector<8x32xf32> to vector<8x32xbf16>
    %cst_246 = arith.constant dense<0.000000e+00> : vector<8x96xf32>
    %658 = tpu.matmul %657, %479, %cst_246 {dimension_numbers = #tpu.dot_dimension_numbers<[1], [0], [0], [1], [0, 0, 1, 1], [], []>} : vector<8x32xbf16>, vector<32x96xbf16>, vector<8x96xf32> -> vector<8x96xf32>
    %659 = arith.addf %658, %491 : vector<8x96xf32>
    %660 = vector.extract_strided_slice %656 {offsets = [0, 0], sizes = [8, 64], strides = [1, 1]} : vector<8x96xf32> to vector<8x64xf32>
    %661 = vector.extract_strided_slice %659 {offsets = [0, 0], sizes = [8, 64], strides = [1, 1]} : vector<8x96xf32> to vector<8x64xf32>
    %662 = arith.addf %660, %661 : vector<8x64xf32>
    %663 = arith.negf %662 : vector<8x64xf32>
    %664 = math.exp %663 : vector<8x64xf32>
    %cst_247 = arith.constant 1.000000e+00 : f32
    %665 = vector.broadcast %cst_247 : f32 to vector<8x64xf32>
    %666 = arith.addf %665, %664 : vector<8x64xf32>
    %667 = arith.divf %665, %666 : vector<8x64xf32>
    %668 = vector.extract_strided_slice %667 {offsets = [0, 0], sizes = [8, 32], strides = [1, 1]} : vector<8x64xf32> to vector<8x32xf32>
    %669 = vector.extract_strided_slice %667 {offsets = [0, 32], sizes = [8, 32], strides = [1, 1]} : vector<8x64xf32> to vector<8x32xf32>
    %670 = vector.extract_strided_slice %656 {offsets = [0, 64], sizes = [8, 32], strides = [1, 1]} : vector<8x96xf32> to vector<8x32xf32>
    %671 = vector.extract_strided_slice %659 {offsets = [0, 64], sizes = [8, 32], strides = [1, 1]} : vector<8x96xf32> to vector<8x32xf32>
    %672 = arith.mulf %668, %671 : vector<8x32xf32>
    %673 = arith.addf %670, %672 : vector<8x32xf32>
    %674 = math.tanh %673 : vector<8x32xf32>
    %cst_248 = arith.constant 1.000000e+00 : f32
    %675 = vector.broadcast %cst_248 : f32 to vector<8x32xf32>
    %676 = arith.subf %675, %669 : vector<8x32xf32>
    %677 = arith.mulf %676, %674 : vector<8x32xf32>
    %678 = arith.mulf %669, %651 : vector<8x32xf32>
    %679 = arith.addf %677, %678 : vector<8x32xf32>
    %c6_249 = arith.constant 6 : index
    %c0_250 = arith.constant 0 : index
    %c0_251 = arith.constant 0 : index
    %680 = vector.load %arg16[%c6_249, %c0_250, %c0_251] : memref<8x8x32xf32, #tpu.memory_space<vmem>>, vector<1x8x32xf32>
    %681 = vector.shape_cast %680 : vector<1x8x32xf32> to vector<8x32xf32>
    %682 = vector.shape_cast %679 : vector<8x32xf32> to vector<1x8x32xf32>
    tpu.vector_store %arg16[%c6_249, %c0_250, %c0_251], %682 {strides = array<i32>} : memref<8x8x32xf32, #tpu.memory_space<vmem>>, vector<1x8x32xf32>,
    %c7_252 = arith.constant 7 : index
    %c0_253 = arith.constant 0 : index
    %c0_254 = arith.constant 0 : index
    %683 = vector.load %arg17[%c7_252, %c0_253, %c0_254] : memref<8x8x96xf32, #tpu.memory_space<vmem>>, vector<1x8x96xf32>
    %684 = vector.shape_cast %683 : vector<1x8x96xf32> to vector<8x96xf32>
    %685 = arith.truncf %679 : vector<8x32xf32> to vector<8x32xbf16>
    %cst_255 = arith.constant dense<0.000000e+00> : vector<8x96xf32>
    %686 = tpu.matmul %685, %479, %cst_255 {dimension_numbers = #tpu.dot_dimension_numbers<[1], [0], [0], [1], [0, 0, 1, 1], [], []>} : vector<8x32xbf16>, vector<32x96xbf16>, vector<8x96xf32> -> vector<8x96xf32>
    %687 = arith.addf %686, %491 : vector<8x96xf32>
    %688 = vector.extract_strided_slice %684 {offsets = [0, 0], sizes = [8, 64], strides = [1, 1]} : vector<8x96xf32> to vector<8x64xf32>
    %689 = vector.extract_strided_slice %687 {offsets = [0, 0], sizes = [8, 64], strides = [1, 1]} : vector<8x96xf32> to vector<8x64xf32>
    %690 = arith.addf %688, %689 : vector<8x64xf32>
    %691 = arith.negf %690 : vector<8x64xf32>
    %692 = math.exp %691 : vector<8x64xf32>
    %cst_256 = arith.constant 1.000000e+00 : f32
    %693 = vector.broadcast %cst_256 : f32 to vector<8x64xf32>
    %694 = arith.addf %693, %692 : vector<8x64xf32>
    %695 = arith.divf %693, %694 : vector<8x64xf32>
    %696 = vector.extract_strided_slice %695 {offsets = [0, 0], sizes = [8, 32], strides = [1, 1]} : vector<8x64xf32> to vector<8x32xf32>
    %697 = vector.extract_strided_slice %695 {offsets = [0, 32], sizes = [8, 32], strides = [1, 1]} : vector<8x64xf32> to vector<8x32xf32>
    %698 = vector.extract_strided_slice %684 {offsets = [0, 64], sizes = [8, 32], strides = [1, 1]} : vector<8x96xf32> to vector<8x32xf32>
    %699 = vector.extract_strided_slice %687 {offsets = [0, 64], sizes = [8, 32], strides = [1, 1]} : vector<8x96xf32> to vector<8x32xf32>
    %700 = arith.mulf %696, %699 : vector<8x32xf32>
    %701 = arith.addf %698, %700 : vector<8x32xf32>
    %702 = math.tanh %701 : vector<8x32xf32>
    %cst_257 = arith.constant 1.000000e+00 : f32
    %703 = vector.broadcast %cst_257 : f32 to vector<8x32xf32>
    %704 = arith.subf %703, %697 : vector<8x32xf32>
    %705 = arith.mulf %704, %702 : vector<8x32xf32>
    %706 = arith.mulf %697, %679 : vector<8x32xf32>
    %707 = arith.addf %705, %706 : vector<8x32xf32>
    %c7_258 = arith.constant 7 : index
    %c0_259 = arith.constant 0 : index
    %c0_260 = arith.constant 0 : index
    %708 = vector.load %arg16[%c7_258, %c0_259, %c0_260] : memref<8x8x32xf32, #tpu.memory_space<vmem>>, vector<1x8x32xf32>
    %709 = vector.shape_cast %708 : vector<1x8x32xf32> to vector<8x32xf32>
    %710 = vector.shape_cast %707 : vector<8x32xf32> to vector<1x8x32xf32>
    tpu.vector_store %arg16[%c7_258, %c0_259, %c0_260], %710 {strides = array<i32>} : memref<8x8x32xf32, #tpu.memory_space<vmem>>, vector<1x8x32xf32>,
    %c0_261 = arith.constant 0 : index
    %c0_262 = arith.constant 0 : index
    %c0_263 = arith.constant 0 : index
    %711 = vector.load %arg16[%c0_261, %c0_262, %c0_263] : memref<8x8x32xf32, #tpu.memory_space<vmem>>, vector<8x8x32xf32>
    %712 = vector.shape_cast %711 : vector<8x8x32xf32> to vector<64x32xf32>
    %c3_264 = arith.constant 3 : index
    %c0_265 = arith.constant 0 : index
    %c0_266 = arith.constant 0 : index
    %713 = vector.load %arg3[%c3_264, %c0_265, %c0_266] : memref<4x32x96xbf16, #tpu.memory_space<vmem>>, vector<1x32x96xbf16>
    %714 = vector.shape_cast %713 : vector<1x32x96xbf16> to vector<32x96xbf16>
    %c3_267 = arith.constant 3 : index
    %c0_268 = arith.constant 0 : index
    %c0_269 = arith.constant 0 : index
    %715 = vector.load %arg4[%c3_267, %c0_268, %c0_269] : memref<4x32x96xbf16, #tpu.memory_space<vmem>>, vector<1x32x96xbf16>
    %716 = vector.shape_cast %715 : vector<1x32x96xbf16> to vector<32x96xbf16>
    %c3_270 = arith.constant 3 : index
    %c0_271 = arith.constant 0 : index
    %c0_272 = arith.constant 0 : index
    %717 = vector.load %arg5[%c3_270, %c0_271, %c0_272] : memref<4x1x96xf32, #tpu.memory_space<vmem>>, vector<1x1x96xf32>
    %718 = vector.shape_cast %717 : vector<1x1x96xf32> to vector<1x96xf32>
    %c3_273 = arith.constant 3 : index
    %c0_274 = arith.constant 0 : index
    %c0_275 = arith.constant 0 : index
    %719 = vector.load %arg6[%c3_273, %c0_274, %c0_275] : memref<4x1x96xf32, #tpu.memory_space<vmem>>, vector<1x1x96xf32>
    %720 = vector.shape_cast %719 : vector<1x1x96xf32> to vector<1x96xf32>
    %721 = arith.truncf %712 : vector<64x32xf32> to vector<64x32xbf16>
    %cst_276 = arith.constant dense<0.000000e+00> : vector<64x96xf32>
    %722 = tpu.matmul %721, %714, %cst_276 {dimension_numbers = #tpu.dot_dimension_numbers<[1], [0], [0], [1], [0, 0, 1, 1], [], []>} : vector<64x32xbf16>, vector<32x96xbf16>, vector<64x96xf32> -> vector<64x96xf32>
    %723 = vector.broadcast %718 : vector<1x96xf32> to vector<64x96xf32>
    %724 = arith.addf %722, %723 : vector<64x96xf32>
    %725 = vector.shape_cast %724 : vector<64x96xf32> to vector<8x8x96xf32>
    %c0_277 = arith.constant 0 : index
    %c0_278 = arith.constant 0 : index
    %c0_279 = arith.constant 0 : index
    %726 = vector.load %arg17[%c0_277, %c0_278, %c0_279] : memref<8x8x96xf32, #tpu.memory_space<vmem>>, vector<8x8x96xf32>
    tpu.vector_store %arg17[%c0_277, %c0_278, %c0_279], %725 {strides = array<i32>} : memref<8x8x96xf32, #tpu.memory_space<vmem>>, vector<8x8x96xf32>,
    %727 = vector.shape_cast %720 : vector<1x96xf32> to vector<1x96xf32>
    %728 = vector.broadcast %727 : vector<1x96xf32> to vector<8x96xf32>
    %c0_280 = arith.constant 0 : index
    %c0_281 = arith.constant 0 : index
    %c0_282 = arith.constant 0 : index
    %729 = vector.load %arg17[%c0_280, %c0_281, %c0_282] : memref<8x8x96xf32, #tpu.memory_space<vmem>>, vector<1x8x96xf32>
    %730 = vector.shape_cast %729 : vector<1x8x96xf32> to vector<8x96xf32>
    %731 = vector.extract_strided_slice %730 {offsets = [0, 0], sizes = [8, 64], strides = [1, 1]} : vector<8x96xf32> to vector<8x64xf32>
    %732 = vector.extract_strided_slice %728 {offsets = [0, 0], sizes = [8, 64], strides = [1, 1]} : vector<8x96xf32> to vector<8x64xf32>
    %733 = arith.addf %731, %732 : vector<8x64xf32>
    %734 = arith.negf %733 : vector<8x64xf32>
    %735 = math.exp %734 : vector<8x64xf32>
    %cst_283 = arith.constant 1.000000e+00 : f32
    %736 = vector.broadcast %cst_283 : f32 to vector<8x64xf32>
    %737 = arith.addf %736, %735 : vector<8x64xf32>
    %738 = arith.divf %736, %737 : vector<8x64xf32>
    %739 = vector.extract_strided_slice %738 {offsets = [0, 0], sizes = [8, 32], strides = [1, 1]} : vector<8x64xf32> to vector<8x32xf32>
    %740 = vector.extract_strided_slice %738 {offsets = [0, 32], sizes = [8, 32], strides = [1, 1]} : vector<8x64xf32> to vector<8x32xf32>
    %741 = vector.extract_strided_slice %730 {offsets = [0, 64], sizes = [8, 32], strides = [1, 1]} : vector<8x96xf32> to vector<8x32xf32>
    %742 = vector.extract_strided_slice %728 {offsets = [0, 64], sizes = [8, 32], strides = [1, 1]} : vector<8x96xf32> to vector<8x32xf32>
    %743 = arith.mulf %739, %742 : vector<8x32xf32>
    %744 = arith.addf %741, %743 : vector<8x32xf32>
    %745 = math.tanh %744 : vector<8x32xf32>
    %cst_284 = arith.constant 1.000000e+00 : f32
    %746 = vector.broadcast %cst_284 : f32 to vector<8x32xf32>
    %747 = arith.subf %746, %740 : vector<8x32xf32>
    %748 = arith.mulf %747, %745 : vector<8x32xf32>
    %c1_285 = arith.constant 1 : index
    %c0_286 = arith.constant 0 : index
    %c0_287 = arith.constant 0 : index
    %749 = vector.load %arg17[%c1_285, %c0_286, %c0_287] : memref<8x8x96xf32, #tpu.memory_space<vmem>>, vector<1x8x96xf32>
    %750 = vector.shape_cast %749 : vector<1x8x96xf32> to vector<8x96xf32>
    %751 = arith.truncf %748 : vector<8x32xf32> to vector<8x32xbf16>
    %cst_288 = arith.constant dense<0.000000e+00> : vector<8x96xf32>
    %752 = tpu.matmul %751, %716, %cst_288 {dimension_numbers = #tpu.dot_dimension_numbers<[1], [0], [0], [1], [0, 0, 1, 1], [], []>} : vector<8x32xbf16>, vector<32x96xbf16>, vector<8x96xf32> -> vector<8x96xf32>
    %753 = arith.addf %752, %728 : vector<8x96xf32>
    %754 = vector.extract_strided_slice %750 {offsets = [0, 0], sizes = [8, 64], strides = [1, 1]} : vector<8x96xf32> to vector<8x64xf32>
    %755 = vector.extract_strided_slice %753 {offsets = [0, 0], sizes = [8, 64], strides = [1, 1]} : vector<8x96xf32> to vector<8x64xf32>
    %756 = arith.addf %754, %755 : vector<8x64xf32>
    %757 = arith.negf %756 : vector<8x64xf32>
    %758 = math.exp %757 : vector<8x64xf32>
    %cst_289 = arith.constant 1.000000e+00 : f32
    %759 = vector.broadcast %cst_289 : f32 to vector<8x64xf32>
    %760 = arith.addf %759, %758 : vector<8x64xf32>
    %761 = arith.divf %759, %760 : vector<8x64xf32>
    %762 = vector.extract_strided_slice %761 {offsets = [0, 0], sizes = [8, 32], strides = [1, 1]} : vector<8x64xf32> to vector<8x32xf32>
    %763 = vector.extract_strided_slice %761 {offsets = [0, 32], sizes = [8, 32], strides = [1, 1]} : vector<8x64xf32> to vector<8x32xf32>
    %764 = vector.extract_strided_slice %750 {offsets = [0, 64], sizes = [8, 32], strides = [1, 1]} : vector<8x96xf32> to vector<8x32xf32>
    %765 = vector.extract_strided_slice %753 {offsets = [0, 64], sizes = [8, 32], strides = [1, 1]} : vector<8x96xf32> to vector<8x32xf32>
    %766 = arith.mulf %762, %765 : vector<8x32xf32>
    %767 = arith.addf %764, %766 : vector<8x32xf32>
    %768 = math.tanh %767 : vector<8x32xf32>
    %cst_290 = arith.constant 1.000000e+00 : f32
    %769 = vector.broadcast %cst_290 : f32 to vector<8x32xf32>
    %770 = arith.subf %769, %763 : vector<8x32xf32>
    %771 = arith.mulf %770, %768 : vector<8x32xf32>
    %772 = arith.mulf %763, %748 : vector<8x32xf32>
    %773 = arith.addf %771, %772 : vector<8x32xf32>
    %c2_291 = arith.constant 2 : index
    %c0_292 = arith.constant 0 : index
    %c0_293 = arith.constant 0 : index
    %774 = vector.load %arg17[%c2_291, %c0_292, %c0_293] : memref<8x8x96xf32, #tpu.memory_space<vmem>>, vector<1x8x96xf32>
    %775 = vector.shape_cast %774 : vector<1x8x96xf32> to vector<8x96xf32>
    %776 = arith.truncf %773 : vector<8x32xf32> to vector<8x32xbf16>
    %cst_294 = arith.constant dense<0.000000e+00> : vector<8x96xf32>
    %777 = tpu.matmul %776, %716, %cst_294 {dimension_numbers = #tpu.dot_dimension_numbers<[1], [0], [0], [1], [0, 0, 1, 1], [], []>} : vector<8x32xbf16>, vector<32x96xbf16>, vector<8x96xf32> -> vector<8x96xf32>
    %778 = arith.addf %777, %728 : vector<8x96xf32>
    %779 = vector.extract_strided_slice %775 {offsets = [0, 0], sizes = [8, 64], strides = [1, 1]} : vector<8x96xf32> to vector<8x64xf32>
    %780 = vector.extract_strided_slice %778 {offsets = [0, 0], sizes = [8, 64], strides = [1, 1]} : vector<8x96xf32> to vector<8x64xf32>
    %781 = arith.addf %779, %780 : vector<8x64xf32>
    %782 = arith.negf %781 : vector<8x64xf32>
    %783 = math.exp %782 : vector<8x64xf32>
    %cst_295 = arith.constant 1.000000e+00 : f32
    %784 = vector.broadcast %cst_295 : f32 to vector<8x64xf32>
    %785 = arith.addf %784, %783 : vector<8x64xf32>
    %786 = arith.divf %784, %785 : vector<8x64xf32>
    %787 = vector.extract_strided_slice %786 {offsets = [0, 0], sizes = [8, 32], strides = [1, 1]} : vector<8x64xf32> to vector<8x32xf32>
    %788 = vector.extract_strided_slice %786 {offsets = [0, 32], sizes = [8, 32], strides = [1, 1]} : vector<8x64xf32> to vector<8x32xf32>
    %789 = vector.extract_strided_slice %775 {offsets = [0, 64], sizes = [8, 32], strides = [1, 1]} : vector<8x96xf32> to vector<8x32xf32>
    %790 = vector.extract_strided_slice %778 {offsets = [0, 64], sizes = [8, 32], strides = [1, 1]} : vector<8x96xf32> to vector<8x32xf32>
    %791 = arith.mulf %787, %790 : vector<8x32xf32>
    %792 = arith.addf %789, %791 : vector<8x32xf32>
    %793 = math.tanh %792 : vector<8x32xf32>
    %cst_296 = arith.constant 1.000000e+00 : f32
    %794 = vector.broadcast %cst_296 : f32 to vector<8x32xf32>
    %795 = arith.subf %794, %788 : vector<8x32xf32>
    %796 = arith.mulf %795, %793 : vector<8x32xf32>
    %797 = arith.mulf %788, %773 : vector<8x32xf32>
    %798 = arith.addf %796, %797 : vector<8x32xf32>
    %c3_297 = arith.constant 3 : index
    %c0_298 = arith.constant 0 : index
    %c0_299 = arith.constant 0 : index
    %799 = vector.load %arg17[%c3_297, %c0_298, %c0_299] : memref<8x8x96xf32, #tpu.memory_space<vmem>>, vector<1x8x96xf32>
    %800 = vector.shape_cast %799 : vector<1x8x96xf32> to vector<8x96xf32>
    %801 = arith.truncf %798 : vector<8x32xf32> to vector<8x32xbf16>
    %cst_300 = arith.constant dense<0.000000e+00> : vector<8x96xf32>
    %802 = tpu.matmul %801, %716, %cst_300 {dimension_numbers = #tpu.dot_dimension_numbers<[1], [0], [0], [1], [0, 0, 1, 1], [], []>} : vector<8x32xbf16>, vector<32x96xbf16>, vector<8x96xf32> -> vector<8x96xf32>
    %803 = arith.addf %802, %728 : vector<8x96xf32>
    %804 = vector.extract_strided_slice %800 {offsets = [0, 0], sizes = [8, 64], strides = [1, 1]} : vector<8x96xf32> to vector<8x64xf32>
    %805 = vector.extract_strided_slice %803 {offsets = [0, 0], sizes = [8, 64], strides = [1, 1]} : vector<8x96xf32> to vector<8x64xf32>
    %806 = arith.addf %804, %805 : vector<8x64xf32>
    %807 = arith.negf %806 : vector<8x64xf32>
    %808 = math.exp %807 : vector<8x64xf32>
    %cst_301 = arith.constant 1.000000e+00 : f32
    %809 = vector.broadcast %cst_301 : f32 to vector<8x64xf32>
    %810 = arith.addf %809, %808 : vector<8x64xf32>
    %811 = arith.divf %809, %810 : vector<8x64xf32>
    %812 = vector.extract_strided_slice %811 {offsets = [0, 0], sizes = [8, 32], strides = [1, 1]} : vector<8x64xf32> to vector<8x32xf32>
    %813 = vector.extract_strided_slice %811 {offsets = [0, 32], sizes = [8, 32], strides = [1, 1]} : vector<8x64xf32> to vector<8x32xf32>
    %814 = vector.extract_strided_slice %800 {offsets = [0, 64], sizes = [8, 32], strides = [1, 1]} : vector<8x96xf32> to vector<8x32xf32>
    %815 = vector.extract_strided_slice %803 {offsets = [0, 64], sizes = [8, 32], strides = [1, 1]} : vector<8x96xf32> to vector<8x32xf32>
    %816 = arith.mulf %812, %815 : vector<8x32xf32>
    %817 = arith.addf %814, %816 : vector<8x32xf32>
    %818 = math.tanh %817 : vector<8x32xf32>
    %cst_302 = arith.constant 1.000000e+00 : f32
    %819 = vector.broadcast %cst_302 : f32 to vector<8x32xf32>
    %820 = arith.subf %819, %813 : vector<8x32xf32>
    %821 = arith.mulf %820, %818 : vector<8x32xf32>
    %822 = arith.mulf %813, %798 : vector<8x32xf32>
    %823 = arith.addf %821, %822 : vector<8x32xf32>
    %c4_303 = arith.constant 4 : index
    %c0_304 = arith.constant 0 : index
    %c0_305 = arith.constant 0 : index
    %824 = vector.load %arg17[%c4_303, %c0_304, %c0_305] : memref<8x8x96xf32, #tpu.memory_space<vmem>>, vector<1x8x96xf32>
    %825 = vector.shape_cast %824 : vector<1x8x96xf32> to vector<8x96xf32>
    %826 = arith.truncf %823 : vector<8x32xf32> to vector<8x32xbf16>
    %cst_306 = arith.constant dense<0.000000e+00> : vector<8x96xf32>
    %827 = tpu.matmul %826, %716, %cst_306 {dimension_numbers = #tpu.dot_dimension_numbers<[1], [0], [0], [1], [0, 0, 1, 1], [], []>} : vector<8x32xbf16>, vector<32x96xbf16>, vector<8x96xf32> -> vector<8x96xf32>
    %828 = arith.addf %827, %728 : vector<8x96xf32>
    %829 = vector.extract_strided_slice %825 {offsets = [0, 0], sizes = [8, 64], strides = [1, 1]} : vector<8x96xf32> to vector<8x64xf32>
    %830 = vector.extract_strided_slice %828 {offsets = [0, 0], sizes = [8, 64], strides = [1, 1]} : vector<8x96xf32> to vector<8x64xf32>
    %831 = arith.addf %829, %830 : vector<8x64xf32>
    %832 = arith.negf %831 : vector<8x64xf32>
    %833 = math.exp %832 : vector<8x64xf32>
    %cst_307 = arith.constant 1.000000e+00 : f32
    %834 = vector.broadcast %cst_307 : f32 to vector<8x64xf32>
    %835 = arith.addf %834, %833 : vector<8x64xf32>
    %836 = arith.divf %834, %835 : vector<8x64xf32>
    %837 = vector.extract_strided_slice %836 {offsets = [0, 0], sizes = [8, 32], strides = [1, 1]} : vector<8x64xf32> to vector<8x32xf32>
    %838 = vector.extract_strided_slice %836 {offsets = [0, 32], sizes = [8, 32], strides = [1, 1]} : vector<8x64xf32> to vector<8x32xf32>
    %839 = vector.extract_strided_slice %825 {offsets = [0, 64], sizes = [8, 32], strides = [1, 1]} : vector<8x96xf32> to vector<8x32xf32>
    %840 = vector.extract_strided_slice %828 {offsets = [0, 64], sizes = [8, 32], strides = [1, 1]} : vector<8x96xf32> to vector<8x32xf32>
    %841 = arith.mulf %837, %840 : vector<8x32xf32>
    %842 = arith.addf %839, %841 : vector<8x32xf32>
    %843 = math.tanh %842 : vector<8x32xf32>
    %cst_308 = arith.constant 1.000000e+00 : f32
    %844 = vector.broadcast %cst_308 : f32 to vector<8x32xf32>
    %845 = arith.subf %844, %838 : vector<8x32xf32>
    %846 = arith.mulf %845, %843 : vector<8x32xf32>
    %847 = arith.mulf %838, %823 : vector<8x32xf32>
    %848 = arith.addf %846, %847 : vector<8x32xf32>
    %c5_309 = arith.constant 5 : index
    %c0_310 = arith.constant 0 : index
    %c0_311 = arith.constant 0 : index
    %849 = vector.load %arg17[%c5_309, %c0_310, %c0_311] : memref<8x8x96xf32, #tpu.memory_space<vmem>>, vector<1x8x96xf32>
    %850 = vector.shape_cast %849 : vector<1x8x96xf32> to vector<8x96xf32>
    %851 = arith.truncf %848 : vector<8x32xf32> to vector<8x32xbf16>
    %cst_312 = arith.constant dense<0.000000e+00> : vector<8x96xf32>
    %852 = tpu.matmul %851, %716, %cst_312 {dimension_numbers = #tpu.dot_dimension_numbers<[1], [0], [0], [1], [0, 0, 1, 1], [], []>} : vector<8x32xbf16>, vector<32x96xbf16>, vector<8x96xf32> -> vector<8x96xf32>
    %853 = arith.addf %852, %728 : vector<8x96xf32>
    %854 = vector.extract_strided_slice %850 {offsets = [0, 0], sizes = [8, 64], strides = [1, 1]} : vector<8x96xf32> to vector<8x64xf32>
    %855 = vector.extract_strided_slice %853 {offsets = [0, 0], sizes = [8, 64], strides = [1, 1]} : vector<8x96xf32> to vector<8x64xf32>
    %856 = arith.addf %854, %855 : vector<8x64xf32>
    %857 = arith.negf %856 : vector<8x64xf32>
    %858 = math.exp %857 : vector<8x64xf32>
    %cst_313 = arith.constant 1.000000e+00 : f32
    %859 = vector.broadcast %cst_313 : f32 to vector<8x64xf32>
    %860 = arith.addf %859, %858 : vector<8x64xf32>
    %861 = arith.divf %859, %860 : vector<8x64xf32>
    %862 = vector.extract_strided_slice %861 {offsets = [0, 0], sizes = [8, 32], strides = [1, 1]} : vector<8x64xf32> to vector<8x32xf32>
    %863 = vector.extract_strided_slice %861 {offsets = [0, 32], sizes = [8, 32], strides = [1, 1]} : vector<8x64xf32> to vector<8x32xf32>
    %864 = vector.extract_strided_slice %850 {offsets = [0, 64], sizes = [8, 32], strides = [1, 1]} : vector<8x96xf32> to vector<8x32xf32>
    %865 = vector.extract_strided_slice %853 {offsets = [0, 64], sizes = [8, 32], strides = [1, 1]} : vector<8x96xf32> to vector<8x32xf32>
    %866 = arith.mulf %862, %865 : vector<8x32xf32>
    %867 = arith.addf %864, %866 : vector<8x32xf32>
    %868 = math.tanh %867 : vector<8x32xf32>
    %cst_314 = arith.constant 1.000000e+00 : f32
    %869 = vector.broadcast %cst_314 : f32 to vector<8x32xf32>
    %870 = arith.subf %869, %863 : vector<8x32xf32>
    %871 = arith.mulf %870, %868 : vector<8x32xf32>
    %872 = arith.mulf %863, %848 : vector<8x32xf32>
    %873 = arith.addf %871, %872 : vector<8x32xf32>
    %c6_315 = arith.constant 6 : index
    %c0_316 = arith.constant 0 : index
    %c0_317 = arith.constant 0 : index
    %874 = vector.load %arg17[%c6_315, %c0_316, %c0_317] : memref<8x8x96xf32, #tpu.memory_space<vmem>>, vector<1x8x96xf32>
    %875 = vector.shape_cast %874 : vector<1x8x96xf32> to vector<8x96xf32>
    %876 = arith.truncf %873 : vector<8x32xf32> to vector<8x32xbf16>
    %cst_318 = arith.constant dense<0.000000e+00> : vector<8x96xf32>
    %877 = tpu.matmul %876, %716, %cst_318 {dimension_numbers = #tpu.dot_dimension_numbers<[1], [0], [0], [1], [0, 0, 1, 1], [], []>} : vector<8x32xbf16>, vector<32x96xbf16>, vector<8x96xf32> -> vector<8x96xf32>
    %878 = arith.addf %877, %728 : vector<8x96xf32>
    %879 = vector.extract_strided_slice %875 {offsets = [0, 0], sizes = [8, 64], strides = [1, 1]} : vector<8x96xf32> to vector<8x64xf32>
    %880 = vector.extract_strided_slice %878 {offsets = [0, 0], sizes = [8, 64], strides = [1, 1]} : vector<8x96xf32> to vector<8x64xf32>
    %881 = arith.addf %879, %880 : vector<8x64xf32>
    %882 = arith.negf %881 : vector<8x64xf32>
    %883 = math.exp %882 : vector<8x64xf32>
    %cst_319 = arith.constant 1.000000e+00 : f32
    %884 = vector.broadcast %cst_319 : f32 to vector<8x64xf32>
    %885 = arith.addf %884, %883 : vector<8x64xf32>
    %886 = arith.divf %884, %885 : vector<8x64xf32>
    %887 = vector.extract_strided_slice %886 {offsets = [0, 0], sizes = [8, 32], strides = [1, 1]} : vector<8x64xf32> to vector<8x32xf32>
    %888 = vector.extract_strided_slice %886 {offsets = [0, 32], sizes = [8, 32], strides = [1, 1]} : vector<8x64xf32> to vector<8x32xf32>
    %889 = vector.extract_strided_slice %875 {offsets = [0, 64], sizes = [8, 32], strides = [1, 1]} : vector<8x96xf32> to vector<8x32xf32>
    %890 = vector.extract_strided_slice %878 {offsets = [0, 64], sizes = [8, 32], strides = [1, 1]} : vector<8x96xf32> to vector<8x32xf32>
    %891 = arith.mulf %887, %890 : vector<8x32xf32>
    %892 = arith.addf %889, %891 : vector<8x32xf32>
    %893 = math.tanh %892 : vector<8x32xf32>
    %cst_320 = arith.constant 1.000000e+00 : f32
    %894 = vector.broadcast %cst_320 : f32 to vector<8x32xf32>
    %895 = arith.subf %894, %888 : vector<8x32xf32>
    %896 = arith.mulf %895, %893 : vector<8x32xf32>
    %897 = arith.mulf %888, %873 : vector<8x32xf32>
    %898 = arith.addf %896, %897 : vector<8x32xf32>
    %c7_321 = arith.constant 7 : index
    %c0_322 = arith.constant 0 : index
    %c0_323 = arith.constant 0 : index
    %899 = vector.load %arg17[%c7_321, %c0_322, %c0_323] : memref<8x8x96xf32, #tpu.memory_space<vmem>>, vector<1x8x96xf32>
    %900 = vector.shape_cast %899 : vector<1x8x96xf32> to vector<8x96xf32>
    %901 = arith.truncf %898 : vector<8x32xf32> to vector<8x32xbf16>
    %cst_324 = arith.constant dense<0.000000e+00> : vector<8x96xf32>
    %902 = tpu.matmul %901, %716, %cst_324 {dimension_numbers = #tpu.dot_dimension_numbers<[1], [0], [0], [1], [0, 0, 1, 1], [], []>} : vector<8x32xbf16>, vector<32x96xbf16>, vector<8x96xf32> -> vector<8x96xf32>
    %903 = arith.addf %902, %728 : vector<8x96xf32>
    %904 = vector.extract_strided_slice %900 {offsets = [0, 0], sizes = [8, 64], strides = [1, 1]} : vector<8x96xf32> to vector<8x64xf32>
    %905 = vector.extract_strided_slice %903 {offsets = [0, 0], sizes = [8, 64], strides = [1, 1]} : vector<8x96xf32> to vector<8x64xf32>
    %906 = arith.addf %904, %905 : vector<8x64xf32>
    %907 = arith.negf %906 : vector<8x64xf32>
    %908 = math.exp %907 : vector<8x64xf32>
    %cst_325 = arith.constant 1.000000e+00 : f32
    %909 = vector.broadcast %cst_325 : f32 to vector<8x64xf32>
    %910 = arith.addf %909, %908 : vector<8x64xf32>
    %911 = arith.divf %909, %910 : vector<8x64xf32>
    %912 = vector.extract_strided_slice %911 {offsets = [0, 0], sizes = [8, 32], strides = [1, 1]} : vector<8x64xf32> to vector<8x32xf32>
    %913 = vector.extract_strided_slice %911 {offsets = [0, 32], sizes = [8, 32], strides = [1, 1]} : vector<8x64xf32> to vector<8x32xf32>
    %914 = vector.extract_strided_slice %900 {offsets = [0, 64], sizes = [8, 32], strides = [1, 1]} : vector<8x96xf32> to vector<8x32xf32>
    %915 = vector.extract_strided_slice %903 {offsets = [0, 64], sizes = [8, 32], strides = [1, 1]} : vector<8x96xf32> to vector<8x32xf32>
    %916 = arith.mulf %912, %915 : vector<8x32xf32>
    %917 = arith.addf %914, %916 : vector<8x32xf32>
    %918 = math.tanh %917 : vector<8x32xf32>
    %cst_326 = arith.constant 1.000000e+00 : f32
    %919 = vector.broadcast %cst_326 : f32 to vector<8x32xf32>
    %920 = arith.subf %919, %913 : vector<8x32xf32>
    %921 = arith.mulf %920, %918 : vector<8x32xf32>
    %922 = arith.mulf %913, %898 : vector<8x32xf32>
    %923 = arith.addf %921, %922 : vector<8x32xf32>
    %924 = arith.truncf %923 : vector<8x32xf32> to vector<8x32xbf16>
    %c0_327 = arith.constant 0 : index
    %c0_328 = arith.constant 0 : index
    %925 = vector.load %arg7[%c0_327, %c0_328] : memref<32x64xbf16, #tpu.memory_space<vmem>>, vector<32x64xbf16>
    %cst_329 = arith.constant dense<0.000000e+00> : vector<8x64xf32>
    %926 = tpu.matmul %924, %925, %cst_329 {dimension_numbers = #tpu.dot_dimension_numbers<[1], [0], [0], [1], [0, 0, 1, 1], [], []>} : vector<8x32xbf16>, vector<32x64xbf16>, vector<8x64xf32> -> vector<8x64xf32>
    %c0_330 = arith.constant 0 : index
    %c0_331 = arith.constant 0 : index
    %927 = vector.load %arg8[%c0_330, %c0_331] : memref<1x64xf32, #tpu.memory_space<vmem>>, vector<1x64xf32>
    %928 = vector.broadcast %927 : vector<1x64xf32> to vector<8x64xf32>
    %929 = arith.addf %926, %928 : vector<8x64xf32>
    %930 = math.tanh %929 : vector<8x64xf32>
    %931 = arith.truncf %930 : vector<8x64xf32> to vector<8x64xbf16>
    %c0_332 = arith.constant 0 : index
    %c0_333 = arith.constant 0 : index
    %932 = vector.load %arg9[%c0_332, %c0_333] : memref<64x64xbf16, #tpu.memory_space<vmem>>, vector<64x64xbf16>
    %cst_334 = arith.constant dense<0.000000e+00> : vector<8x64xf32>
    %933 = tpu.matmul %931, %932, %cst_334 {dimension_numbers = #tpu.dot_dimension_numbers<[1], [0], [0], [1], [0, 0, 1, 1], [], []>} : vector<8x64xbf16>, vector<64x64xbf16>, vector<8x64xf32> -> vector<8x64xf32>
    %c0_335 = arith.constant 0 : index
    %c0_336 = arith.constant 0 : index
    %934 = vector.load %arg10[%c0_335, %c0_336] : memref<1x64xf32, #tpu.memory_space<vmem>>, vector<1x64xf32>
    %935 = vector.broadcast %934 : vector<1x64xf32> to vector<8x64xf32>
    %936 = arith.addf %933, %935 : vector<8x64xf32>
    %937 = math.tanh %936 : vector<8x64xf32>
    %938 = arith.truncf %937 : vector<8x64xf32> to vector<8x64xbf16>
    %c0_337 = arith.constant 0 : index
    %c0_338 = arith.constant 0 : index
    %939 = vector.load %arg11[%c0_337, %c0_338] : memref<64x64xbf16, #tpu.memory_space<vmem>>, vector<64x64xbf16>
    %cst_339 = arith.constant dense<0.000000e+00> : vector<8x64xf32>
    %940 = tpu.matmul %938, %939, %cst_339 {dimension_numbers = #tpu.dot_dimension_numbers<[1], [0], [0], [1], [0, 0, 1, 1], [], []>} : vector<8x64xbf16>, vector<64x64xbf16>, vector<8x64xf32> -> vector<8x64xf32>
    %c0_340 = arith.constant 0 : index
    %c0_341 = arith.constant 0 : index
    %941 = vector.load %arg12[%c0_340, %c0_341] : memref<1x64xf32, #tpu.memory_space<vmem>>, vector<1x64xf32>
    %942 = vector.broadcast %941 : vector<1x64xf32> to vector<8x64xf32>
    %943 = arith.addf %940, %942 : vector<8x64xf32>
    %944 = math.tanh %943 : vector<8x64xf32>
    %945 = arith.truncf %944 : vector<8x64xf32> to vector<8x64xbf16>
    %c0_342 = arith.constant 0 : index
    %c0_343 = arith.constant 0 : index
    %946 = vector.load %arg13[%c0_342, %c0_343] : memref<64x256xbf16, #tpu.memory_space<vmem>>, vector<64x256xbf16>
    %cst_344 = arith.constant dense<0.000000e+00> : vector<8x256xf32>
    %947 = tpu.matmul %945, %946, %cst_344 {dimension_numbers = #tpu.dot_dimension_numbers<[1], [0], [0], [1], [0, 0, 1, 1], [], []>} : vector<8x64xbf16>, vector<64x256xbf16>, vector<8x256xf32> -> vector<8x256xf32>
    %c0_345 = arith.constant 0 : index
    %c0_346 = arith.constant 0 : index
    %948 = vector.load %arg14[%c0_345, %c0_346] : memref<1x256xf32, #tpu.memory_space<vmem>>, vector<1x256xf32>
    %949 = vector.broadcast %948 : vector<1x256xf32> to vector<8x256xf32>
    %950 = arith.addf %947, %949 : vector<8x256xf32>
    %951 = vector.extract_strided_slice %950 {offsets = [0, 0], sizes = [8, 128], strides = [1, 1]} : vector<8x256xf32> to vector<8x128xf32>
    %952 = vector.extract_strided_slice %950 {offsets = [0, 128], sizes = [8, 128], strides = [1, 1]} : vector<8x256xf32> to vector<8x128xf32>
    %c0_347 = arith.constant 0 : index
    %c0_348 = arith.constant 0 : index
    %953 = vector.load %arg2[%c0_347, %c0_348] : memref<8x128xf32, #tpu.memory_space<vmem>>, vector<8x128xf32>
    %954 = arith.subf %953, %951 : vector<8x128xf32>
    %cst_349 = arith.constant 0.000000e+00 : f32
    %955 = vector.broadcast %cst_349 : f32 to vector<8x128xf32>
    %956 = arith.subf %955, %952 : vector<8x128xf32>
    %957 = math.exp %956 : vector<8x128xf32>
    %958 = arith.mulf %954, %957 : vector<8x128xf32>
    %cst_350 = arith.constant dense<0.000000e+00> : vector<8xf32>
    %959 = vector.multi_reduction <add>, %952, %cst_350 [1] : vector<8x128xf32> to vector<8xf32>
    %960 = vector.shape_cast %959 : vector<8xf32> to vector<8x1xf32>
    %961 = tpu.iota {dimensions = array<i32: 1>} : vector<8x128xi32>
    %c16_i32 = arith.constant 16 : i32
    %962 = vector.broadcast %c16_i32 : i32 to vector<8x128xi32>
    %963 = arith.cmpi eq, %961, %962 : vector<8x128xi32>
    %964 = vector.shape_cast %960 : vector<8x1xf32> to vector<8x1xf32>
    %965 = vector.broadcast %964 : vector<8x1xf32> to vector<8x128xf32>
    %966 = arith.select %963, %965, %958 : vector<8x128xi1>, vector<8x128xf32>
    %c0_351 = arith.constant 0 : index
    %c0_352 = arith.constant 0 : index
    %967 = vector.load %arg15[%c0_351, %c0_352] : memref<8x128xf32, #tpu.memory_space<vmem>>, vector<8x128xf32>
    tpu.vector_store %arg15[%c0_351, %c0_352], %966 {strides = array<i32>} : memref<8x128xf32, #tpu.memory_space<vmem>>, vector<8x128xf32>,
    return
  }
  func.func @transform_0(%arg0: i32) -> (i32, i32, i32) {
    %c0_i32 = arith.constant 0 : i32
    %c0_i32_0 = arith.constant 0 : i32
    %c0_i32_1 = arith.constant 0 : i32
    return %c0_i32, %arg0, %c0_i32_0 : i32, i32, i32
  }
  func.func @transform_1(%arg0: i32) -> (i32, i32) {
    %c0_i32 = arith.constant 0 : i32
    %c0_i32_0 = arith.constant 0 : i32
    return %arg0, %c0_i32 : i32, i32
  }
  func.func @transform_2(%arg0: i32) -> (i32, i32, i32) {
    %c0_i32 = arith.constant 0 : i32
    %c0_i32_0 = arith.constant 0 : i32
    %c0_i32_1 = arith.constant 0 : i32
    %c0_i32_2 = arith.constant 0 : i32
    return %c0_i32, %c0_i32_0, %c0_i32_1 : i32, i32, i32
  }
  func.func @transform_3(%arg0: i32) -> (i32, i32, i32) {
    %c0_i32 = arith.constant 0 : i32
    %c0_i32_0 = arith.constant 0 : i32
    %c0_i32_1 = arith.constant 0 : i32
    %c0_i32_2 = arith.constant 0 : i32
    return %c0_i32, %c0_i32_0, %c0_i32_1 : i32, i32, i32
  }
  func.func @transform_4(%arg0: i32) -> (i32, i32, i32) {
    %c0_i32 = arith.constant 0 : i32
    %c0_i32_0 = arith.constant 0 : i32
    %c0_i32_1 = arith.constant 0 : i32
    %c0_i32_2 = arith.constant 0 : i32
    return %c0_i32, %c0_i32_0, %c0_i32_1 : i32, i32, i32
  }
  func.func @transform_5(%arg0: i32) -> (i32, i32, i32) {
    %c0_i32 = arith.constant 0 : i32
    %c0_i32_0 = arith.constant 0 : i32
    %c0_i32_1 = arith.constant 0 : i32
    %c0_i32_2 = arith.constant 0 : i32
    return %c0_i32, %c0_i32_0, %c0_i32_1 : i32, i32, i32
  }
  func.func @transform_6(%arg0: i32) -> (i32, i32) {
    %c0_i32 = arith.constant 0 : i32
    %c0_i32_0 = arith.constant 0 : i32
    %c0_i32_1 = arith.constant 0 : i32
    return %c0_i32, %c0_i32_0 : i32, i32
  }
  func.func @transform_7(%arg0: i32) -> (i32, i32) {
    %c0_i32 = arith.constant 0 : i32
    %c0_i32_0 = arith.constant 0 : i32
    %c0_i32_1 = arith.constant 0 : i32
    return %c0_i32, %c0_i32_0 : i32, i32
  }
  func.func @transform_8(%arg0: i32) -> (i32, i32) {
    %c0_i32 = arith.constant 0 : i32
    %c0_i32_0 = arith.constant 0 : i32
    %c0_i32_1 = arith.constant 0 : i32
    return %c0_i32, %c0_i32_0 : i32, i32
  }
  func.func @transform_9(%arg0: i32) -> (i32, i32) {
    %c0_i32 = arith.constant 0 : i32
    %c0_i32_0 = arith.constant 0 : i32
    %c0_i32_1 = arith.constant 0 : i32
    return %c0_i32, %c0_i32_0 : i32, i32
  }
  func.func @transform_10(%arg0: i32) -> (i32, i32) {
    %c0_i32 = arith.constant 0 : i32
    %c0_i32_0 = arith.constant 0 : i32
    %c0_i32_1 = arith.constant 0 : i32
    return %c0_i32, %c0_i32_0 : i32, i32
  }
  func.func @transform_11(%arg0: i32) -> (i32, i32) {
    %c0_i32 = arith.constant 0 : i32
    %c0_i32_0 = arith.constant 0 : i32
    %c0_i32_1 = arith.constant 0 : i32
    return %c0_i32, %c0_i32_0 : i32, i32
  }
  func.func @transform_12(%arg0: i32) -> (i32, i32) {
    %c0_i32 = arith.constant 0 : i32
    %c0_i32_0 = arith.constant 0 : i32
    %c0_i32_1 = arith.constant 0 : i32
    return %c0_i32, %c0_i32_0 : i32, i32
  }
  func.func @transform_13(%arg0: i32) -> (i32, i32) {
    %c0_i32 = arith.constant 0 : i32
    %c0_i32_0 = arith.constant 0 : i32
    %c0_i32_1 = arith.constant 0 : i32
    return %c0_i32, %c0_i32_0 : i32, i32
  }
  func.func @transform_14(%arg0: i32) -> (i32, i32) {
    %c0_i32 = arith.constant 0 : i32
    %c0_i32_0 = arith.constant 0 : i32
    return %arg0, %c0_i32 : i32, i32
  }
}

</mosaic_0001>

<llo_original>
// kernel: tpu_custom_call.1
$region0: #{tpu_custom_call.1}
  #allocation0 [shape = 'u32[]', space=smem, size = 0x4, offset = 0x4, fixed_abs, tag = 'smem constant byte address 0x4 - core index']
  #allocation1 [shape = 'u32[72,128]{1,0:T(1,128)}', space=vmem, size = 0x9000, scoped, tag = 'internal scratch']
  #allocation2 [shape = 'f32[8,8,32]{2,1,0:T(8,128)}', space=vmem, size = 0x8000, scoped, tag = 'scratch operand']
  #allocation3 [shape = 'f32[8,8,96]{2,1,0:T(8,128)}', space=vmem, size = 0x8000, scoped, tag = 'scratch operand']
  %s0 = inlined_call_operand.hbm [shape: f32[8,8,32], index: 0, kind: input, shape index: {}]
  %s1 = inlined_call_operand.hbm [shape: f32[8,128], index: 1, kind: input, shape index: {}]
  %s2 = inlined_call_operand.hbm [shape: bf16[4,32,96], index: 2, kind: input, shape index: {}]
  %s3 = inlined_call_operand.hbm [shape: bf16[4,32,96], index: 3, kind: input, shape index: {}]
  %s4 = inlined_call_operand.hbm [shape: f32[4,1,96], index: 4, kind: input, shape index: {}]
  %s5 = inlined_call_operand.vmem [shape: f32[4,1,96], index: 5, kind: input, shape index: {}]
  %s6 = inlined_call_operand.hbm [shape: bf16[32,64], index: 6, kind: input, shape index: {}]
  %s7 = inlined_call_operand.hbm [shape: f32[1,64], index: 7, kind: input, shape index: {}]
  %s8 = inlined_call_operand.hbm [shape: bf16[64,64], index: 8, kind: input, shape index: {}]
  %s9 = inlined_call_operand.vmem [shape: f32[1,64], index: 9, kind: input, shape index: {}]
  %s10 = inlined_call_operand.hbm [shape: bf16[64,64], index: 10, kind: input, shape index: {}]
  %s11 = inlined_call_operand.vmem [shape: f32[1,64], index: 11, kind: input, shape index: {}]
  %s12 = inlined_call_operand.hbm [shape: bf16[64,256], index: 12, kind: input, shape index: {}]
  %s13 = inlined_call_operand.vmem [shape: f32[1,256], index: 13, kind: input, shape index: {}]
  %s14 = inlined_call_operand.hbm [shape: f32[8,128], index: 14, kind: output, shape index: {}]
  %s15 = sld [smem:[#allocation0]]
  $region106: #{tpu_custom_call.1} parent=0
    _
  %s17 = ssub.s32 1, %s15
  %s18 = scalar_select 0, %s17, %s15
  $region1: #{tpu_custom_call.1} parent=0
    #allocation4 [shape = 'u8[32768]{0}', space=vmem, size = 0x8000, scoped, tag = 'input window, operand 0, single buffered']
    #allocation5 [shape = 's32[1]{0}', space=sflag, size = 0x4, scoped, tag = 'scoped memory for tpu_custom_call.1']
    #allocation6 [shape = 's32[1]{0}', space=sflag, size = 0x4, scoped, tag = 'scoped memory for tpu_custom_call.1']
    #allocation7 [shape = 'u8[4096]{0}', space=vmem, size = 0x1000, scoped, tag = 'input window, operand 1, single buffered']
    #allocation8 [shape = 's32[1]{0}', space=sflag, size = 0x4, scoped, tag = 'scoped memory for tpu_custom_call.1']
    #allocation9 [shape = 'u8[32768]{0}', space=vmem, size = 0x8000, scoped, tag = 'input window, operand 2, single buffered']
    #allocation10 [shape = 'u8[32768]{0}', space=vmem, size = 0x8000, scoped, tag = 'input window, operand 3, single buffered']
    #allocation11 [shape = 's32[1]{0}', space=sflag, size = 0x4, scoped, tag = 'scoped memory for tpu_custom_call.1']
    #allocation12 [shape = 'u8[2048]{0}', space=vmem, size = 0x800, scoped, tag = 'input window, operand 4, single buffered']
    #allocation13 [shape = 'u8[8192]{0}', space=vmem, size = 0x2000, scoped, tag = 'input window, operand 6, single buffered']
    #allocation14 [shape = 's32[1]{0}', space=sflag, size = 0x4, scoped, tag = 'scoped memory for tpu_custom_call.1']
    #allocation15 [shape = 'u8[512]{0}', space=vmem, size = 0x400, scoped, tag = 'input window, operand 7, single buffered']
    #allocation16 [shape = 'u8[16384]{0}', space=vmem, size = 0x4000, scoped, tag = 'input window, operand 8, single buffered']
    #allocation17 [shape = 's32[1]{0}', space=sflag, size = 0x4, scoped, tag = 'scoped memory for tpu_custom_call.1']
    #allocation18 [shape = 'u8[16384]{0}', space=vmem, size = 0x4000, scoped, tag = 'input window, operand 10, single buffered']
    #allocation19 [shape = 'u8[32768]{0}', space=vmem, size = 0x8000, scoped, tag = 'input window, operand 12, single buffered']
    #allocation20 [shape = 's32[1]{0}', space=sflag, size = 0x4, scoped, tag = 'scoped memory for tpu_custom_call.1']
    #allocation21 [shape = 'u8[4096]{0}', space=vmem, size = 0x1000, scoped, tag = 'output window, operand 0, single buffered']
    %19 = vsyncpa [#allocation5], 0
    %20 = vsyncpa [#allocation8], 0
    %21 = vsyncpa [#allocation11], 0
    %22 = vsyncpa [#allocation14], 0
    %23 = vsyncpa [#allocation17], 0
    %24 = vsyncpa [#allocation20], 0
    %25 = vsyncpa [#allocation6], 0
    // Predicated region
    $region2: #{tpu_custom_call.1} parent=1 // pred_check
      _
    $region3: #{tpu_custom_call.1} parent=1 // pred_check_branch
      %27 = sbr.rel (0) target = $region5
    $region4: #{tpu_custom_call.1} parent=1 // pred_region
      %29 = vsyncadd [#allocation5], 0
      %s30 = sshll.u32 %s0, 4
      %s31 = int_to_ptr.hbm [resolvable:$true] %s30
      %s32 = sshll.u32 [#allocation4], 4
      %s33 = int_to_ptr.vmem [resolvable:$true] %s32
      %38 = dma.hbm_to_vmem [thread:$0]  %s31, 1024, %s33, [#allocation5], 128, 128, 8
    $region5: #{tpu_custom_call.1} parent=1 // pred_fallthru
      _
    // Predicated region
    $region6: #{tpu_custom_call.1} parent=1 // pred_check
      _
    $region7: #{tpu_custom_call.1} parent=1 // pred_check_branch
      %40 = sbr.rel (0) target = $region9
    $region8: #{tpu_custom_call.1} parent=1 // pred_region
      %42 = vsyncadd [#allocation8], 0
      %s44 = sshll.u32 %s1, 4
      %s45 = int_to_ptr.hbm [resolvable:$true] %s44
      %s46 = sshll.u32 [#allocation7], 4
      %s47 = int_to_ptr.vmem [resolvable:$true] %s46
      %49 = dma.hbm_to_vmem [thread:$0]  %s45, 128, %s47, [#allocation8]
    $region9: #{tpu_custom_call.1} parent=1 // pred_fallthru
      _
    // Predicated region
    $region10: #{tpu_custom_call.1} parent=1 // pred_check
      _
    $region11: #{tpu_custom_call.1} parent=1 // pred_check_branch
      %51 = sbr.rel (0) target = $region13
    $region12: #{tpu_custom_call.1} parent=1 // pred_region
      %53 = vsyncadd [#allocation8], 0
      %s54 = sshll.u32 %s2, 4
      %s55 = int_to_ptr.hbm [resolvable:$true] %s54
      %s56 = sshll.u32 [#allocation9], 4
      %s57 = int_to_ptr.vmem [resolvable:$true] %s56
      %62 = dma.hbm_to_vmem [thread:$0]  %s55, 1024, %s57, [#allocation8], 64, 64, 4
    $region13: #{tpu_custom_call.1} parent=1 // pred_fallthru
      _
    // Predicated region
    $region14: #{tpu_custom_call.1} parent=1 // pred_check
      _
    $region15: #{tpu_custom_call.1} parent=1 // pred_check_branch
      %64 = sbr.rel (0) target = $region17
    $region16: #{tpu_custom_call.1} parent=1 // pred_region
      %66 = vsyncadd [#allocation11], 0
      %s67 = sshll.u32 %s3, 4
      %s68 = int_to_ptr.hbm [resolvable:$true] %s67
      %s69 = sshll.u32 [#allocation10], 4
      %s70 = int_to_ptr.vmem [resolvable:$true] %s69
      %75 = dma.hbm_to_vmem [thread:$0]  %s68, 1024, %s70, [#allocation11], 64, 64, 4
    $region17: #{tpu_custom_call.1} parent=1 // pred_fallthru
      _
    // Predicated region
    $region18: #{tpu_custom_call.1} parent=1 // pred_check
      _
    $region19: #{tpu_custom_call.1} parent=1 // pred_check_branch
      %77 = sbr.rel (0) target = $region21
    $region20: #{tpu_custom_call.1} parent=1 // pred_region
      %79 = vsyncadd [#allocation11], 0
      %s80 = sshll.u32 %s4, 4
      %s81 = int_to_ptr.hbm [resolvable:$true] %s80
      %s82 = sshll.u32 [#allocation12], 4
      %s83 = int_to_ptr.vmem [resolvable:$true] %s82
      %88 = dma.hbm_to_vmem [thread:$0]  %s81, 64, %s83, [#allocation11], 16, 16, 1
    $region21: #{tpu_custom_call.1} parent=1 // pred_fallthru
      _
    // Predicated region
    $region22: #{tpu_custom_call.1} parent=1 // pred_check
      _
    $region23: #{tpu_custom_call.1} parent=1 // pred_check_branch
      %90 = sbr.rel (0) target = $region25
    $region24: #{tpu_custom_call.1} parent=1 // pred_region
      _
    $region25: #{tpu_custom_call.1} parent=1 // pred_fallthru
      _
    // Predicated region
    $region26: #{tpu_custom_call.1} parent=1 // pred_check
      _
    $region27: #{tpu_custom_call.1} parent=1 // pred_check_branch
      %92 = sbr.rel (0) target = $region29
    $region28: #{tpu_custom_call.1} parent=1 // pred_region
      %94 = vsyncadd [#allocation14], 0
      %s95 = sshll.u32 %s6, 4
      %s96 = int_to_ptr.hbm [resolvable:$true] %s95
      %s97 = sshll.u32 [#allocation13], 4
      %s98 = int_to_ptr.vmem [resolvable:$true] %s97
      %103 = dma.hbm_to_vmem [thread:$0]  %s96, 256, %s98, [#allocation14], 64, 64, 4
    $region29: #{tpu_custom_call.1} parent=1 // pred_fallthru
      _
    // Predicated region
    $region30: #{tpu_custom_call.1} parent=1 // pred_check
      _
    $region31: #{tpu_custom_call.1} parent=1 // pred_check_branch
      %105 = sbr.rel (0) target = $region33
    $region32: #{tpu_custom_call.1} parent=1 // pred_region
      %107 = vsyncadd [#allocation14], 0
      %s109 = sshll.u32 %s7, 4
      %s110 = int_to_ptr.hbm [resolvable:$true] %s109
      %s111 = sshll.u32 [#allocation15], 4
      %s112 = int_to_ptr.vmem [resolvable:$true] %s111
      %114 = dma.hbm_to_vmem [thread:$0]  %s110, 16, %s112, [#allocation14]
    $region33: #{tpu_custom_call.1} parent=1 // pred_fallthru
      _
    // Predicated region
    $region34: #{tpu_custom_call.1} parent=1 // pred_check
      _
    $region35: #{tpu_custom_call.1} parent=1 // pred_check_branch
      %116 = sbr.rel (0) target = $region37
    $region36: #{tpu_custom_call.1} parent=1 // pred_region
      %118 = vsyncadd [#allocation17], 0
      %s119 = sshll.u32 %s8, 4
      %s120 = int_to_ptr.hbm [resolvable:$true] %s119
      %s121 = sshll.u32 [#allocation16], 4
      %s122 = int_to_ptr.vmem [resolvable:$true] %s121
      %127 = dma.hbm_to_vmem [thread:$0]  %s120, 512, %s122, [#allocation17], 64, 64, 4
    $region37: #{tpu_custom_call.1} parent=1 // pred_fallthru
      _
    // Predicated region
    $region38: #{tpu_custom_call.1} parent=1 // pred_check
      _
    $region39: #{tpu_custom_call.1} parent=1 // pred_check_branch
      %129 = sbr.rel (0) target = $region41
    $region40: #{tpu_custom_call.1} parent=1 // pred_region
      _
    $region41: #{tpu_custom_call.1} parent=1 // pred_fallthru
      _
    // Predicated region
    $region42: #{tpu_custom_call.1} parent=1 // pred_check
      _
    $region43: #{tpu_custom_call.1} parent=1 // pred_check_branch
      %131 = sbr.rel (0) target = $region45
    $region44: #{tpu_custom_call.1} parent=1 // pred_region
      %133 = vsyncadd [#allocation17], 0
      %s134 = sshll.u32 %s10, 4
      %s135 = int_to_ptr.hbm [resolvable:$true] %s134
      %s136 = sshll.u32 [#allocation18], 4
      %s137 = int_to_ptr.vmem [resolvable:$true] %s136
      %142 = dma.hbm_to_vmem [thread:$0]  %s135, 512, %s137, [#allocation17], 64, 64, 4
    $region45: #{tpu_custom_call.1} parent=1 // pred_fallthru
      _
    // Predicated region
    $region46: #{tpu_custom_call.1} parent=1 // pred_check
      _
    $region47: #{tpu_custom_call.1} parent=1 // pred_check_branch
      %144 = sbr.rel (0) target = $region49
    $region48: #{tpu_custom_call.1} parent=1 // pred_region
      _
    $region49: #{tpu_custom_call.1} parent=1 // pred_fallthru
      _
    // Predicated region
    $region50: #{tpu_custom_call.1} parent=1 // pred_check
      _
    $region51: #{tpu_custom_call.1} parent=1 // pred_check_branch
      %146 = sbr.rel (0) target = $region53
    $region52: #{tpu_custom_call.1} parent=1 // pred_region
      %148 = vsyncadd [#allocation20], 0
      %s149 = sshll.u32 %s12, 4
      %s150 = int_to_ptr.hbm [resolvable:$true] %s149
      %s151 = sshll.u32 [#allocation19], 4
      %s152 = int_to_ptr.vmem [resolvable:$true] %s151
      %157 = dma.hbm_to_vmem [thread:$0]  %s150, 1024, %s152, [#allocation20], 128, 128, 8
    $region53: #{tpu_custom_call.1} parent=1 // pred_fallthru
      _
    // Predicated region
    $region54: #{tpu_custom_call.1} parent=1 // pred_check
      _
    $region55: #{tpu_custom_call.1} parent=1 // pred_check_branch
      %159 = sbr.rel (0) target = $region57
    $region56: #{tpu_custom_call.1} parent=1 // pred_region
      _
    $region57: #{tpu_custom_call.1} parent=1 // pred_fallthru
      _
    // Predicated region
    $region58: #{tpu_custom_call.1} parent=1 // pred_check
      _
    $region59: #{tpu_custom_call.1} parent=1 // pred_check_branch
      %161 = sbr.rel (0) target = $region61
    $region60: #{tpu_custom_call.1} parent=1 // pred_region
      %163 = dma.done [#allocation5], 1024
    $region61: #{tpu_custom_call.1} parent=1 // pred_fallthru
      _
    // Predicated region
    $region62: #{tpu_custom_call.1} parent=1 // pred_check
      _
    $region63: #{tpu_custom_call.1} parent=1 // pred_check_branch
      %165 = sbr.rel (0) target = $region65
    $region64: #{tpu_custom_call.1} parent=1 // pred_region
      %167 = dma.done [#allocation8], 128
    $region65: #{tpu_custom_call.1} parent=1 // pred_fallthru
      _
    // Predicated region
    $region66: #{tpu_custom_call.1} parent=1 // pred_check
      _
    $region67: #{tpu_custom_call.1} parent=1 // pred_check_branch
      %169 = sbr.rel (0) target = $region69
    $region68: #{tpu_custom_call.1} parent=1 // pred_region
      %171 = dma.done [#allocation8], 1024
    $region69: #{tpu_custom_call.1} parent=1 // pred_fallthru
      _
    // Predicated region
    $region70: #{tpu_custom_call.1} parent=1 // pred_check
      _
    $region71: #{tpu_custom_call.1} parent=1 // pred_check_branch
      %173 = sbr.rel (0) target = $region73
    $region72: #{tpu_custom_call.1} parent=1 // pred_region
      %175 = dma.done [#allocation11], 1024
    $region73: #{tpu_custom_call.1} parent=1 // pred_fallthru
      _
    // Predicated region
    $region74: #{tpu_custom_call.1} parent=1 // pred_check
      _
    $region75: #{tpu_custom_call.1} parent=1 // pred_check_branch
      %177 = sbr.rel (0) target = $region77
    $region76: #{tpu_custom_call.1} parent=1 // pred_region
      %179 = dma.done [#allocation11], 64
    $region77: #{tpu_custom_call.1} parent=1 // pred_fallthru
      _
    // Predicated region
    $region78: #{tpu_custom_call.1} parent=1 // pred_check
      _
    $region79: #{tpu_custom_call.1} parent=1 // pred_check_branch
      %181 = sbr.rel (0) target = $region81
    $region80: #{tpu_custom_call.1} parent=1 // pred_region
      %183 = dma.done [#allocation14], 256
    $region81: #{tpu_custom_call.1} parent=1 // pred_fallthru
      _
    // Predicated region
    $region82: #{tpu_custom_call.1} parent=1 // pred_check
      _
    $region83: #{tpu_custom_call.1} parent=1 // pred_check_branch
      %185 = sbr.rel (0) target = $region85
    $region84: #{tpu_custom_call.1} parent=1 // pred_region
      %187 = dma.done [#allocation14], 16
    $region85: #{tpu_custom_call.1} parent=1 // pred_fallthru
      _
    // Predicated region
    $region86: #{tpu_custom_call.1} parent=1 // pred_check
      _
    $region87: #{tpu_custom_call.1} parent=1 // pred_check_branch
      %189 = sbr.rel (0) target = $region89
    $region88: #{tpu_custom_call.1} parent=1 // pred_region
      %191 = dma.done [#allocation17], 512
    $region89: #{tpu_custom_call.1} parent=1 // pred_fallthru
      _
    // Predicated region
    $region90: #{tpu_custom_call.1} parent=1 // pred_check
      _
    $region91: #{tpu_custom_call.1} parent=1 // pred_check_branch
      %193 = sbr.rel (0) target = $region93
    $region92: #{tpu_custom_call.1} parent=1 // pred_region
      %195 = dma.done [#allocation17], 512
    $region93: #{tpu_custom_call.1} parent=1 // pred_fallthru
      _
    // Predicated region
    $region94: #{tpu_custom_call.1} parent=1 // pred_check
      _
    $region95: #{tpu_custom_call.1} parent=1 // pred_check_branch
      %197 = sbr.rel (0) target = $region97
    $region96: #{tpu_custom_call.1} parent=1 // pred_region
      %199 = dma.done [#allocation20], 1024
    $region97: #{tpu_custom_call.1} parent=1 // pred_fallthru
      _
    %v201 = vld [vmem:[#allocation4] sm:$0xff]
    %v202 = vld [vmem:[#allocation4 + $0x8] sm:$0xff]
    %v203 = vld [vmem:[#allocation4 + $0x10] sm:$0xff]
    %v204 = vld [vmem:[#allocation4 + $0x18] sm:$0xff]
    %v205 = vld [vmem:[#allocation4 + $0x20] sm:$0xff]
    %v206 = vld [vmem:[#allocation4 + $0x28] sm:$0xff]
    %v207 = vld [vmem:[#allocation4 + $0x30] sm:$0xff]
    %v208 = vld [vmem:[#allocation4 + $0x38] sm:$0xff]
    %v209 = vld [vmem:[#allocation9] sm:$0xf]
    %v210 = vld [vmem:[#allocation9 + $0x4] sm:$0xf]
    %v211 = vld [vmem:[#allocation9 + $0x8] sm:$0xf]
    %v212 = vld [vmem:[#allocation9 + $0xc] sm:$0xf]
    %v213 = vld [vmem:[#allocation10] sm:$0xf]
    %v214 = vld [vmem:[#allocation10 + $0x4] sm:$0xf]
    %v215 = vld [vmem:[#allocation10 + $0x8] sm:$0xf]
    %v216 = vld [vmem:[#allocation10 + $0xc] sm:$0xf]
    %v217 = vld [vmem:[#allocation12] sm:$0x1]
    %v218 = vld [vmem:[%s5] sm:$0x1]
    %v219 = vpack.c.bf16 %v202, %v201
    %v220 = vpack.c.bf16 %v204, %v203
    %v221 = vpack.c.bf16 %v206, %v205
    %v222 = vpack.c.bf16 %v208, %v207
    %v224 = vperm.slane %v217, 0
    %v230 = vunpack.c.l.b16 %v209
    %v231 = vunpack.c.l.b16 %v210
    %v232 = vunpack.c.l.b16 %v211
    %v233 = vunpack.c.l.b16 %v212
    %v234 = vpack.c.b16 %v231, %v230
    %v235 = vpack.c.b16 %v233, %v232
    %vm238 = vcmask 261120
    %v240 = vsel %vm238, %v219, 0
    %v243 = vsel %vm238, %v220, 0
    %v246 = vsel %vm238, %v221, 0
    %v249 = vsel %vm238, %v222, 0
    %251 = vmatpush.bf16.msra.mxu0 0
    %252 = vmatpush.bf16.msra.mxu0 0
    %253 = vmatpush.bf16.msra.mxu0 0
    %254 = vmatpush.bf16.msra.mxu0 0
    %255 = vmatpush.bf16.msra.mxu0 0
    %256 = vmatpush.bf16.msra.mxu0 0
    %257 = vmatpush.bf16.msra.mxu0 %v235
    %258 = vmatpush.bf16.msra.mxu0 %v234
    %259 = vmatmul.bf16.gmra.mxu0 %v240
    %v260 = vpop.f32.mrf.mxu0
    %v261 = vadd.f32 %v224, %v260
    %v262 = vpop.f32.mrf.mxu0
    %v263 = vadd.f32 %v224, %v262
    %264 = vmatmul.bf16.gmra.mxu0 %v243
    %v265 = vpop.f32.mrf.mxu0
    %v266 = vadd.f32 %v224, %v265
    %v267 = vpop.f32.mrf.mxu0
    %v268 = vadd.f32 %v224, %v267
    %269 = vmatmul.bf16.gmra.mxu0 %v246
    %v270 = vpop.f32.mrf.mxu0
    %v271 = vadd.f32 %v224, %v270
    %v272 = vpop.f32.mrf.mxu0
    %v273 = vadd.f32 %v224, %v272
    %274 = vmatmul.bf16.gmra.mxu0 %v249
    %v275 = vpop.f32.mrf.mxu0
    %v276 = vadd.f32 %v224, %v275
    %v277 = vpop.f32.mrf.mxu0
    %v278 = vadd.f32 %v224, %v277
    %279 = vdwg.mxu0
    %vm280 = vcmask 785408
    %281 = vst.msk [vmem:[#allocation3] sm:$0xff] %vm280, %v261
    %282 = vst.msk [vmem:[#allocation3 + $0x8] sm:$0xff] %vm280, %v263
    %283 = vst.msk [vmem:[#allocation3 + $0x10] sm:$0xff] %vm280, %v266
    %284 = vst.msk [vmem:[#allocation3 + $0x18] sm:$0xff] %vm280, %v268
    %285 = vst.msk [vmem:[#allocation3 + $0x20] sm:$0xff] %vm280, %v271
    %286 = vst.msk [vmem:[#allocation3 + $0x28] sm:$0xff] %vm280, %v273
    %287 = vst.msk [vmem:[#allocation3 + $0x30] sm:$0xff] %vm280, %v276
    %288 = vst.msk [vmem:[#allocation3 + $0x38] sm:$0xff] %vm280, %v278
    %v290 = vperm.slane %v218, 0
    %v292 = vld [vmem:[#allocation3] sm:$0xff]
    %v293 = vadd.f32 %v292, %v290
    %v294 = vxor.u32 %v293, 2147483648
    %v295 = vmul.f32 %v294, 1.442695
    %v296 = vpow.pop %v295
    %v297 = vadd.f32 %v296, 1.0
    %v298 = vrcp.pop %v297
    %v299 = vmul.f32 %v297, %v298
    %v300 = vsub.f32 1.0, %v299
    %v301 = vmul.f32 %v298, %v300
    %v302 = vadd.f32 %v298, %v301
    %vm303 = vweird.f32 %v297
    %vm304 = vweird.f32 %v298
    %vm305 = vmor %vm303, %vm304
    %v306 = vsel %vm305, %v298, %v302
    %v307 = vand.u32 2147483647, %v297
    %vm308 = vcmp.eq.f32.partialorder %v307, 8.507059e+37
    %v309 = vand.u32 %v297, 2147483648
    %v310 = vor.u32 1.1754944e-38, %v309
    %v311 = vsel %vm308, %v310, %v306
    %v312 = vmul.f32 1.0, %v311
    %313 = vrot.lane.b32.xlu0 %v290, 64
    %v314 = vpop.permute.xlu0 %313
    %v316 = vmul.f32 %v312, %v314
    %318 = vrot.lane.b32.xlu0 %v316, 64
    %v319 = vpop.permute.xlu0 %318
    %v321 = vadd.f32 %v292, %v319
    %v322 = vtanh.pop %v321
    %v323 = vsub.f32 1.0, %v312
    %325 = vrot.lane.b32.xlu0 %v322, 96
    %v326 = vpop.permute.xlu0 %325
    %v328 = vmul.f32 %v323, %v326
    %330 = vrot.lane.b32.xlu0 %v328, 96
    %v331 = vpop.permute.xlu0 %330
    %333 = vst.msk [vmem:[#allocation2] sm:$0xff] %vm238, %v331
    %s334 = scalar_lea.vmem [#allocation3], 8
    %v335 = vld [vmem:[%s334] sm:$0xff]
    %v336 = vpack.c.bf16 %v328, %v328
    %338 = vrot.lane.b32.xlu0 %v336, 96
    %v339 = vpop.permute.xlu0 %338
    %v344 = vunpack.c.l.b16 %v213
    %v345 = vunpack.c.l.b16 %v214
    %v346 = vunpack.c.l.b16 %v215
    %v347 = vunpack.c.l.b16 %v216
    %v348 = vpack.c.b16 %v345, %v344
    %v349 = vpack.c.b16 %v347, %v346
    %v353 = vsel %vm238, %v339, 0
    %355 = vmatpush.bf16.msra.mxu0 0
    %356 = vmatpush.bf16.msra.mxu0 0
    %357 = vmatpush.bf16.msra.mxu0 0
    %358 = vmatpush.bf16.msra.mxu0 0
    %359 = vmatpush.bf16.msra.mxu0 0
    %360 = vmatpush.bf16.msra.mxu0 0
    %361 = vmatpush.bf16.msra.mxu0 %v349
    %362 = vmatpush.bf16.msra.mxu0 %v348
    %363 = vmatmul.bf16.gmra.mxu0 %v353
    %v364 = vpop.f32.mrf.mxu0
    %v365 = vadd.f32 %v290, %v364
    %v366 = vpop.f32.mrf.mxu0
    %367 = vdwg.mxu0
    %v368 = vadd.f32 %v335, %v365
    %v369 = vxor.u32 %v368, 2147483648
    %v370 = vmul.f32 %v369, 1.442695
    %v371 = vpow.pop %v370
    %v372 = vadd.f32 %v371, 1.0
    %v373 = vrcp.pop %v372
    %v374 = vmul.f32 %v372, %v373
    %v375 = vsub.f32 1.0, %v374
    %v376 = vmul.f32 %v373, %v375
    %v377 = vadd.f32 %v373, %v376
    %vm378 = vweird.f32 %v372
    %vm379 = vweird.f32 %v373
    %vm380 = vmor %vm378, %vm379
    %v381 = vsel %vm380, %v373, %v377
    %v382 = vand.u32 2147483647, %v372
    %vm383 = vcmp.eq.f32.partialorder %v382, 8.507059e+37
    %v384 = vand.u32 %v372, 2147483648
    %v385 = vor.u32 1.1754944e-38, %v384
    %v386 = vsel %vm383, %v385, %v381
    %v387 = vmul.f32 1.0, %v386
    %389 = vrot.lane.b32.xlu0 %v365, 64
    %v390 = vpop.permute.xlu0 %389
    %v392 = vmul.f32 %v387, %v390
    %394 = vrot.lane.b32.xlu0 %v392, 64
    %v395 = vpop.permute.xlu0 %394
    %v397 = vadd.f32 %v335, %v395
    %v398 = vtanh.pop %v397
    %v399 = vsub.f32 1.0, %v387
    %401 = vrot.lane.b32.xlu0 %v398, 96
    %v402 = vpop.permute.xlu0 %401
    %v404 = vmul.f32 %v399, %v402
    %v405 = vmul.f32 %v387, %v328
    %v406 = vadd.f32 %v404, %v405
    %408 = vrot.lane.b32.xlu0 %v406, 96
    %v409 = vpop.permute.xlu0 %408
    %s411 = scalar_lea.vmem [#allocation2], 8
    %412 = vst.msk [vmem:[%s411] sm:$0xff] %vm238, %v409
    %s413 = scalar_lea.vmem [#allocation3], 16
    %v414 = vld [vmem:[%s413] sm:$0xff]
    %v415 = vpack.c.bf16 %v406, %v406
    %417 = vrot.lane.b32.xlu0 %v415, 96
    %v418 = vpop.permute.xlu0 %417
    %v420 = vsel %vm238, %v418, 0
    %422 = vmatpush.bf16.msra.mxu0 0
    %423 = vmatpush.bf16.msra.mxu0 0
    %424 = vmatpush.bf16.msra.mxu0 0
    %425 = vmatpush.bf16.msra.mxu0 0
    %426 = vmatpush.bf16.msra.mxu0 0
    %427 = vmatpush.bf16.msra.mxu0 0
    %428 = vmatpush.bf16.msra.mxu0 %v349
    %429 = vmatpush.bf16.msra.mxu0 %v348
    %430 = vmatmul.bf16.gmra.mxu0 %v420
    %v431 = vpop.f32.mrf.mxu0
    %v432 = vadd.f32 %v290, %v431
    %v433 = vpop.f32.mrf.mxu0
    %434 = vdwg.mxu0
    %v435 = vadd.f32 %v414, %v432
    %v436 = vxor.u32 %v435, 2147483648
    %v437 = vmul.f32 %v436, 1.442695
    %v438 = vpow.pop %v437
    %v439 = vadd.f32 %v438, 1.0
    %v440 = vrcp.pop %v439
    %v441 = vmul.f32 %v439, %v440
    %v442 = vsub.f32 1.0, %v441
    %v443 = vmul.f32 %v440, %v442
    %v444 = vadd.f32 %v440, %v443
    %vm445 = vweird.f32 %v439
    %vm446 = vweird.f32 %v440
    %vm447 = vmor %vm445, %vm446
    %v448 = vsel %vm447, %v440, %v444
    %v449 = vand.u32 2147483647, %v439
    %vm450 = vcmp.eq.f32.partialorder %v449, 8.507059e+37
    %v451 = vand.u32 %v439, 2147483648
    %v452 = vor.u32 1.1754944e-38, %v451
    %v453 = vsel %vm450, %v452, %v448
    %v454 = vmul.f32 1.0, %v453
    %456 = vrot.lane.b32.xlu0 %v432, 64
    %v457 = vpop.permute.xlu0 %456
    %v459 = vmul.f32 %v454, %v457
    %461 = vrot.lane.b32.xlu0 %v459, 64
    %v462 = vpop.permute.xlu0 %461
    %v464 = vadd.f32 %v414, %v462
    %v465 = vtanh.pop %v464
    %v466 = vsub.f32 1.0, %v454
    %468 = vrot.lane.b32.xlu0 %v465, 96
    %v469 = vpop.permute.xlu0 %468
    %v471 = vmul.f32 %v466, %v469
    %v472 = vmul.f32 %v454, %v406
    %v473 = vadd.f32 %v471, %v472
    %475 = vrot.lane.b32.xlu0 %v473, 96
    %v476 = vpop.permute.xlu0 %475
    %s478 = scalar_lea.vmem [#allocation2], 16
    %479 = vst.msk [vmem:[%s478] sm:$0xff] %vm238, %v476
    %s480 = scalar_lea.vmem [#allocation3], 24
    %v481 = vld [vmem:[%s480] sm:$0xff]
    %v482 = vpack.c.bf16 %v473, %v473
    %484 = vrot.lane.b32.xlu0 %v482, 96
    %v485 = vpop.permute.xlu0 %484
    %v487 = vsel %vm238, %v485, 0
    %489 = vmatpush.bf16.msra.mxu0 0
    %490 = vmatpush.bf16.msra.mxu0 0
    %491 = vmatpush.bf16.msra.mxu0 0
    %492 = vmatpush.bf16.msra.mxu0 0
    %493 = vmatpush.bf16.msra.mxu0 0
    %494 = vmatpush.bf16.msra.mxu0 0
    %495 = vmatpush.bf16.msra.mxu0 %v349
    %496 = vmatpush.bf16.msra.mxu0 %v348
    %497 = vmatmul.bf16.gmra.mxu0 %v487
    %v498 = vpop.f32.mrf.mxu0
    %v499 = vadd.f32 %v290, %v498
    %v500 = vpop.f32.mrf.mxu0
    %501 = vdwg.mxu0
    %v502 = vadd.f32 %v481, %v499
    %v503 = vxor.u32 %v502, 2147483648
    %v504 = vmul.f32 %v503, 1.442695
    %v505 = vpow.pop %v504
    %v506 = vadd.f32 %v505, 1.0
    %v507 = vrcp.pop %v506
    %v508 = vmul.f32 %v506, %v507
    %v509 = vsub.f32 1.0, %v508
    %v510 = vmul.f32 %v507, %v509
    %v511 = vadd.f32 %v507, %v510
    %vm512 = vweird.f32 %v506
    %vm513 = vweird.f32 %v507
    %vm514 = vmor %vm512, %vm513
    %v515 = vsel %vm514, %v507, %v511
    %v516 = vand.u32 2147483647, %v506
    %vm517 = vcmp.eq.f32.partialorder %v516, 8.507059e+37
    %v518 = vand.u32 %v506, 2147483648
    %v519 = vor.u32 1.1754944e-38, %v518
    %v520 = vsel %vm517, %v519, %v515
    %v521 = vmul.f32 1.0, %v520
    %523 = vrot.lane.b32.xlu0 %v499, 64
    %v524 = vpop.permute.xlu0 %523
    %v526 = vmul.f32 %v521, %v524
    %528 = vrot.lane.b32.xlu0 %v526, 64
    %v529 = vpop.permute.xlu0 %528
    %v531 = vadd.f32 %v481, %v529
    %v532 = vtanh.pop %v531
    %v533 = vsub.f32 1.0, %v521
    %535 = vrot.lane.b32.xlu0 %v532, 96
    %v536 = vpop.permute.xlu0 %535
    %v538 = vmul.f32 %v533, %v536
    %v539 = vmul.f32 %v521, %v473
    %v540 = vadd.f32 %v538, %v539
    %542 = vrot.lane.b32.xlu0 %v540, 96
    %v543 = vpop.permute.xlu0 %542
    %s545 = scalar_lea.vmem [#allocation2], 24
    %546 = vst.msk [vmem:[%s545] sm:$0xff] %vm238, %v543
    %s547 = scalar_lea.vmem [#allocation3], 32
    %v548 = vld [vmem:[%s547] sm:$0xff]
    %v549 = vpack.c.bf16 %v540, %v540
    %551 = vrot.lane.b32.xlu0 %v549, 96
    %v552 = vpop.permute.xlu0 %551
    %v554 = vsel %vm238, %v552, 0
    %556 = vmatpush.bf16.msra.mxu0 0
    %557 = vmatpush.bf16.msra.mxu0 0
    %558 = vmatpush.bf16.msra.mxu0 0
    %559 = vmatpush.bf16.msra.mxu0 0
    %560 = vmatpush.bf16.msra.mxu0 0
    %561 = vmatpush.bf16.msra.mxu0 0
    %562 = vmatpush.bf16.msra.mxu0 %v349
    %563 = vmatpush.bf16.msra.mxu0 %v348
    %564 = vmatmul.bf16.gmra.mxu0 %v554
    %v565 = vpop.f32.mrf.mxu0
    %v566 = vadd.f32 %v290, %v565
    %v567 = vpop.f32.mrf.mxu0
    %568 = vdwg.mxu0
    %v569 = vadd.f32 %v548, %v566
    %v570 = vxor.u32 %v569, 2147483648
    %v571 = vmul.f32 %v570, 1.442695
    %v572 = vpow.pop %v571
    %v573 = vadd.f32 %v572, 1.0
    %v574 = vrcp.pop %v573
    %v575 = vmul.f32 %v573, %v574
    %v576 = vsub.f32 1.0, %v575
    %v577 = vmul.f32 %v574, %v576
    %v578 = vadd.f32 %v574, %v577
    %vm579 = vweird.f32 %v573
    %vm580 = vweird.f32 %v574
    %vm581 = vmor %vm579, %vm580
    %v582 = vsel %vm581, %v574, %v578
    %v583 = vand.u32 2147483647, %v573
    %vm584 = vcmp.eq.f32.partialorder %v583, 8.507059e+37
    %v585 = vand.u32 %v573, 2147483648
    %v586 = vor.u32 1.1754944e-38, %v585
    %v587 = vsel %vm584, %v586, %v582
    %v588 = vmul.f32 1.0, %v587
    %590 = vrot.lane.b32.xlu0 %v566, 64
    %v591 = vpop.permute.xlu0 %590
    %v593 = vmul.f32 %v588, %v591
    %595 = vrot.lane.b32.xlu0 %v593, 64
    %v596 = vpop.permute.xlu0 %595
    %v598 = vadd.f32 %v548, %v596
    %v599 = vtanh.pop %v598
    %v600 = vsub.f32 1.0, %v588
    %602 = vrot.lane.b32.xlu0 %v599, 96
    %v603 = vpop.permute.xlu0 %602
    %v605 = vmul.f32 %v600, %v603
    %v606 = vmul.f32 %v588, %v540
    %v607 = vadd.f32 %v605, %v606
    %609 = vrot.lane.b32.xlu0 %v607, 96
    %v610 = vpop.permute.xlu0 %609
    %s612 = scalar_lea.vmem [#allocation2], 32
    %613 = vst.msk [vmem:[%s612] sm:$0xff] %vm238, %v610
    %s614 = scalar_lea.vmem [#allocation3], 40
    %v615 = vld [vmem:[%s614] sm:$0xff]
    %v616 = vpack.c.bf16 %v607, %v607
    %618 = vrot.lane.b32.xlu0 %v616, 96
    %v619 = vpop.permute.xlu0 %618
    %v621 = vsel %vm238, %v619, 0
    %623 = vmatpush.bf16.msra.mxu0 0
    %624 = vmatpush.bf16.msra.mxu0 0
    %625 = vmatpush.bf16.msra.mxu0 0
    %626 = vmatpush.bf16.msra.mxu0 0
    %627 = vmatpush.bf16.msra.mxu0 0
    %628 = vmatpush.bf16.msra.mxu0 0
    %629 = vmatpush.bf16.msra.mxu0 %v349
    %630 = vmatpush.bf16.msra.mxu0 %v348
    %631 = vmatmul.bf16.gmra.mxu0 %v621
    %v632 = vpop.f32.mrf.mxu0
    %v633 = vadd.f32 %v290, %v632
    %v634 = vpop.f32.mrf.mxu0
    %635 = vdwg.mxu0
    %v636 = vadd.f32 %v615, %v633
    %v637 = vxor.u32 %v636, 2147483648
    %v638 = vmul.f32 %v637, 1.442695
    %v639 = vpow.pop %v638
    %v640 = vadd.f32 %v639, 1.0
    %v641 = vrcp.pop %v640
    %v642 = vmul.f32 %v640, %v641
    %v643 = vsub.f32 1.0, %v642
    %v644 = vmul.f32 %v641, %v643
    %v645 = vadd.f32 %v641, %v644
    %vm646 = vweird.f32 %v640
    %vm647 = vweird.f32 %v641
    %vm648 = vmor %vm646, %vm647
    %v649 = vsel %vm648, %v641, %v645
    %v650 = vand.u32 2147483647, %v640
    %vm651 = vcmp.eq.f32.partialorder %v650, 8.507059e+37
    %v652 = vand.u32 %v640, 2147483648
    %v653 = vor.u32 1.1754944e-38, %v652
    %v654 = vsel %vm651, %v653, %v649
    %v655 = vmul.f32 1.0, %v654
    %657 = vrot.lane.b32.xlu0 %v633, 64
    %v658 = vpop.permute.xlu0 %657
    %v660 = vmul.f32 %v655, %v658
    %662 = vrot.lane.b32.xlu0 %v660, 64
    %v663 = vpop.permute.xlu0 %662
    %v665 = vadd.f32 %v615, %v663
    %v666 = vtanh.pop %v665
    %v667 = vsub.f32 1.0, %v655
    %669 = vrot.lane.b32.xlu0 %v666, 96
    %v670 = vpop.permute.xlu0 %669
    %v672 = vmul.f32 %v667, %v670
    %v673 = vmul.f32 %v655, %v607
    %v674 = vadd.f32 %v672, %v673
    %676 = vrot.lane.b32.xlu0 %v674, 96
    %v677 = vpop.permute.xlu0 %676
    %s679 = scalar_lea.vmem [#allocation2], 40
    %680 = vst.msk [vmem:[%s679] sm:$0xff] %vm238, %v677
    %s681 = scalar_lea.vmem [#allocation3], 48
    %v682 = vld [vmem:[%s681] sm:$0xff]
    %v683 = vpack.c.bf16 %v674, %v674
    %685 = vrot.lane.b32.xlu0 %v683, 96
    %v686 = vpop.permute.xlu0 %685
    %v688 = vsel %vm238, %v686, 0
    %690 = vmatpush.bf16.msra.mxu0 0
    %691 = vmatpush.bf16.msra.mxu0 0
    %692 = vmatpush.bf16.msra.mxu0 0
    %693 = vmatpush.bf16.msra.mxu0 0
    %694 = vmatpush.bf16.msra.mxu0 0
    %695 = vmatpush.bf16.msra.mxu0 0
    %696 = vmatpush.bf16.msra.mxu0 %v349
    %697 = vmatpush.bf16.msra.mxu0 %v348
    %698 = vmatmul.bf16.gmra.mxu0 %v688
    %v699 = vpop.f32.mrf.mxu0
    %v700 = vadd.f32 %v290, %v699
    %v701 = vpop.f32.mrf.mxu0
    %702 = vdwg.mxu0
    %v703 = vadd.f32 %v682, %v700
    %v704 = vxor.u32 %v703, 2147483648
    %v705 = vmul.f32 %v704, 1.442695
    %v706 = vpow.pop %v705
    %v707 = vadd.f32 %v706, 1.0
    %v708 = vrcp.pop %v707
    %v709 = vmul.f32 %v707, %v708
    %v710 = vsub.f32 1.0, %v709
    %v711 = vmul.f32 %v708, %v710
    %v712 = vadd.f32 %v708, %v711
    %vm713 = vweird.f32 %v707
    %vm714 = vweird.f32 %v708
    %vm715 = vmor %vm713, %vm714
    %v716 = vsel %vm715, %v708, %v712
    %v717 = vand.u32 2147483647, %v707
    %vm718 = vcmp.eq.f32.partialorder %v717, 8.507059e+37
    %v719 = vand.u32 %v707, 2147483648
    %v720 = vor.u32 1.1754944e-38, %v719
    %v721 = vsel %vm718, %v720, %v716
    %v722 = vmul.f32 1.0, %v721
    %724 = vrot.lane.b32.xlu0 %v700, 64
    %v725 = vpop.permute.xlu0 %724
    %v727 = vmul.f32 %v722, %v725
    %729 = vrot.lane.b32.xlu0 %v727, 64
    %v730 = vpop.permute.xlu0 %729
    %v732 = vadd.f32 %v682, %v730
    %v733 = vtanh.pop %v732
    %v734 = vsub.f32 1.0, %v722
    %736 = vrot.lane.b32.xlu0 %v733, 96
    %v737 = vpop.permute.xlu0 %736
    %v739 = vmul.f32 %v734, %v737
    %v740 = vmul.f32 %v722, %v674
    %v741 = vadd.f32 %v739, %v740
    %743 = vrot.lane.b32.xlu0 %v741, 96
    %v744 = vpop.permute.xlu0 %743
    %s746 = scalar_lea.vmem [#allocation2], 48
    %747 = vst.msk [vmem:[%s746] sm:$0xff] %vm238, %v744
    %s748 = scalar_lea.vmem [#allocation3], 56
    %v749 = vld [vmem:[%s748] sm:$0xff]
    %v750 = vpack.c.bf16 %v741, %v741
    %752 = vrot.lane.b32.xlu0 %v750, 96
    %v753 = vpop.permute.xlu0 %752
    %v755 = vsel %vm238, %v753, 0
    %757 = vmatpush.bf16.msra.mxu0 0
    %758 = vmatpush.bf16.msra.mxu0 0
    %759 = vmatpush.bf16.msra.mxu0 0
    %760 = vmatpush.bf16.msra.mxu0 0
    %761 = vmatpush.bf16.msra.mxu0 0
    %762 = vmatpush.bf16.msra.mxu0 0
    %763 = vmatpush.bf16.msra.mxu0 %v349
    %764 = vmatpush.bf16.msra.mxu0 %v348
    %765 = vmatmul.bf16.gmra.mxu0 %v755
    %v766 = vpop.f32.mrf.mxu0
    %v767 = vadd.f32 %v290, %v766
    %v768 = vpop.f32.mrf.mxu0
    %769 = vdwg.mxu0
    %v770 = vadd.f32 %v749, %v767
    %v771 = vxor.u32 %v770, 2147483648
    %v772 = vmul.f32 %v771, 1.442695
    %v773 = vpow.pop %v772
    %v774 = vadd.f32 %v773, 1.0
    %v775 = vrcp.pop %v774
    %v776 = vmul.f32 %v774, %v775
    %v777 = vsub.f32 1.0, %v776
    %v778 = vmul.f32 %v775, %v777
    %v779 = vadd.f32 %v775, %v778
    %vm780 = vweird.f32 %v774
    %vm781 = vweird.f32 %v775
    %vm782 = vmor %vm780, %vm781
    %v783 = vsel %vm782, %v775, %v779
    %v784 = vand.u32 2147483647, %v774
    %vm785 = vcmp.eq.f32.partialorder %v784, 8.507059e+37
    %v786 = vand.u32 %v774, 2147483648
    %v787 = vor.u32 1.1754944e-38, %v786
    %v788 = vsel %vm785, %v787, %v783
    %v789 = vmul.f32 1.0, %v788
    %791 = vrot.lane.b32.xlu0 %v767, 64
    %v792 = vpop.permute.xlu0 %791
    %v794 = vmul.f32 %v789, %v792
    %796 = vrot.lane.b32.xlu0 %v794, 64
    %v797 = vpop.permute.xlu0 %796
    %v799 = vadd.f32 %v749, %v797
    %v800 = vtanh.pop %v799
    %v801 = vsub.f32 1.0, %v789
    %803 = vrot.lane.b32.xlu0 %v800, 96
    %v804 = vpop.permute.xlu0 %803
    %v806 = vmul.f32 %v801, %v804
    %v807 = vmul.f32 %v789, %v741
    %v808 = vadd.f32 %v806, %v807
    %810 = vrot.lane.b32.xlu0 %v808, 96
    %v811 = vpop.permute.xlu0 %810
    %s813 = scalar_lea.vmem [#allocation2], 56
    %814 = vst.msk [vmem:[%s813] sm:$0xff] %vm238, %v811
    %v815 = vld [vmem:[#allocation2] sm:$0xff]
    %v816 = vld [vmem:[#allocation2 + $0x8] sm:$0xff]
    %v817 = vld [vmem:[#allocation2 + $0x10] sm:$0xff]
    %v818 = vld [vmem:[#allocation2 + $0x18] sm:$0xff]
    %v819 = vld [vmem:[#allocation2 + $0x20] sm:$0xff]
    %v820 = vld [vmem:[#allocation2 + $0x28] sm:$0xff]
    %v821 = vld [vmem:[#allocation2 + $0x30] sm:$0xff]
    %v822 = vld [vmem:[#allocation2 + $0x38] sm:$0xff]
    %s823 = scalar_lea.vmem [#allocation9], 16
    %v824 = vld [vmem:[%s823] sm:$0xf]
    %v825 = vld [vmem:[%s823 + $0x4] sm:$0xf]
    %v826 = vld [vmem:[%s823 + $0x8] sm:$0xf]
    %v827 = vld [vmem:[%s823 + $0xc] sm:$0xf]
    %s828 = scalar_lea.vmem [#allocation10], 16
    %v829 = vld [vmem:[%s828] sm:$0xf]
    %v830 = vld [vmem:[%s828 + $0x4] sm:$0xf]
    %v831 = vld [vmem:[%s828 + $0x8] sm:$0xf]
    %v832 = vld [vmem:[%s828 + $0xc] sm:$0xf]
    %s833 = scalar_lea.vmem [#allocation12], 1
    %v834 = vld [vmem:[%s833] sm:$0x1]
    %s835 = scalar_lea.vmem %s5, 1
    %v836 = vld [vmem:[%s835] sm:$0x1]
    %v837 = vpack.c.bf16 %v816, %v815
    %v838 = vpack.c.bf16 %v818, %v817
    %v839 = vpack.c.bf16 %v820, %v819
    %v840 = vpack.c.bf16 %v822, %v821
    %v842 = vperm.slane %v834, 0
    %v848 = vunpack.c.l.b16 %v824
    %v849 = vunpack.c.l.b16 %v825
    %v850 = vunpack.c.l.b16 %v826
    %v851 = vunpack.c.l.b16 %v827
    %v852 = vpack.c.b16 %v849, %v848
    %v853 = vpack.c.b16 %v851, %v850
    %v857 = vsel %vm238, %v837, 0
    %v860 = vsel %vm238, %v838, 0
    %v863 = vsel %vm238, %v839, 0
    %v866 = vsel %vm238, %v840, 0
    %868 = vmatpush.bf16.msra.mxu0 0
    %869 = vmatpush.bf16.msra.mxu0 0
    %870 = vmatpush.bf16.msra.mxu0 0
    %871 = vmatpush.bf16.msra.mxu0 0
    %872 = vmatpush.bf16.msra.mxu0 0
    %873 = vmatpush.bf16.msra.mxu0 0
    %874 = vmatpush.bf16.msra.mxu0 %v853
    %875 = vmatpush.bf16.msra.mxu0 %v852
    %876 = vmatmul.bf16.gmra.mxu0 %v857
    %v877 = vpop.f32.mrf.mxu0
    %v878 = vadd.f32 %v842, %v877
    %v879 = vpop.f32.mrf.mxu0
    %v880 = vadd.f32 %v842, %v879
    %881 = vmatmul.bf16.gmra.mxu0 %v860
    %v882 = vpop.f32.mrf.mxu0
    %v883 = vadd.f32 %v842, %v882
    %v884 = vpop.f32.mrf.mxu0
    %v885 = vadd.f32 %v842, %v884
    %886 = vmatmul.bf16.gmra.mxu0 %v863
    %v887 = vpop.f32.mrf.mxu0
    %v888 = vadd.f32 %v842, %v887
    %v889 = vpop.f32.mrf.mxu0
    %v890 = vadd.f32 %v842, %v889
    %891 = vmatmul.bf16.gmra.mxu0 %v866
    %v892 = vpop.f32.mrf.mxu0
    %v893 = vadd.f32 %v842, %v892
    %v894 = vpop.f32.mrf.mxu0
    %v895 = vadd.f32 %v842, %v894
    %896 = vdwg.mxu0
    %897 = vst.msk [vmem:[#allocation3] sm:$0xff] %vm280, %v878
    %898 = vst.msk [vmem:[#allocation3 + $0x8] sm:$0xff] %vm280, %v880
    %899 = vst.msk [vmem:[#allocation3 + $0x10] sm:$0xff] %vm280, %v883
    %900 = vst.msk [vmem:[#allocation3 + $0x18] sm:$0xff] %vm280, %v885
    %901 = vst.msk [vmem:[#allocation3 + $0x20] sm:$0xff] %vm280, %v888
    %902 = vst.msk [vmem:[#allocation3 + $0x28] sm:$0xff] %vm280, %v890
    %903 = vst.msk [vmem:[#allocation3 + $0x30] sm:$0xff] %vm280, %v893
    %904 = vst.msk [vmem:[#allocation3 + $0x38] sm:$0xff] %vm280, %v895
    %v906 = vperm.slane %v836, 0
    %v908 = vld [vmem:[#allocation3] sm:$0xff]
    %v909 = vadd.f32 %v908, %v906
    %v910 = vxor.u32 %v909, 2147483648
    %v911 = vmul.f32 %v910, 1.442695
    %v912 = vpow.pop %v911
    %v913 = vadd.f32 %v912, 1.0
    %v914 = vrcp.pop %v913
    %v915 = vmul.f32 %v913, %v914
    %v916 = vsub.f32 1.0, %v915
    %v917 = vmul.f32 %v914, %v916
    %v918 = vadd.f32 %v914, %v917
    %vm919 = vweird.f32 %v913
    %vm920 = vweird.f32 %v914
    %vm921 = vmor %vm919, %vm920
    %v922 = vsel %vm921, %v914, %v918
    %v923 = vand.u32 2147483647, %v913
    %vm924 = vcmp.eq.f32.partialorder %v923, 8.507059e+37
    %v925 = vand.u32 %v913, 2147483648
    %v926 = vor.u32 1.1754944e-38, %v925
    %v927 = vsel %vm924, %v926, %v922
    %v928 = vmul.f32 1.0, %v927
    %929 = vrot.lane.b32.xlu0 %v906, 64
    %v930 = vpop.permute.xlu0 %929
    %v932 = vmul.f32 %v928, %v930
    %934 = vrot.lane.b32.xlu0 %v932, 64
    %v935 = vpop.permute.xlu0 %934
    %v937 = vadd.f32 %v908, %v935
    %v938 = vtanh.pop %v937
    %v939 = vsub.f32 1.0, %v928
    %941 = vrot.lane.b32.xlu0 %v938, 96
    %v942 = vpop.permute.xlu0 %941
    %v944 = vmul.f32 %v939, %v942
    %946 = vrot.lane.b32.xlu0 %v944, 96
    %v947 = vpop.permute.xlu0 %946
    %949 = vst.msk [vmem:[#allocation2] sm:$0xff] %vm238, %v947
    %v950 = vld [vmem:[%s334] sm:$0xff]
    %v951 = vpack.c.bf16 %v944, %v944
    %953 = vrot.lane.b32.xlu0 %v951, 96
    %v954 = vpop.permute.xlu0 %953
    %v959 = vunpack.c.l.b16 %v829
    %v960 = vunpack.c.l.b16 %v830
    %v961 = vunpack.c.l.b16 %v831
    %v962 = vunpack.c.l.b16 %v832
    %v963 = vpack.c.b16 %v960, %v959
    %v964 = vpack.c.b16 %v962, %v961
    %v968 = vsel %vm238, %v954, 0
    %970 = vmatpush.bf16.msra.mxu0 0
    %971 = vmatpush.bf16.msra.mxu0 0
    %972 = vmatpush.bf16.msra.mxu0 0
    %973 = vmatpush.bf16.msra.mxu0 0
    %974 = vmatpush.bf16.msra.mxu0 0
    %975 = vmatpush.bf16.msra.mxu0 0
    %976 = vmatpush.bf16.msra.mxu0 %v964
    %977 = vmatpush.bf16.msra.mxu0 %v963
    %978 = vmatmul.bf16.gmra.mxu0 %v968
    %v979 = vpop.f32.mrf.mxu0
    %v980 = vadd.f32 %v906, %v979
    %v981 = vpop.f32.mrf.mxu0
    %982 = vdwg.mxu0
    %v983 = vadd.f32 %v950, %v980
    %v984 = vxor.u32 %v983, 2147483648
    %v985 = vmul.f32 %v984, 1.442695
    %v986 = vpow.pop %v985
    %v987 = vadd.f32 %v986, 1.0
    %v988 = vrcp.pop %v987
    %v989 = vmul.f32 %v987, %v988
    %v990 = vsub.f32 1.0, %v989
    %v991 = vmul.f32 %v988, %v990
    %v992 = vadd.f32 %v988, %v991
    %vm993 = vweird.f32 %v987
    %vm994 = vweird.f32 %v988
    %vm995 = vmor %vm993, %vm994
    %v996 = vsel %vm995, %v988, %v992
    %v997 = vand.u32 2147483647, %v987
    %vm998 = vcmp.eq.f32.partialorder %v997, 8.507059e+37
    %v999 = vand.u32 %v987, 2147483648
    %v1000 = vor.u32 1.1754944e-38, %v999
    %v1001 = vsel %vm998, %v1000, %v996
    %v1002 = vmul.f32 1.0, %v1001
    %1004 = vrot.lane.b32.xlu0 %v980, 64
    %v1005 = vpop.permute.xlu0 %1004
    %v1007 = vmul.f32 %v1002, %v1005
    %1009 = vrot.lane.b32.xlu0 %v1007, 64
    %v1010 = vpop.permute.xlu0 %1009
    %v1012 = vadd.f32 %v950, %v1010
    %v1013 = vtanh.pop %v1012
    %v1014 = vsub.f32 1.0, %v1002
    %1016 = vrot.lane.b32.xlu0 %v1013, 96
    %v1017 = vpop.permute.xlu0 %1016
    %v1019 = vmul.f32 %v1014, %v1017
    %v1020 = vmul.f32 %v1002, %v944
    %v1021 = vadd.f32 %v1019, %v1020
    %1023 = vrot.lane.b32.xlu0 %v1021, 96
    %v1024 = vpop.permute.xlu0 %1023
    %1026 = vst.msk [vmem:[%s411] sm:$0xff] %vm238, %v1024
    %v1027 = vld [vmem:[%s413] sm:$0xff]
    %v1028 = vpack.c.bf16 %v1021, %v1021
    %1030 = vrot.lane.b32.xlu0 %v1028, 96
    %v1031 = vpop.permute.xlu0 %1030
    %v1033 = vsel %vm238, %v1031, 0
    %1035 = vmatpush.bf16.msra.mxu0 0
    %1036 = vmatpush.bf16.msra.mxu0 0
    %1037 = vmatpush.bf16.msra.mxu0 0
    %1038 = vmatpush.bf16.msra.mxu0 0
    %1039 = vmatpush.bf16.msra.mxu0 0
    %1040 = vmatpush.bf16.msra.mxu0 0
    %1041 = vmatpush.bf16.msra.mxu0 %v964
    %1042 = vmatpush.bf16.msra.mxu0 %v963
    %1043 = vmatmul.bf16.gmra.mxu0 %v1033
    %v1044 = vpop.f32.mrf.mxu0
    %v1045 = vadd.f32 %v906, %v1044
    %v1046 = vpop.f32.mrf.mxu0
    %1047 = vdwg.mxu0
    %v1048 = vadd.f32 %v1027, %v1045
    %v1049 = vxor.u32 %v1048, 2147483648
    %v1050 = vmul.f32 %v1049, 1.442695
    %v1051 = vpow.pop %v1050
    %v1052 = vadd.f32 %v1051, 1.0
    %v1053 = vrcp.pop %v1052
    %v1054 = vmul.f32 %v1052, %v1053
    %v1055 = vsub.f32 1.0, %v1054
    %v1056 = vmul.f32 %v1053, %v1055
    %v1057 = vadd.f32 %v1053, %v1056
    %vm1058 = vweird.f32 %v1052
    %vm1059 = vweird.f32 %v1053
    %vm1060 = vmor %vm1058, %vm1059
    %v1061 = vsel %vm1060, %v1053, %v1057
    %v1062 = vand.u32 2147483647, %v1052
    %vm1063 = vcmp.eq.f32.partialorder %v1062, 8.507059e+37
    %v1064 = vand.u32 %v1052, 2147483648
    %v1065 = vor.u32 1.1754944e-38, %v1064
    %v1066 = vsel %vm1063, %v1065, %v1061
    %v1067 = vmul.f32 1.0, %v1066
    %1069 = vrot.lane.b32.xlu0 %v1045, 64
    %v1070 = vpop.permute.xlu0 %1069
    %v1072 = vmul.f32 %v1067, %v1070
    %1074 = vrot.lane.b32.xlu0 %v1072, 64
    %v1075 = vpop.permute.xlu0 %1074
    %v1077 = vadd.f32 %v1027, %v1075
    %v1078 = vtanh.pop %v1077
    %v1079 = vsub.f32 1.0, %v1067
    %1081 = vrot.lane.b32.xlu0 %v1078, 96
    %v1082 = vpop.permute.xlu0 %1081
    %v1084 = vmul.f32 %v1079, %v1082
    %v1085 = vmul.f32 %v1067, %v1021
    %v1086 = vadd.f32 %v1084, %v1085
    %1088 = vrot.lane.b32.xlu0 %v1086, 96
    %v1089 = vpop.permute.xlu0 %1088
    %1091 = vst.msk [vmem:[%s478] sm:$0xff] %vm238, %v1089
    %v1092 = vld [vmem:[%s480] sm:$0xff]
    %v1093 = vpack.c.bf16 %v1086, %v1086
    %1095 = vrot.lane.b32.xlu0 %v1093, 96
    %v1096 = vpop.permute.xlu0 %1095
    %v1098 = vsel %vm238, %v1096, 0
    %1100 = vmatpush.bf16.msra.mxu0 0
    %1101 = vmatpush.bf16.msra.mxu0 0
    %1102 = vmatpush.bf16.msra.mxu0 0
    %1103 = vmatpush.bf16.msra.mxu0 0
    %1104 = vmatpush.bf16.msra.mxu0 0
    %1105 = vmatpush.bf16.msra.mxu0 0
    %1106 = vmatpush.bf16.msra.mxu0 %v964
    %1107 = vmatpush.bf16.msra.mxu0 %v963
    %1108 = vmatmul.bf16.gmra.mxu0 %v1098
    %v1109 = vpop.f32.mrf.mxu0
    %v1110 = vadd.f32 %v906, %v1109
    %v1111 = vpop.f32.mrf.mxu0
    %1112 = vdwg.mxu0
    %v1113 = vadd.f32 %v1092, %v1110
    %v1114 = vxor.u32 %v1113, 2147483648
    %v1115 = vmul.f32 %v1114, 1.442695
    %v1116 = vpow.pop %v1115
    %v1117 = vadd.f32 %v1116, 1.0
    %v1118 = vrcp.pop %v1117
    %v1119 = vmul.f32 %v1117, %v1118
    %v1120 = vsub.f32 1.0, %v1119
    %v1121 = vmul.f32 %v1118, %v1120
    %v1122 = vadd.f32 %v1118, %v1121
    %vm1123 = vweird.f32 %v1117
    %vm1124 = vweird.f32 %v1118
    %vm1125 = vmor %vm1123, %vm1124
    %v1126 = vsel %vm1125, %v1118, %v1122
    %v1127 = vand.u32 2147483647, %v1117
    %vm1128 = vcmp.eq.f32.partialorder %v1127, 8.507059e+37
    %v1129 = vand.u32 %v1117, 2147483648
    %v1130 = vor.u32 1.1754944e-38, %v1129
    %v1131 = vsel %vm1128, %v1130, %v1126
    %v1132 = vmul.f32 1.0, %v1131
    %1134 = vrot.lane.b32.xlu0 %v1110, 64
    %v1135 = vpop.permute.xlu0 %1134
    %v1137 = vmul.f32 %v1132, %v1135
    %1139 = vrot.lane.b32.xlu0 %v1137, 64
    %v1140 = vpop.permute.xlu0 %1139
    %v1142 = vadd.f32 %v1092, %v1140
    %v1143 = vtanh.pop %v1142
    %v1144 = vsub.f32 1.0, %v1132
    %1146 = vrot.lane.b32.xlu0 %v1143, 96
    %v1147 = vpop.permute.xlu0 %1146
    %v1149 = vmul.f32 %v1144, %v1147
    %v1150 = vmul.f32 %v1132, %v1086
    %v1151 = vadd.f32 %v1149, %v1150
    %1153 = vrot.lane.b32.xlu0 %v1151, 96
    %v1154 = vpop.permute.xlu0 %1153
    %1156 = vst.msk [vmem:[%s545] sm:$0xff] %vm238, %v1154
    %v1157 = vld [vmem:[%s547] sm:$0xff]
    %v1158 = vpack.c.bf16 %v1151, %v1151
    %1160 = vrot.lane.b32.xlu0 %v1158, 96
    %v1161 = vpop.permute.xlu0 %1160
    %v1163 = vsel %vm238, %v1161, 0
    %1165 = vmatpush.bf16.msra.mxu0 0
    %1166 = vmatpush.bf16.msra.mxu0 0
    %1167 = vmatpush.bf16.msra.mxu0 0
    %1168 = vmatpush.bf16.msra.mxu0 0
    %1169 = vmatpush.bf16.msra.mxu0 0
    %1170 = vmatpush.bf16.msra.mxu0 0
    %1171 = vmatpush.bf16.msra.mxu0 %v964
    %1172 = vmatpush.bf16.msra.mxu0 %v963
    %1173 = vmatmul.bf16.gmra.mxu0 %v1163
    %v1174 = vpop.f32.mrf.mxu0
    %v1175 = vadd.f32 %v906, %v1174
    %v1176 = vpop.f32.mrf.mxu0
    %1177 = vdwg.mxu0
    %v1178 = vadd.f32 %v1157, %v1175
    %v1179 = vxor.u32 %v1178, 2147483648
    %v1180 = vmul.f32 %v1179, 1.442695
    %v1181 = vpow.pop %v1180
    %v1182 = vadd.f32 %v1181, 1.0
    %v1183 = vrcp.pop %v1182
    %v1184 = vmul.f32 %v1182, %v1183
    %v1185 = vsub.f32 1.0, %v1184
    %v1186 = vmul.f32 %v1183, %v1185
    %v1187 = vadd.f32 %v1183, %v1186
    %vm1188 = vweird.f32 %v1182
    %vm1189 = vweird.f32 %v1183
    %vm1190 = vmor %vm1188, %vm1189
    %v1191 = vsel %vm1190, %v1183, %v1187
    %v1192 = vand.u32 2147483647, %v1182
    %vm1193 = vcmp.eq.f32.partialorder %v1192, 8.507059e+37
    %v1194 = vand.u32 %v1182, 2147483648
    %v1195 = vor.u32 1.1754944e-38, %v1194
    %v1196 = vsel %vm1193, %v1195, %v1191
    %v1197 = vmul.f32 1.0, %v1196
    %1199 = vrot.lane.b32.xlu0 %v1175, 64
    %v1200 = vpop.permute.xlu0 %1199
    %v1202 = vmul.f32 %v1197, %v1200
    %1204 = vrot.lane.b32.xlu0 %v1202, 64
    %v1205 = vpop.permute.xlu0 %1204
    %v1207 = vadd.f32 %v1157, %v1205
    %v1208 = vtanh.pop %v1207
    %v1209 = vsub.f32 1.0, %v1197
    %1211 = vrot.lane.b32.xlu0 %v1208, 96
    %v1212 = vpop.permute.xlu0 %1211
    %v1214 = vmul.f32 %v1209, %v1212
    %v1215 = vmul.f32 %v1197, %v1151
    %v1216 = vadd.f32 %v1214, %v1215
    %1218 = vrot.lane.b32.xlu0 %v1216, 96
    %v1219 = vpop.permute.xlu0 %1218
    %1221 = vst.msk [vmem:[%s612] sm:$0xff] %vm238, %v1219
    %v1222 = vld [vmem:[%s614] sm:$0xff]
    %v1223 = vpack.c.bf16 %v1216, %v1216
    %1225 = vrot.lane.b32.xlu0 %v1223, 96
    %v1226 = vpop.permute.xlu0 %1225
    %v1228 = vsel %vm238, %v1226, 0
    %1230 = vmatpush.bf16.msra.mxu0 0
    %1231 = vmatpush.bf16.msra.mxu0 0
    %1232 = vmatpush.bf16.msra.mxu0 0
    %1233 = vmatpush.bf16.msra.mxu0 0
    %1234 = vmatpush.bf16.msra.mxu0 0
    %1235 = vmatpush.bf16.msra.mxu0 0
    %1236 = vmatpush.bf16.msra.mxu0 %v964
    %1237 = vmatpush.bf16.msra.mxu0 %v963
    %1238 = vmatmul.bf16.gmra.mxu0 %v1228
    %v1239 = vpop.f32.mrf.mxu0
    %v1240 = vadd.f32 %v906, %v1239
    %v1241 = vpop.f32.mrf.mxu0
    %1242 = vdwg.mxu0
    %v1243 = vadd.f32 %v1222, %v1240
    %v1244 = vxor.u32 %v1243, 2147483648
    %v1245 = vmul.f32 %v1244, 1.442695
    %v1246 = vpow.pop %v1245
    %v1247 = vadd.f32 %v1246, 1.0
    %v1248 = vrcp.pop %v1247
    %v1249 = vmul.f32 %v1247, %v1248
    %v1250 = vsub.f32 1.0, %v1249
    %v1251 = vmul.f32 %v1248, %v1250
    %v1252 = vadd.f32 %v1248, %v1251
    %vm1253 = vweird.f32 %v1247
    %vm1254 = vweird.f32 %v1248
    %vm1255 = vmor %vm1253, %vm1254
    %v1256 = vsel %vm1255, %v1248, %v1252
    %v1257 = vand.u32 2147483647, %v1247
    %vm1258 = vcmp.eq.f32.partialorder %v1257, 8.507059e+37
    %v1259 = vand.u32 %v1247, 2147483648
    %v1260 = vor.u32 1.1754944e-38, %v1259
    %v1261 = vsel %vm1258, %v1260, %v1256
    %v1262 = vmul.f32 1.0, %v1261
    %1264 = vrot.lane.b32.xlu0 %v1240, 64
    %v1265 = vpop.permute.xlu0 %1264
    %v1267 = vmul.f32 %v1262, %v1265
    %1269 = vrot.lane.b32.xlu0 %v1267, 64
    %v1270 = vpop.permute.xlu0 %1269
    %v1272 = vadd.f32 %v1222, %v1270
    %v1273 = vtanh.pop %v1272
    %v1274 = vsub.f32 1.0, %v1262
    %1276 = vrot.lane.b32.xlu0 %v1273, 96
    %v1277 = vpop.permute.xlu0 %1276
    %v1279 = vmul.f32 %v1274, %v1277
    %v1280 = vmul.f32 %v1262, %v1216
    %v1281 = vadd.f32 %v1279, %v1280
    %1283 = vrot.lane.b32.xlu0 %v1281, 96
    %v1284 = vpop.permute.xlu0 %1283
    %1286 = vst.msk [vmem:[%s679] sm:$0xff] %vm238, %v1284
    %v1287 = vld [vmem:[%s681] sm:$0xff]
    %v1288 = vpack.c.bf16 %v1281, %v1281
    %1290 = vrot.lane.b32.xlu0 %v1288, 96
    %v1291 = vpop.permute.xlu0 %1290
    %v1293 = vsel %vm238, %v1291, 0
    %1295 = vmatpush.bf16.msra.mxu0 0
    %1296 = vmatpush.bf16.msra.mxu0 0
    %1297 = vmatpush.bf16.msra.mxu0 0
    %1298 = vmatpush.bf16.msra.mxu0 0
    %1299 = vmatpush.bf16.msra.mxu0 0
    %1300 = vmatpush.bf16.msra.mxu0 0
    %1301 = vmatpush.bf16.msra.mxu0 %v964
    %1302 = vmatpush.bf16.msra.mxu0 %v963
    %1303 = vmatmul.bf16.gmra.mxu0 %v1293
    %v1304 = vpop.f32.mrf.mxu0
    %v1305 = vadd.f32 %v906, %v1304
    %v1306 = vpop.f32.mrf.mxu0
    %1307 = vdwg.mxu0
    %v1308 = vadd.f32 %v1287, %v1305
    %v1309 = vxor.u32 %v1308, 2147483648
    %v1310 = vmul.f32 %v1309, 1.442695
    %v1311 = vpow.pop %v1310
    %v1312 = vadd.f32 %v1311, 1.0
    %v1313 = vrcp.pop %v1312
    %v1314 = vmul.f32 %v1312, %v1313
    %v1315 = vsub.f32 1.0, %v1314
    %v1316 = vmul.f32 %v1313, %v1315
    %v1317 = vadd.f32 %v1313, %v1316
    %vm1318 = vweird.f32 %v1312
    %vm1319 = vweird.f32 %v1313
    %vm1320 = vmor %vm1318, %vm1319
    %v1321 = vsel %vm1320, %v1313, %v1317
    %v1322 = vand.u32 2147483647, %v1312
    %vm1323 = vcmp.eq.f32.partialorder %v1322, 8.507059e+37
    %v1324 = vand.u32 %v1312, 2147483648
    %v1325 = vor.u32 1.1754944e-38, %v1324
    %v1326 = vsel %vm1323, %v1325, %v1321
    %v1327 = vmul.f32 1.0, %v1326
    %1329 = vrot.lane.b32.xlu0 %v1305, 64
    %v1330 = vpop.permute.xlu0 %1329
    %v1332 = vmul.f32 %v1327, %v1330
    %1334 = vrot.lane.b32.xlu0 %v1332, 64
    %v1335 = vpop.permute.xlu0 %1334
    %v1337 = vadd.f32 %v1287, %v1335
    %v1338 = vtanh.pop %v1337
    %v1339 = vsub.f32 1.0, %v1327
    %1341 = vrot.lane.b32.xlu0 %v1338, 96
    %v1342 = vpop.permute.xlu0 %1341
    %v1344 = vmul.f32 %v1339, %v1342
    %v1345 = vmul.f32 %v1327, %v1281
    %v1346 = vadd.f32 %v1344, %v1345
    %1348 = vrot.lane.b32.xlu0 %v1346, 96
    %v1349 = vpop.permute.xlu0 %1348
    %1351 = vst.msk [vmem:[%s746] sm:$0xff] %vm238, %v1349
    %v1352 = vld [vmem:[%s748] sm:$0xff]
    %v1353 = vpack.c.bf16 %v1346, %v1346
    %1355 = vrot.lane.b32.xlu0 %v1353, 96
    %v1356 = vpop.permute.xlu0 %1355
    %v1358 = vsel %vm238, %v1356, 0
    %1360 = vmatpush.bf16.msra.mxu0 0
    %1361 = vmatpush.bf16.msra.mxu0 0
    %1362 = vmatpush.bf16.msra.mxu0 0
    %1363 = vmatpush.bf16.msra.mxu0 0
    %1364 = vmatpush.bf16.msra.mxu0 0
    %1365 = vmatpush.bf16.msra.mxu0 0
    %1366 = vmatpush.bf16.msra.mxu0 %v964
    %1367 = vmatpush.bf16.msra.mxu0 %v963
    %1368 = vmatmul.bf16.gmra.mxu0 %v1358
    %v1369 = vpop.f32.mrf.mxu0
    %v1370 = vadd.f32 %v906, %v1369
    %v1371 = vpop.f32.mrf.mxu0
    %1372 = vdwg.mxu0
    %v1373 = vadd.f32 %v1352, %v1370
    %v1374 = vxor.u32 %v1373, 2147483648
    %v1375 = vmul.f32 %v1374, 1.442695
    %v1376 = vpow.pop %v1375
    %v1377 = vadd.f32 %v1376, 1.0
    %v1378 = vrcp.pop %v1377
    %v1379 = vmul.f32 %v1377, %v1378
    %v1380 = vsub.f32 1.0, %v1379
    %v1381 = vmul.f32 %v1378, %v1380
    %v1382 = vadd.f32 %v1378, %v1381
    %vm1383 = vweird.f32 %v1377
    %vm1384 = vweird.f32 %v1378
    %vm1385 = vmor %vm1383, %vm1384
    %v1386 = vsel %vm1385, %v1378, %v1382
    %v1387 = vand.u32 2147483647, %v1377
    %vm1388 = vcmp.eq.f32.partialorder %v1387, 8.507059e+37
    %v1389 = vand.u32 %v1377, 2147483648
    %v1390 = vor.u32 1.1754944e-38, %v1389
    %v1391 = vsel %vm1388, %v1390, %v1386
    %v1392 = vmul.f32 1.0, %v1391
    %1394 = vrot.lane.b32.xlu0 %v1370, 64
    %v1395 = vpop.permute.xlu0 %1394
    %v1397 = vmul.f32 %v1392, %v1395
    %1399 = vrot.lane.b32.xlu0 %v1397, 64
    %v1400 = vpop.permute.xlu0 %1399
    %v1402 = vadd.f32 %v1352, %v1400
    %v1403 = vtanh.pop %v1402
    %v1404 = vsub.f32 1.0, %v1392
    %1406 = vrot.lane.b32.xlu0 %v1403, 96
    %v1407 = vpop.permute.xlu0 %1406
    %v1409 = vmul.f32 %v1404, %v1407
    %v1410 = vmul.f32 %v1392, %v1346
    %v1411 = vadd.f32 %v1409, %v1410
    %1413 = vrot.lane.b32.xlu0 %v1411, 96
    %v1414 = vpop.permute.xlu0 %1413
    %1416 = vst.msk [vmem:[%s813] sm:$0xff] %vm238, %v1414
    %v1417 = vld [vmem:[#allocation2] sm:$0xff]
    %v1418 = vld [vmem:[#allocation2 + $0x8] sm:$0xff]
    %v1419 = vld [vmem:[#allocation2 + $0x10] sm:$0xff]
    %v1420 = vld [vmem:[#allocation2 + $0x18] sm:$0xff]
    %v1421 = vld [vmem:[#allocation2 + $0x20] sm:$0xff]
    %v1422 = vld [vmem:[#allocation2 + $0x28] sm:$0xff]
    %v1423 = vld [vmem:[#allocation2 + $0x30] sm:$0xff]
    %v1424 = vld [vmem:[#allocation2 + $0x38] sm:$0xff]
    %s1425 = scalar_lea.vmem [#allocation9], 32
    %v1426 = vld [vmem:[%s1425] sm:$0xf]
    %v1427 = vld [vmem:[%s1425 + $0x4] sm:$0xf]
    %v1428 = vld [vmem:[%s1425 + $0x8] sm:$0xf]
    %v1429 = vld [vmem:[%s1425 + $0xc] sm:$0xf]
    %s1430 = scalar_lea.vmem [#allocation10], 32
    %v1431 = vld [vmem:[%s1430] sm:$0xf]
    %v1432 = vld [vmem:[%s1430 + $0x4] sm:$0xf]
    %v1433 = vld [vmem:[%s1430 + $0x8] sm:$0xf]
    %v1434 = vld [vmem:[%s1430 + $0xc] sm:$0xf]
    %s1435 = scalar_lea.vmem [#allocation12], 2
    %v1436 = vld [vmem:[%s1435] sm:$0x1]
    %s1437 = scalar_lea.vmem %s5, 2
    %v1438 = vld [vmem:[%s1437] sm:$0x1]
    %v1439 = vpack.c.bf16 %v1418, %v1417
    %v1440 = vpack.c.bf16 %v1420, %v1419
    %v1441 = vpack.c.bf16 %v1422, %v1421
    %v1442 = vpack.c.bf16 %v1424, %v1423
    %v1444 = vperm.slane %v1436, 0
    %v1450 = vunpack.c.l.b16 %v1426
    %v1451 = vunpack.c.l.b16 %v1427
    %v1452 = vunpack.c.l.b16 %v1428
    %v1453 = vunpack.c.l.b16 %v1429
    %v1454 = vpack.c.b16 %v1451, %v1450
    %v1455 = vpack.c.b16 %v1453, %v1452
    %v1459 = vsel %vm238, %v1439, 0
    %v1462 = vsel %vm238, %v1440, 0
    %v1465 = vsel %vm238, %v1441, 0
    %v1468 = vsel %vm238, %v1442, 0
    %1470 = vmatpush.bf16.msra.mxu0 0
    %1471 = vmatpush.bf16.msra.mxu0 0
    %1472 = vmatpush.bf16.msra.mxu0 0
    %1473 = vmatpush.bf16.msra.mxu0 0
    %1474 = vmatpush.bf16.msra.mxu0 0
    %1475 = vmatpush.bf16.msra.mxu0 0
    %1476 = vmatpush.bf16.msra.mxu0 %v1455
    %1477 = vmatpush.bf16.msra.mxu0 %v1454
    %1478 = vmatmul.bf16.gmra.mxu0 %v1459
    %v1479 = vpop.f32.mrf.mxu0
    %v1480 = vadd.f32 %v1444, %v1479
    %v1481 = vpop.f32.mrf.mxu0
    %v1482 = vadd.f32 %v1444, %v1481
    %1483 = vmatmul.bf16.gmra.mxu0 %v1462
    %v1484 = vpop.f32.mrf.mxu0
    %v1485 = vadd.f32 %v1444, %v1484
    %v1486 = vpop.f32.mrf.mxu0
    %v1487 = vadd.f32 %v1444, %v1486
    %1488 = vmatmul.bf16.gmra.mxu0 %v1465
    %v1489 = vpop.f32.mrf.mxu0
    %v1490 = vadd.f32 %v1444, %v1489
    %v1491 = vpop.f32.mrf.mxu0
    %v1492 = vadd.f32 %v1444, %v1491
    %1493 = vmatmul.bf16.gmra.mxu0 %v1468
    %v1494 = vpop.f32.mrf.mxu0
    %v1495 = vadd.f32 %v1444, %v1494
    %v1496 = vpop.f32.mrf.mxu0
    %v1497 = vadd.f32 %v1444, %v1496
    %1498 = vdwg.mxu0
    %1499 = vst.msk [vmem:[#allocation3] sm:$0xff] %vm280, %v1480
    %1500 = vst.msk [vmem:[#allocation3 + $0x8] sm:$0xff] %vm280, %v1482
    %1501 = vst.msk [vmem:[#allocation3 + $0x10] sm:$0xff] %vm280, %v1485
    %1502 = vst.msk [vmem:[#allocation3 + $0x18] sm:$0xff] %vm280, %v1487
    %1503 = vst.msk [vmem:[#allocation3 + $0x20] sm:$0xff] %vm280, %v1490
    %1504 = vst.msk [vmem:[#allocation3 + $0x28] sm:$0xff] %vm280, %v1492
    %1505 = vst.msk [vmem:[#allocation3 + $0x30] sm:$0xff] %vm280, %v1495
    %1506 = vst.msk [vmem:[#allocation3 + $0x38] sm:$0xff] %vm280, %v1497
    %v1508 = vperm.slane %v1438, 0
    %v1510 = vld [vmem:[#allocation3] sm:$0xff]
    %v1511 = vadd.f32 %v1510, %v1508
    %v1512 = vxor.u32 %v1511, 2147483648
    %v1513 = vmul.f32 %v1512, 1.442695
    %v1514 = vpow.pop %v1513
    %v1515 = vadd.f32 %v1514, 1.0
    %v1516 = vrcp.pop %v1515
    %v1517 = vmul.f32 %v1515, %v1516
    %v1518 = vsub.f32 1.0, %v1517
    %v1519 = vmul.f32 %v1516, %v1518
    %v1520 = vadd.f32 %v1516, %v1519
    %vm1521 = vweird.f32 %v1515
    %vm1522 = vweird.f32 %v1516
    %vm1523 = vmor %vm1521, %vm1522
    %v1524 = vsel %vm1523, %v1516, %v1520
    %v1525 = vand.u32 2147483647, %v1515
    %vm1526 = vcmp.eq.f32.partialorder %v1525, 8.507059e+37
    %v1527 = vand.u32 %v1515, 2147483648
    %v1528 = vor.u32 1.1754944e-38, %v1527
    %v1529 = vsel %vm1526, %v1528, %v1524
    %v1530 = vmul.f32 1.0, %v1529
    %1531 = vrot.lane.b32.xlu0 %v1508, 64
    %v1532 = vpop.permute.xlu0 %1531
    %v1534 = vmul.f32 %v1530, %v1532
    %1536 = vrot.lane.b32.xlu0 %v1534, 64
    %v1537 = vpop.permute.xlu0 %1536
    %v1539 = vadd.f32 %v1510, %v1537
    %v1540 = vtanh.pop %v1539
    %v1541 = vsub.f32 1.0, %v1530
    %1543 = vrot.lane.b32.xlu0 %v1540, 96
    %v1544 = vpop.permute.xlu0 %1543
    %v1546 = vmul.f32 %v1541, %v1544
    %1548 = vrot.lane.b32.xlu0 %v1546, 96
    %v1549 = vpop.permute.xlu0 %1548
    %1551 = vst.msk [vmem:[#allocation2] sm:$0xff] %vm238, %v1549
    %v1552 = vld [vmem:[%s334] sm:$0xff]
    %v1553 = vpack.c.bf16 %v1546, %v1546
    %1555 = vrot.lane.b32.xlu0 %v1553, 96
    %v1556 = vpop.permute.xlu0 %1555
    %v1561 = vunpack.c.l.b16 %v1431
    %v1562 = vunpack.c.l.b16 %v1432
    %v1563 = vunpack.c.l.b16 %v1433
    %v1564 = vunpack.c.l.b16 %v1434
    %v1565 = vpack.c.b16 %v1562, %v1561
    %v1566 = vpack.c.b16 %v1564, %v1563
    %v1570 = vsel %vm238, %v1556, 0
    %1572 = vmatpush.bf16.msra.mxu0 0
    %1573 = vmatpush.bf16.msra.mxu0 0
    %1574 = vmatpush.bf16.msra.mxu0 0
    %1575 = vmatpush.bf16.msra.mxu0 0
    %1576 = vmatpush.bf16.msra.mxu0 0
    %1577 = vmatpush.bf16.msra.mxu0 0
    %1578 = vmatpush.bf16.msra.mxu0 %v1566
    %1579 = vmatpush.bf16.msra.mxu0 %v1565
    %1580 = vmatmul.bf16.gmra.mxu0 %v1570
    %v1581 = vpop.f32.mrf.mxu0
    %v1582 = vadd.f32 %v1508, %v1581
    %v1583 = vpop.f32.mrf.mxu0
    %1584 = vdwg.mxu0
    %v1585 = vadd.f32 %v1552, %v1582
    %v1586 = vxor.u32 %v1585, 2147483648
    %v1587 = vmul.f32 %v1586, 1.442695
    %v1588 = vpow.pop %v1587
    %v1589 = vadd.f32 %v1588, 1.0
    %v1590 = vrcp.pop %v1589
    %v1591 = vmul.f32 %v1589, %v1590
    %v1592 = vsub.f32 1.0, %v1591
    %v1593 = vmul.f32 %v1590, %v1592
    %v1594 = vadd.f32 %v1590, %v1593
    %vm1595 = vweird.f32 %v1589
    %vm1596 = vweird.f32 %v1590
    %vm1597 = vmor %vm1595, %vm1596
    %v1598 = vsel %vm1597, %v1590, %v1594
    %v1599 = vand.u32 2147483647, %v1589
    %vm1600 = vcmp.eq.f32.partialorder %v1599, 8.507059e+37
    %v1601 = vand.u32 %v1589, 2147483648
    %v1602 = vor.u32 1.1754944e-38, %v1601
    %v1603 = vsel %vm1600, %v1602, %v1598
    %v1604 = vmul.f32 1.0, %v1603
    %1606 = vrot.lane.b32.xlu0 %v1582, 64
    %v1607 = vpop.permute.xlu0 %1606
    %v1609 = vmul.f32 %v1604, %v1607
    %1611 = vrot.lane.b32.xlu0 %v1609, 64
    %v1612 = vpop.permute.xlu0 %1611
    %v1614 = vadd.f32 %v1552, %v1612
    %v1615 = vtanh.pop %v1614
    %v1616 = vsub.f32 1.0, %v1604
    %1618 = vrot.lane.b32.xlu0 %v1615, 96
    %v1619 = vpop.permute.xlu0 %1618
    %v1621 = vmul.f32 %v1616, %v1619
    %v1622 = vmul.f32 %v1604, %v1546
    %v1623 = vadd.f32 %v1621, %v1622
    %1625 = vrot.lane.b32.xlu0 %v1623, 96
    %v1626 = vpop.permute.xlu0 %1625
    %1628 = vst.msk [vmem:[%s411] sm:$0xff] %vm238, %v1626
    %v1629 = vld [vmem:[%s413] sm:$0xff]
    %v1630 = vpack.c.bf16 %v1623, %v1623
    %1632 = vrot.lane.b32.xlu0 %v1630, 96
    %v1633 = vpop.permute.xlu0 %1632
    %v1635 = vsel %vm238, %v1633, 0
    %1637 = vmatpush.bf16.msra.mxu0 0
    %1638 = vmatpush.bf16.msra.mxu0 0
    %1639 = vmatpush.bf16.msra.mxu0 0
    %1640 = vmatpush.bf16.msra.mxu0 0
    %1641 = vmatpush.bf16.msra.mxu0 0
    %1642 = vmatpush.bf16.msra.mxu0 0
    %1643 = vmatpush.bf16.msra.mxu0 %v1566
    %1644 = vmatpush.bf16.msra.mxu0 %v1565
    %1645 = vmatmul.bf16.gmra.mxu0 %v1635
    %v1646 = vpop.f32.mrf.mxu0
    %v1647 = vadd.f32 %v1508, %v1646
    %v1648 = vpop.f32.mrf.mxu0
    %1649 = vdwg.mxu0
    %v1650 = vadd.f32 %v1629, %v1647
    %v1651 = vxor.u32 %v1650, 2147483648
    %v1652 = vmul.f32 %v1651, 1.442695
    %v1653 = vpow.pop %v1652
    %v1654 = vadd.f32 %v1653, 1.0
    %v1655 = vrcp.pop %v1654
    %v1656 = vmul.f32 %v1654, %v1655
    %v1657 = vsub.f32 1.0, %v1656
    %v1658 = vmul.f32 %v1655, %v1657
    %v1659 = vadd.f32 %v1655, %v1658
    %vm1660 = vweird.f32 %v1654
    %vm1661 = vweird.f32 %v1655
    %vm1662 = vmor %vm1660, %vm1661
    %v1663 = vsel %vm1662, %v1655, %v1659
    %v1664 = vand.u32 2147483647, %v1654
    %vm1665 = vcmp.eq.f32.partialorder %v1664, 8.507059e+37
    %v1666 = vand.u32 %v1654, 2147483648
    %v1667 = vor.u32 1.1754944e-38, %v1666
    %v1668 = vsel %vm1665, %v1667, %v1663
    %v1669 = vmul.f32 1.0, %v1668
    %1671 = vrot.lane.b32.xlu0 %v1647, 64
    %v1672 = vpop.permute.xlu0 %1671
    %v1674 = vmul.f32 %v1669, %v1672
    %1676 = vrot.lane.b32.xlu0 %v1674, 64
    %v1677 = vpop.permute.xlu0 %1676
    %v1679 = vadd.f32 %v1629, %v1677
    %v1680 = vtanh.pop %v1679
    %v1681 = vsub.f32 1.0, %v1669
    %1683 = vrot.lane.b32.xlu0 %v1680, 96
    %v1684 = vpop.permute.xlu0 %1683
    %v1686 = vmul.f32 %v1681, %v1684
    %v1687 = vmul.f32 %v1669, %v1623
    %v1688 = vadd.f32 %v1686, %v1687
    %1690 = vrot.lane.b32.xlu0 %v1688, 96
    %v1691 = vpop.permute.xlu0 %1690
    %1693 = vst.msk [vmem:[%s478] sm:$0xff] %vm238, %v1691
    %v1694 = vld [vmem:[%s480] sm:$0xff]
    %v1695 = vpack.c.bf16 %v1688, %v1688
    %1697 = vrot.lane.b32.xlu0 %v1695, 96
    %v1698 = vpop.permute.xlu0 %1697
    %v1700 = vsel %vm238, %v1698, 0
    %1702 = vmatpush.bf16.msra.mxu0 0
    %1703 = vmatpush.bf16.msra.mxu0 0
    %1704 = vmatpush.bf16.msra.mxu0 0
    %1705 = vmatpush.bf16.msra.mxu0 0
    %1706 = vmatpush.bf16.msra.mxu0 0
    %1707 = vmatpush.bf16.msra.mxu0 0
    %1708 = vmatpush.bf16.msra.mxu0 %v1566
    %1709 = vmatpush.bf16.msra.mxu0 %v1565
    %1710 = vmatmul.bf16.gmra.mxu0 %v1700
    %v1711 = vpop.f32.mrf.mxu0
    %v1712 = vadd.f32 %v1508, %v1711
    %v1713 = vpop.f32.mrf.mxu0
    %1714 = vdwg.mxu0
    %v1715 = vadd.f32 %v1694, %v1712
    %v1716 = vxor.u32 %v1715, 2147483648
    %v1717 = vmul.f32 %v1716, 1.442695
    %v1718 = vpow.pop %v1717
    %v1719 = vadd.f32 %v1718, 1.0
    %v1720 = vrcp.pop %v1719
    %v1721 = vmul.f32 %v1719, %v1720
    %v1722 = vsub.f32 1.0, %v1721
    %v1723 = vmul.f32 %v1720, %v1722
    %v1724 = vadd.f32 %v1720, %v1723
    %vm1725 = vweird.f32 %v1719
    %vm1726 = vweird.f32 %v1720
    %vm1727 = vmor %vm1725, %vm1726
    %v1728 = vsel %vm1727, %v1720, %v1724
    %v1729 = vand.u32 2147483647, %v1719
    %vm1730 = vcmp.eq.f32.partialorder %v1729, 8.507059e+37
    %v1731 = vand.u32 %v1719, 2147483648
    %v1732 = vor.u32 1.1754944e-38, %v1731
    %v1733 = vsel %vm1730, %v1732, %v1728
    %v1734 = vmul.f32 1.0, %v1733
    %1736 = vrot.lane.b32.xlu0 %v1712, 64
    %v1737 = vpop.permute.xlu0 %1736
    %v1739 = vmul.f32 %v1734, %v1737
    %1741 = vrot.lane.b32.xlu0 %v1739, 64
    %v1742 = vpop.permute.xlu0 %1741
    %v1744 = vadd.f32 %v1694, %v1742
    %v1745 = vtanh.pop %v1744
    %v1746 = vsub.f32 1.0, %v1734
    %1748 = vrot.lane.b32.xlu0 %v1745, 96
    %v1749 = vpop.permute.xlu0 %1748
    %v1751 = vmul.f32 %v1746, %v1749
    %v1752 = vmul.f32 %v1734, %v1688
    %v1753 = vadd.f32 %v1751, %v1752
    %1755 = vrot.lane.b32.xlu0 %v1753, 96
    %v1756 = vpop.permute.xlu0 %1755
    %1758 = vst.msk [vmem:[%s545] sm:$0xff] %vm238, %v1756
    %v1759 = vld [vmem:[%s547] sm:$0xff]
    %v1760 = vpack.c.bf16 %v1753, %v1753
    %1762 = vrot.lane.b32.xlu0 %v1760, 96
    %v1763 = vpop.permute.xlu0 %1762
    %v1765 = vsel %vm238, %v1763, 0
    %1767 = vmatpush.bf16.msra.mxu0 0
    %1768 = vmatpush.bf16.msra.mxu0 0
    %1769 = vmatpush.bf16.msra.mxu0 0
    %1770 = vmatpush.bf16.msra.mxu0 0
    %1771 = vmatpush.bf16.msra.mxu0 0
    %1772 = vmatpush.bf16.msra.mxu0 0
    %1773 = vmatpush.bf16.msra.mxu0 %v1566
    %1774 = vmatpush.bf16.msra.mxu0 %v1565
    %1775 = vmatmul.bf16.gmra.mxu0 %v1765
    %v1776 = vpop.f32.mrf.mxu0
    %v1777 = vadd.f32 %v1508, %v1776
    %v1778 = vpop.f32.mrf.mxu0
    %1779 = vdwg.mxu0
    %v1780 = vadd.f32 %v1759, %v1777
    %v1781 = vxor.u32 %v1780, 2147483648
    %v1782 = vmul.f32 %v1781, 1.442695
    %v1783 = vpow.pop %v1782
    %v1784 = vadd.f32 %v1783, 1.0
    %v1785 = vrcp.pop %v1784
    %v1786 = vmul.f32 %v1784, %v1785
    %v1787 = vsub.f32 1.0, %v1786
    %v1788 = vmul.f32 %v1785, %v1787
    %v1789 = vadd.f32 %v1785, %v1788
    %vm1790 = vweird.f32 %v1784
    %vm1791 = vweird.f32 %v1785
    %vm1792 = vmor %vm1790, %vm1791
    %v1793 = vsel %vm1792, %v1785, %v1789
    %v1794 = vand.u32 2147483647, %v1784
    %vm1795 = vcmp.eq.f32.partialorder %v1794, 8.507059e+37
    %v1796 = vand.u32 %v1784, 2147483648
    %v1797 = vor.u32 1.1754944e-38, %v1796
    %v1798 = vsel %vm1795, %v1797, %v1793
    %v1799 = vmul.f32 1.0, %v1798
    %1801 = vrot.lane.b32.xlu0 %v1777, 64
    %v1802 = vpop.permute.xlu0 %1801
    %v1804 = vmul.f32 %v1799, %v1802
    %1806 = vrot.lane.b32.xlu0 %v1804, 64
    %v1807 = vpop.permute.xlu0 %1806
    %v1809 = vadd.f32 %v1759, %v1807
    %v1810 = vtanh.pop %v1809
    %v1811 = vsub.f32 1.0, %v1799
    %1813 = vrot.lane.b32.xlu0 %v1810, 96
    %v1814 = vpop.permute.xlu0 %1813
    %v1816 = vmul.f32 %v1811, %v1814
    %v1817 = vmul.f32 %v1799, %v1753
    %v1818 = vadd.f32 %v1816, %v1817
    %1820 = vrot.lane.b32.xlu0 %v1818, 96
    %v1821 = vpop.permute.xlu0 %1820
    %1823 = vst.msk [vmem:[%s612] sm:$0xff] %vm238, %v1821
    %v1824 = vld [vmem:[%s614] sm:$0xff]
    %v1825 = vpack.c.bf16 %v1818, %v1818
    %1827 = vrot.lane.b32.xlu0 %v1825, 96
    %v1828 = vpop.permute.xlu0 %1827
    %v1830 = vsel %vm238, %v1828, 0
    %1832 = vmatpush.bf16.msra.mxu0 0
    %1833 = vmatpush.bf16.msra.mxu0 0
    %1834 = vmatpush.bf16.msra.mxu0 0
    %1835 = vmatpush.bf16.msra.mxu0 0
    %1836 = vmatpush.bf16.msra.mxu0 0
    %1837 = vmatpush.bf16.msra.mxu0 0
    %1838 = vmatpush.bf16.msra.mxu0 %v1566
    %1839 = vmatpush.bf16.msra.mxu0 %v1565
    %1840 = vmatmul.bf16.gmra.mxu0 %v1830
    %v1841 = vpop.f32.mrf.mxu0
    %v1842 = vadd.f32 %v1508, %v1841
    %v1843 = vpop.f32.mrf.mxu0
    %1844 = vdwg.mxu0
    %v1845 = vadd.f32 %v1824, %v1842
    %v1846 = vxor.u32 %v1845, 2147483648
    %v1847 = vmul.f32 %v1846, 1.442695
    %v1848 = vpow.pop %v1847
    %v1849 = vadd.f32 %v1848, 1.0
    %v1850 = vrcp.pop %v1849
    %v1851 = vmul.f32 %v1849, %v1850
    %v1852 = vsub.f32 1.0, %v1851
    %v1853 = vmul.f32 %v1850, %v1852
    %v1854 = vadd.f32 %v1850, %v1853
    %vm1855 = vweird.f32 %v1849
    %vm1856 = vweird.f32 %v1850
    %vm1857 = vmor %vm1855, %vm1856
    %v1858 = vsel %vm1857, %v1850, %v1854
    %v1859 = vand.u32 2147483647, %v1849
    %vm1860 = vcmp.eq.f32.partialorder %v1859, 8.507059e+37
    %v1861 = vand.u32 %v1849, 2147483648
    %v1862 = vor.u32 1.1754944e-38, %v1861
    %v1863 = vsel %vm1860, %v1862, %v1858
    %v1864 = vmul.f32 1.0, %v1863
    %1866 = vrot.lane.b32.xlu0 %v1842, 64
    %v1867 = vpop.permute.xlu0 %1866
    %v1869 = vmul.f32 %v1864, %v1867
    %1871 = vrot.lane.b32.xlu0 %v1869, 64
    %v1872 = vpop.permute.xlu0 %1871
    %v1874 = vadd.f32 %v1824, %v1872
    %v1875 = vtanh.pop %v1874
    %v1876 = vsub.f32 1.0, %v1864
    %1878 = vrot.lane.b32.xlu0 %v1875, 96
    %v1879 = vpop.permute.xlu0 %1878
    %v1881 = vmul.f32 %v1876, %v1879
    %v1882 = vmul.f32 %v1864, %v1818
    %v1883 = vadd.f32 %v1881, %v1882
    %1885 = vrot.lane.b32.xlu0 %v1883, 96
    %v1886 = vpop.permute.xlu0 %1885
    %1888 = vst.msk [vmem:[%s679] sm:$0xff] %vm238, %v1886
    %v1889 = vld [vmem:[%s681] sm:$0xff]
    %v1890 = vpack.c.bf16 %v1883, %v1883
    %1892 = vrot.lane.b32.xlu0 %v1890, 96
    %v1893 = vpop.permute.xlu0 %1892
    %v1895 = vsel %vm238, %v1893, 0
    %1897 = vmatpush.bf16.msra.mxu0 0
    %1898 = vmatpush.bf16.msra.mxu0 0
    %1899 = vmatpush.bf16.msra.mxu0 0
    %1900 = vmatpush.bf16.msra.mxu0 0
    %1901 = vmatpush.bf16.msra.mxu0 0
    %1902 = vmatpush.bf16.msra.mxu0 0
    %1903 = vmatpush.bf16.msra.mxu0 %v1566
    %1904 = vmatpush.bf16.msra.mxu0 %v1565
    %1905 = vmatmul.bf16.gmra.mxu0 %v1895
    %v1906 = vpop.f32.mrf.mxu0
    %v1907 = vadd.f32 %v1508, %v1906
    %v1908 = vpop.f32.mrf.mxu0
    %1909 = vdwg.mxu0
    %v1910 = vadd.f32 %v1889, %v1907
    %v1911 = vxor.u32 %v1910, 2147483648
    %v1912 = vmul.f32 %v1911, 1.442695
    %v1913 = vpow.pop %v1912
    %v1914 = vadd.f32 %v1913, 1.0
    %v1915 = vrcp.pop %v1914
    %v1916 = vmul.f32 %v1914, %v1915
    %v1917 = vsub.f32 1.0, %v1916
    %v1918 = vmul.f32 %v1915, %v1917
    %v1919 = vadd.f32 %v1915, %v1918
    %vm1920 = vweird.f32 %v1914
    %vm1921 = vweird.f32 %v1915
    %vm1922 = vmor %vm1920, %vm1921
    %v1923 = vsel %vm1922, %v1915, %v1919
    %v1924 = vand.u32 2147483647, %v1914
    %vm1925 = vcmp.eq.f32.partialorder %v1924, 8.507059e+37
    %v1926 = vand.u32 %v1914, 2147483648
    %v1927 = vor.u32 1.1754944e-38, %v1926
    %v1928 = vsel %vm1925, %v1927, %v1923
    %v1929 = vmul.f32 1.0, %v1928
    %1931 = vrot.lane.b32.xlu0 %v1907, 64
    %v1932 = vpop.permute.xlu0 %1931
    %v1934 = vmul.f32 %v1929, %v1932
    %1936 = vrot.lane.b32.xlu0 %v1934, 64
    %v1937 = vpop.permute.xlu0 %1936
    %v1939 = vadd.f32 %v1889, %v1937
    %v1940 = vtanh.pop %v1939
    %v1941 = vsub.f32 1.0, %v1929
    %1943 = vrot.lane.b32.xlu0 %v1940, 96
    %v1944 = vpop.permute.xlu0 %1943
    %v1946 = vmul.f32 %v1941, %v1944
    %v1947 = vmul.f32 %v1929, %v1883
    %v1948 = vadd.f32 %v1946, %v1947
    %1950 = vrot.lane.b32.xlu0 %v1948, 96
    %v1951 = vpop.permute.xlu0 %1950
    %1953 = vst.msk [vmem:[%s746] sm:$0xff] %vm238, %v1951
    %v1954 = vld [vmem:[%s748] sm:$0xff]
    %v1955 = vpack.c.bf16 %v1948, %v1948
    %1957 = vrot.lane.b32.xlu0 %v1955, 96
    %v1958 = vpop.permute.xlu0 %1957
    %v1960 = vsel %vm238, %v1958, 0
    %1962 = vmatpush.bf16.msra.mxu0 0
    %1963 = vmatpush.bf16.msra.mxu0 0
    %1964 = vmatpush.bf16.msra.mxu0 0
    %1965 = vmatpush.bf16.msra.mxu0 0
    %1966 = vmatpush.bf16.msra.mxu0 0
    %1967 = vmatpush.bf16.msra.mxu0 0
    %1968 = vmatpush.bf16.msra.mxu0 %v1566
    %1969 = vmatpush.bf16.msra.mxu0 %v1565
    %1970 = vmatmul.bf16.gmra.mxu0 %v1960
    %v1971 = vpop.f32.mrf.mxu0
    %v1972 = vadd.f32 %v1508, %v1971
    %v1973 = vpop.f32.mrf.mxu0
    %1974 = vdwg.mxu0
    %v1975 = vadd.f32 %v1954, %v1972
    %v1976 = vxor.u32 %v1975, 2147483648
    %v1977 = vmul.f32 %v1976, 1.442695
    %v1978 = vpow.pop %v1977
    %v1979 = vadd.f32 %v1978, 1.0
    %v1980 = vrcp.pop %v1979
    %v1981 = vmul.f32 %v1979, %v1980
    %v1982 = vsub.f32 1.0, %v1981
    %v1983 = vmul.f32 %v1980, %v1982
    %v1984 = vadd.f32 %v1980, %v1983
    %vm1985 = vweird.f32 %v1979
    %vm1986 = vweird.f32 %v1980
    %vm1987 = vmor %vm1985, %vm1986
    %v1988 = vsel %vm1987, %v1980, %v1984
    %v1989 = vand.u32 2147483647, %v1979
    %vm1990 = vcmp.eq.f32.partialorder %v1989, 8.507059e+37
    %v1991 = vand.u32 %v1979, 2147483648
    %v1992 = vor.u32 1.1754944e-38, %v1991
    %v1993 = vsel %vm1990, %v1992, %v1988
    %v1994 = vmul.f32 1.0, %v1993
    %1996 = vrot.lane.b32.xlu0 %v1972, 64
    %v1997 = vpop.permute.xlu0 %1996
    %v1999 = vmul.f32 %v1994, %v1997
    %2001 = vrot.lane.b32.xlu0 %v1999, 64
    %v2002 = vpop.permute.xlu0 %2001
    %v2004 = vadd.f32 %v1954, %v2002
    %v2005 = vtanh.pop %v2004
    %v2006 = vsub.f32 1.0, %v1994
    %2008 = vrot.lane.b32.xlu0 %v2005, 96
    %v2009 = vpop.permute.xlu0 %2008
    %v2011 = vmul.f32 %v2006, %v2009
    %v2012 = vmul.f32 %v1994, %v1948
    %v2013 = vadd.f32 %v2011, %v2012
    %2015 = vrot.lane.b32.xlu0 %v2013, 96
    %v2016 = vpop.permute.xlu0 %2015
    %2018 = vst.msk [vmem:[%s813] sm:$0xff] %vm238, %v2016
    %v2019 = vld [vmem:[#allocation2] sm:$0xff]
    %v2020 = vld [vmem:[#allocation2 + $0x8] sm:$0xff]
    %v2021 = vld [vmem:[#allocation2 + $0x10] sm:$0xff]
    %v2022 = vld [vmem:[#allocation2 + $0x18] sm:$0xff]
    %v2023 = vld [vmem:[#allocation2 + $0x20] sm:$0xff]
    %v2024 = vld [vmem:[#allocation2 + $0x28] sm:$0xff]
    %v2025 = vld [vmem:[#allocation2 + $0x30] sm:$0xff]
    %v2026 = vld [vmem:[#allocation2 + $0x38] sm:$0xff]
    %s2027 = scalar_lea.vmem [#allocation9], 48
    %v2028 = vld [vmem:[%s2027] sm:$0xf]
    %v2029 = vld [vmem:[%s2027 + $0x4] sm:$0xf]
    %v2030 = vld [vmem:[%s2027 + $0x8] sm:$0xf]
    %v2031 = vld [vmem:[%s2027 + $0xc] sm:$0xf]
    %s2032 = scalar_lea.vmem [#allocation10], 48
    %v2033 = vld [vmem:[%s2032] sm:$0xf]
    %v2034 = vld [vmem:[%s2032 + $0x4] sm:$0xf]
    %v2035 = vld [vmem:[%s2032 + $0x8] sm:$0xf]
    %v2036 = vld [vmem:[%s2032 + $0xc] sm:$0xf]
    %s2037 = scalar_lea.vmem [#allocation12], 3
    %v2038 = vld [vmem:[%s2037] sm:$0x1]
    %s2039 = scalar_lea.vmem %s5, 3
    %v2040 = vld [vmem:[%s2039] sm:$0x1]
    %v2041 = vpack.c.bf16 %v2020, %v2019
    %v2042 = vpack.c.bf16 %v2022, %v2021
    %v2043 = vpack.c.bf16 %v2024, %v2023
    %v2044 = vpack.c.bf16 %v2026, %v2025
    %v2046 = vperm.slane %v2038, 0
    %v2052 = vunpack.c.l.b16 %v2028
    %v2053 = vunpack.c.l.b16 %v2029
    %v2054 = vunpack.c.l.b16 %v2030
    %v2055 = vunpack.c.l.b16 %v2031
    %v2056 = vpack.c.b16 %v2053, %v2052
    %v2057 = vpack.c.b16 %v2055, %v2054
    %v2061 = vsel %vm238, %v2041, 0
    %v2064 = vsel %vm238, %v2042, 0
    %v2067 = vsel %vm238, %v2043, 0
    %v2070 = vsel %vm238, %v2044, 0
    %2072 = vmatpush.bf16.msra.mxu0 0
    %2073 = vmatpush.bf16.msra.mxu0 0
    %2074 = vmatpush.bf16.msra.mxu0 0
    %2075 = vmatpush.bf16.msra.mxu0 0
    %2076 = vmatpush.bf16.msra.mxu0 0
    %2077 = vmatpush.bf16.msra.mxu0 0
    %2078 = vmatpush.bf16.msra.mxu0 %v2057
    %2079 = vmatpush.bf16.msra.mxu0 %v2056
    %2080 = vmatmul.bf16.gmra.mxu0 %v2061
    %v2081 = vpop.f32.mrf.mxu0
    %v2082 = vadd.f32 %v2046, %v2081
    %v2083 = vpop.f32.mrf.mxu0
    %v2084 = vadd.f32 %v2046, %v2083
    %2085 = vmatmul.bf16.gmra.mxu0 %v2064
    %v2086 = vpop.f32.mrf.mxu0
    %v2087 = vadd.f32 %v2046, %v2086
    %v2088 = vpop.f32.mrf.mxu0
    %v2089 = vadd.f32 %v2046, %v2088
    %2090 = vmatmul.bf16.gmra.mxu0 %v2067
    %v2091 = vpop.f32.mrf.mxu0
    %v2092 = vadd.f32 %v2046, %v2091
    %v2093 = vpop.f32.mrf.mxu0
    %v2094 = vadd.f32 %v2046, %v2093
    %2095 = vmatmul.bf16.gmra.mxu0 %v2070
    %v2096 = vpop.f32.mrf.mxu0
    %v2097 = vadd.f32 %v2046, %v2096
    %v2098 = vpop.f32.mrf.mxu0
    %v2099 = vadd.f32 %v2046, %v2098
    %2100 = vdwg.mxu0
    %2101 = vst.msk [vmem:[#allocation3] sm:$0xff] %vm280, %v2082
    %2102 = vst.msk [vmem:[#allocation3 + $0x8] sm:$0xff] %vm280, %v2084
    %2103 = vst.msk [vmem:[#allocation3 + $0x10] sm:$0xff] %vm280, %v2087
    %2104 = vst.msk [vmem:[#allocation3 + $0x18] sm:$0xff] %vm280, %v2089
    %2105 = vst.msk [vmem:[#allocation3 + $0x20] sm:$0xff] %vm280, %v2092
    %2106 = vst.msk [vmem:[#allocation3 + $0x28] sm:$0xff] %vm280, %v2094
    %2107 = vst.msk [vmem:[#allocation3 + $0x30] sm:$0xff] %vm280, %v2097
    %2108 = vst.msk [vmem:[#allocation3 + $0x38] sm:$0xff] %vm280, %v2099
    %v2110 = vperm.slane %v2040, 0
    %v2112 = vld [vmem:[#allocation3] sm:$0xff]
    %v2113 = vadd.f32 %v2112, %v2110
    %v2114 = vxor.u32 %v2113, 2147483648
    %v2115 = vmul.f32 %v2114, 1.442695
    %v2116 = vpow.pop %v2115
    %v2117 = vadd.f32 %v2116, 1.0
    %v2118 = vrcp.pop %v2117
    %v2119 = vmul.f32 %v2117, %v2118
    %v2120 = vsub.f32 1.0, %v2119
    %v2121 = vmul.f32 %v2118, %v2120
    %v2122 = vadd.f32 %v2118, %v2121
    %vm2123 = vweird.f32 %v2117
    %vm2124 = vweird.f32 %v2118
    %vm2125 = vmor %vm2123, %vm2124
    %v2126 = vsel %vm2125, %v2118, %v2122
    %v2127 = vand.u32 2147483647, %v2117
    %vm2128 = vcmp.eq.f32.partialorder %v2127, 8.507059e+37
    %v2129 = vand.u32 %v2117, 2147483648
    %v2130 = vor.u32 1.1754944e-38, %v2129
    %v2131 = vsel %vm2128, %v2130, %v2126
    %v2132 = vmul.f32 1.0, %v2131
    %2133 = vrot.lane.b32.xlu0 %v2110, 64
    %v2134 = vpop.permute.xlu0 %2133
    %v2136 = vmul.f32 %v2132, %v2134
    %2138 = vrot.lane.b32.xlu0 %v2136, 64
    %v2139 = vpop.permute.xlu0 %2138
    %v2141 = vadd.f32 %v2112, %v2139
    %v2142 = vtanh.pop %v2141
    %v2143 = vsub.f32 1.0, %v2132
    %2145 = vrot.lane.b32.xlu0 %v2142, 96
    %v2146 = vpop.permute.xlu0 %2145
    %v2148 = vmul.f32 %v2143, %v2146
    %v2149 = vld [vmem:[%s334] sm:$0xff]
    %v2150 = vpack.c.bf16 %v2148, %v2148
    %2152 = vrot.lane.b32.xlu0 %v2150, 96
    %v2153 = vpop.permute.xlu0 %2152
    %v2158 = vunpack.c.l.b16 %v2033
    %v2159 = vunpack.c.l.b16 %v2034
    %v2160 = vunpack.c.l.b16 %v2035
    %v2161 = vunpack.c.l.b16 %v2036
    %v2162 = vpack.c.b16 %v2159, %v2158
    %v2163 = vpack.c.b16 %v2161, %v2160
    %v2167 = vsel %vm238, %v2153, 0
    %2169 = vmatpush.bf16.msra.mxu0 0
    %2170 = vmatpush.bf16.msra.mxu0 0
    %2171 = vmatpush.bf16.msra.mxu0 0
    %2172 = vmatpush.bf16.msra.mxu0 0
    %2173 = vmatpush.bf16.msra.mxu0 0
    %2174 = vmatpush.bf16.msra.mxu0 0
    %2175 = vmatpush.bf16.msra.mxu0 %v2163
    %2176 = vmatpush.bf16.msra.mxu0 %v2162
    %2177 = vmatmul.bf16.gmra.mxu0 %v2167
    %v2178 = vpop.f32.mrf.mxu0
    %v2179 = vadd.f32 %v2110, %v2178
    %v2180 = vpop.f32.mrf.mxu0
    %2181 = vdwg.mxu0
    %v2182 = vadd.f32 %v2149, %v2179
    %v2183 = vxor.u32 %v2182, 2147483648
    %v2184 = vmul.f32 %v2183, 1.442695
    %v2185 = vpow.pop %v2184
    %v2186 = vadd.f32 %v2185, 1.0
    %v2187 = vrcp.pop %v2186
    %v2188 = vmul.f32 %v2186, %v2187
    %v2189 = vsub.f32 1.0, %v2188
    %v2190 = vmul.f32 %v2187, %v2189
    %v2191 = vadd.f32 %v2187, %v2190
    %vm2192 = vweird.f32 %v2186
    %vm2193 = vweird.f32 %v2187
    %vm2194 = vmor %vm2192, %vm2193
    %v2195 = vsel %vm2194, %v2187, %v2191
    %v2196 = vand.u32 2147483647, %v2186
    %vm2197 = vcmp.eq.f32.partialorder %v2196, 8.507059e+37
    %v2198 = vand.u32 %v2186, 2147483648
    %v2199 = vor.u32 1.1754944e-38, %v2198
    %v2200 = vsel %vm2197, %v2199, %v2195
    %v2201 = vmul.f32 1.0, %v2200
    %2203 = vrot.lane.b32.xlu0 %v2179, 64
    %v2204 = vpop.permute.xlu0 %2203
    %v2206 = vmul.f32 %v2201, %v2204
    %2208 = vrot.lane.b32.xlu0 %v2206, 64
    %v2209 = vpop.permute.xlu0 %2208
    %v2211 = vadd.f32 %v2149, %v2209
    %v2212 = vtanh.pop %v2211
    %v2213 = vsub.f32 1.0, %v2201
    %2215 = vrot.lane.b32.xlu0 %v2212, 96
    %v2216 = vpop.permute.xlu0 %2215
    %v2218 = vmul.f32 %v2213, %v2216
    %v2219 = vmul.f32 %v2201, %v2148
    %v2220 = vadd.f32 %v2218, %v2219
    %v2221 = vld [vmem:[%s413] sm:$0xff]
    %v2222 = vpack.c.bf16 %v2220, %v2220
    %2224 = vrot.lane.b32.xlu0 %v2222, 96
    %v2225 = vpop.permute.xlu0 %2224
    %v2227 = vsel %vm238, %v2225, 0
    %2229 = vmatpush.bf16.msra.mxu0 0
    %2230 = vmatpush.bf16.msra.mxu0 0
    %2231 = vmatpush.bf16.msra.mxu0 0
    %2232 = vmatpush.bf16.msra.mxu0 0
    %2233 = vmatpush.bf16.msra.mxu0 0
    %2234 = vmatpush.bf16.msra.mxu0 0
    %2235 = vmatpush.bf16.msra.mxu0 %v2163
    %2236 = vmatpush.bf16.msra.mxu0 %v2162
    %2237 = vmatmul.bf16.gmra.mxu0 %v2227
    %v2238 = vpop.f32.mrf.mxu0
    %v2239 = vadd.f32 %v2110, %v2238
    %v2240 = vpop.f32.mrf.mxu0
    %2241 = vdwg.mxu0
    %v2242 = vadd.f32 %v2221, %v2239
    %v2243 = vxor.u32 %v2242, 2147483648
    %v2244 = vmul.f32 %v2243, 1.442695
    %v2245 = vpow.pop %v2244
    %v2246 = vadd.f32 %v2245, 1.0
    %v2247 = vrcp.pop %v2246
    %v2248 = vmul.f32 %v2246, %v2247
    %v2249 = vsub.f32 1.0, %v2248
    %v2250 = vmul.f32 %v2247, %v2249
    %v2251 = vadd.f32 %v2247, %v2250
    %vm2252 = vweird.f32 %v2246
    %vm2253 = vweird.f32 %v2247
    %vm2254 = vmor %vm2252, %vm2253
    %v2255 = vsel %vm2254, %v2247, %v2251
    %v2256 = vand.u32 2147483647, %v2246
    %vm2257 = vcmp.eq.f32.partialorder %v2256, 8.507059e+37
    %v2258 = vand.u32 %v2246, 2147483648
    %v2259 = vor.u32 1.1754944e-38, %v2258
    %v2260 = vsel %vm2257, %v2259, %v2255
    %v2261 = vmul.f32 1.0, %v2260
    %2263 = vrot.lane.b32.xlu0 %v2239, 64
    %v2264 = vpop.permute.xlu0 %2263
    %v2266 = vmul.f32 %v2261, %v2264
    %2268 = vrot.lane.b32.xlu0 %v2266, 64
    %v2269 = vpop.permute.xlu0 %2268
    %v2271 = vadd.f32 %v2221, %v2269
    %v2272 = vtanh.pop %v2271
    %v2273 = vsub.f32 1.0, %v2261
    %2275 = vrot.lane.b32.xlu0 %v2272, 96
    %v2276 = vpop.permute.xlu0 %2275
    %v2278 = vmul.f32 %v2273, %v2276
    %v2279 = vmul.f32 %v2261, %v2220
    %v2280 = vadd.f32 %v2278, %v2279
    %v2281 = vld [vmem:[%s480] sm:$0xff]
    %v2282 = vpack.c.bf16 %v2280, %v2280
    %2284 = vrot.lane.b32.xlu0 %v2282, 96
    %v2285 = vpop.permute.xlu0 %2284
    %v2287 = vsel %vm238, %v2285, 0
    %2289 = vmatpush.bf16.msra.mxu0 0
    %2290 = vmatpush.bf16.msra.mxu0 0
    %2291 = vmatpush.bf16.msra.mxu0 0
    %2292 = vmatpush.bf16.msra.mxu0 0
    %2293 = vmatpush.bf16.msra.mxu0 0
    %2294 = vmatpush.bf16.msra.mxu0 0
    %2295 = vmatpush.bf16.msra.mxu0 %v2163
    %2296 = vmatpush.bf16.msra.mxu0 %v2162
    %2297 = vmatmul.bf16.gmra.mxu0 %v2287
    %v2298 = vpop.f32.mrf.mxu0
    %v2299 = vadd.f32 %v2110, %v2298
    %v2300 = vpop.f32.mrf.mxu0
    %2301 = vdwg.mxu0
    %v2302 = vadd.f32 %v2281, %v2299
    %v2303 = vxor.u32 %v2302, 2147483648
    %v2304 = vmul.f32 %v2303, 1.442695
    %v2305 = vpow.pop %v2304
    %v2306 = vadd.f32 %v2305, 1.0
    %v2307 = vrcp.pop %v2306
    %v2308 = vmul.f32 %v2306, %v2307
    %v2309 = vsub.f32 1.0, %v2308
    %v2310 = vmul.f32 %v2307, %v2309
    %v2311 = vadd.f32 %v2307, %v2310
    %vm2312 = vweird.f32 %v2306
    %vm2313 = vweird.f32 %v2307
    %vm2314 = vmor %vm2312, %vm2313
    %v2315 = vsel %vm2314, %v2307, %v2311
    %v2316 = vand.u32 2147483647, %v2306
    %vm2317 = vcmp.eq.f32.partialorder %v2316, 8.507059e+37
    %v2318 = vand.u32 %v2306, 2147483648
    %v2319 = vor.u32 1.1754944e-38, %v2318
    %v2320 = vsel %vm2317, %v2319, %v2315
    %v2321 = vmul.f32 1.0, %v2320
    %2323 = vrot.lane.b32.xlu0 %v2299, 64
    %v2324 = vpop.permute.xlu0 %2323
    %v2326 = vmul.f32 %v2321, %v2324
    %2328 = vrot.lane.b32.xlu0 %v2326, 64
    %v2329 = vpop.permute.xlu0 %2328
    %v2331 = vadd.f32 %v2281, %v2329
    %v2332 = vtanh.pop %v2331
    %v2333 = vsub.f32 1.0, %v2321
    %2335 = vrot.lane.b32.xlu0 %v2332, 96
    %v2336 = vpop.permute.xlu0 %2335
    %v2338 = vmul.f32 %v2333, %v2336
    %v2339 = vmul.f32 %v2321, %v2280
    %v2340 = vadd.f32 %v2338, %v2339
    %v2341 = vld [vmem:[%s547] sm:$0xff]
    %v2342 = vpack.c.bf16 %v2340, %v2340
    %2344 = vrot.lane.b32.xlu0 %v2342, 96
    %v2345 = vpop.permute.xlu0 %2344
    %v2347 = vsel %vm238, %v2345, 0
    %2349 = vmatpush.bf16.msra.mxu0 0
    %2350 = vmatpush.bf16.msra.mxu0 0
    %2351 = vmatpush.bf16.msra.mxu0 0
    %2352 = vmatpush.bf16.msra.mxu0 0
    %2353 = vmatpush.bf16.msra.mxu0 0
    %2354 = vmatpush.bf16.msra.mxu0 0
    %2355 = vmatpush.bf16.msra.mxu0 %v2163
    %2356 = vmatpush.bf16.msra.mxu0 %v2162
    %2357 = vmatmul.bf16.gmra.mxu0 %v2347
    %v2358 = vpop.f32.mrf.mxu0
    %v2359 = vadd.f32 %v2110, %v2358
    %v2360 = vpop.f32.mrf.mxu0
    %2361 = vdwg.mxu0
    %v2362 = vadd.f32 %v2341, %v2359
    %v2363 = vxor.u32 %v2362, 2147483648
    %v2364 = vmul.f32 %v2363, 1.442695
    %v2365 = vpow.pop %v2364
    %v2366 = vadd.f32 %v2365, 1.0
    %v2367 = vrcp.pop %v2366
    %v2368 = vmul.f32 %v2366, %v2367
    %v2369 = vsub.f32 1.0, %v2368
    %v2370 = vmul.f32 %v2367, %v2369
    %v2371 = vadd.f32 %v2367, %v2370
    %vm2372 = vweird.f32 %v2366
    %vm2373 = vweird.f32 %v2367
    %vm2374 = vmor %vm2372, %vm2373
    %v2375 = vsel %vm2374, %v2367, %v2371
    %v2376 = vand.u32 2147483647, %v2366
    %vm2377 = vcmp.eq.f32.partialorder %v2376, 8.507059e+37
    %v2378 = vand.u32 %v2366, 2147483648
    %v2379 = vor.u32 1.1754944e-38, %v2378
    %v2380 = vsel %vm2377, %v2379, %v2375
    %v2381 = vmul.f32 1.0, %v2380
    %2383 = vrot.lane.b32.xlu0 %v2359, 64
    %v2384 = vpop.permute.xlu0 %2383
    %v2386 = vmul.f32 %v2381, %v2384
    %2388 = vrot.lane.b32.xlu0 %v2386, 64
    %v2389 = vpop.permute.xlu0 %2388
    %v2391 = vadd.f32 %v2341, %v2389
    %v2392 = vtanh.pop %v2391
    %v2393 = vsub.f32 1.0, %v2381
    %2395 = vrot.lane.b32.xlu0 %v2392, 96
    %v2396 = vpop.permute.xlu0 %2395
    %v2398 = vmul.f32 %v2393, %v2396
    %v2399 = vmul.f32 %v2381, %v2340
    %v2400 = vadd.f32 %v2398, %v2399
    %v2401 = vld [vmem:[%s614] sm:$0xff]
    %v2402 = vpack.c.bf16 %v2400, %v2400
    %2404 = vrot.lane.b32.xlu0 %v2402, 96
    %v2405 = vpop.permute.xlu0 %2404
    %v2407 = vsel %vm238, %v2405, 0
    %2409 = vmatpush.bf16.msra.mxu0 0
    %2410 = vmatpush.bf16.msra.mxu0 0
    %2411 = vmatpush.bf16.msra.mxu0 0
    %2412 = vmatpush.bf16.msra.mxu0 0
    %2413 = vmatpush.bf16.msra.mxu0 0
    %2414 = vmatpush.bf16.msra.mxu0 0
    %2415 = vmatpush.bf16.msra.mxu0 %v2163
    %2416 = vmatpush.bf16.msra.mxu0 %v2162
    %2417 = vmatmul.bf16.gmra.mxu0 %v2407
    %v2418 = vpop.f32.mrf.mxu0
    %v2419 = vadd.f32 %v2110, %v2418
    %v2420 = vpop.f32.mrf.mxu0
    %2421 = vdwg.mxu0
    %v2422 = vadd.f32 %v2401, %v2419
    %v2423 = vxor.u32 %v2422, 2147483648
    %v2424 = vmul.f32 %v2423, 1.442695
    %v2425 = vpow.pop %v2424
    %v2426 = vadd.f32 %v2425, 1.0
    %v2427 = vrcp.pop %v2426
    %v2428 = vmul.f32 %v2426, %v2427
    %v2429 = vsub.f32 1.0, %v2428
    %v2430 = vmul.f32 %v2427, %v2429
    %v2431 = vadd.f32 %v2427, %v2430
    %vm2432 = vweird.f32 %v2426
    %vm2433 = vweird.f32 %v2427
    %vm2434 = vmor %vm2432, %vm2433
    %v2435 = vsel %vm2434, %v2427, %v2431
    %v2436 = vand.u32 2147483647, %v2426
    %vm2437 = vcmp.eq.f32.partialorder %v2436, 8.507059e+37
    %v2438 = vand.u32 %v2426, 2147483648
    %v2439 = vor.u32 1.1754944e-38, %v2438
    %v2440 = vsel %vm2437, %v2439, %v2435
    %v2441 = vmul.f32 1.0, %v2440
    %2443 = vrot.lane.b32.xlu0 %v2419, 64
    %v2444 = vpop.permute.xlu0 %2443
    %v2446 = vmul.f32 %v2441, %v2444
    %2448 = vrot.lane.b32.xlu0 %v2446, 64
    %v2449 = vpop.permute.xlu0 %2448
    %v2451 = vadd.f32 %v2401, %v2449
    %v2452 = vtanh.pop %v2451
    %v2453 = vsub.f32 1.0, %v2441
    %2455 = vrot.lane.b32.xlu0 %v2452, 96
    %v2456 = vpop.permute.xlu0 %2455
    %v2458 = vmul.f32 %v2453, %v2456
    %v2459 = vmul.f32 %v2441, %v2400
    %v2460 = vadd.f32 %v2458, %v2459
    %v2461 = vld [vmem:[%s681] sm:$0xff]
    %v2462 = vpack.c.bf16 %v2460, %v2460
    %2464 = vrot.lane.b32.xlu0 %v2462, 96
    %v2465 = vpop.permute.xlu0 %2464
    %v2467 = vsel %vm238, %v2465, 0
    %2469 = vmatpush.bf16.msra.mxu0 0
    %2470 = vmatpush.bf16.msra.mxu0 0
    %2471 = vmatpush.bf16.msra.mxu0 0
    %2472 = vmatpush.bf16.msra.mxu0 0
    %2473 = vmatpush.bf16.msra.mxu0 0
    %2474 = vmatpush.bf16.msra.mxu0 0
    %2475 = vmatpush.bf16.msra.mxu0 %v2163
    %2476 = vmatpush.bf16.msra.mxu0 %v2162
    %2477 = vmatmul.bf16.gmra.mxu0 %v2467
    %v2478 = vpop.f32.mrf.mxu0
    %v2479 = vadd.f32 %v2110, %v2478
    %v2480 = vpop.f32.mrf.mxu0
    %2481 = vdwg.mxu0
    %v2482 = vadd.f32 %v2461, %v2479
    %v2483 = vxor.u32 %v2482, 2147483648
    %v2484 = vmul.f32 %v2483, 1.442695
    %v2485 = vpow.pop %v2484
    %v2486 = vadd.f32 %v2485, 1.0
    %v2487 = vrcp.pop %v2486
    %v2488 = vmul.f32 %v2486, %v2487
    %v2489 = vsub.f32 1.0, %v2488
    %v2490 = vmul.f32 %v2487, %v2489
    %v2491 = vadd.f32 %v2487, %v2490
    %vm2492 = vweird.f32 %v2486
    %vm2493 = vweird.f32 %v2487
    %vm2494 = vmor %vm2492, %vm2493
    %v2495 = vsel %vm2494, %v2487, %v2491
    %v2496 = vand.u32 2147483647, %v2486
    %vm2497 = vcmp.eq.f32.partialorder %v2496, 8.507059e+37
    %v2498 = vand.u32 %v2486, 2147483648
    %v2499 = vor.u32 1.1754944e-38, %v2498
    %v2500 = vsel %vm2497, %v2499, %v2495
    %v2501 = vmul.f32 1.0, %v2500
    %2503 = vrot.lane.b32.xlu0 %v2479, 64
    %v2504 = vpop.permute.xlu0 %2503
    %v2506 = vmul.f32 %v2501, %v2504
    %2508 = vrot.lane.b32.xlu0 %v2506, 64
    %v2509 = vpop.permute.xlu0 %2508
    %v2511 = vadd.f32 %v2461, %v2509
    %v2512 = vtanh.pop %v2511
    %v2513 = vsub.f32 1.0, %v2501
    %2515 = vrot.lane.b32.xlu0 %v2512, 96
    %v2516 = vpop.permute.xlu0 %2515
    %v2518 = vmul.f32 %v2513, %v2516
    %v2519 = vmul.f32 %v2501, %v2460
    %v2520 = vadd.f32 %v2518, %v2519
    %v2521 = vld [vmem:[%s748] sm:$0xff]
    %v2522 = vpack.c.bf16 %v2520, %v2520
    %2524 = vrot.lane.b32.xlu0 %v2522, 96
    %v2525 = vpop.permute.xlu0 %2524
    %v2527 = vsel %vm238, %v2525, 0
    %2529 = vmatpush.bf16.msra.mxu0 0
    %2530 = vmatpush.bf16.msra.mxu0 0
    %2531 = vmatpush.bf16.msra.mxu0 0
    %2532 = vmatpush.bf16.msra.mxu0 0
    %2533 = vmatpush.bf16.msra.mxu0 0
    %2534 = vmatpush.bf16.msra.mxu0 0
    %2535 = vmatpush.bf16.msra.mxu0 %v2163
    %2536 = vmatpush.bf16.msra.mxu0 %v2162
    %2537 = vmatmul.bf16.gmra.mxu0 %v2527
    %v2538 = vpop.f32.mrf.mxu0
    %v2539 = vadd.f32 %v2110, %v2538
    %v2540 = vpop.f32.mrf.mxu0
    %2541 = vdwg.mxu0
    %v2542 = vadd.f32 %v2521, %v2539
    %v2543 = vxor.u32 %v2542, 2147483648
    %v2544 = vmul.f32 %v2543, 1.442695
    %v2545 = vpow.pop %v2544
    %v2546 = vadd.f32 %v2545, 1.0
    %v2547 = vrcp.pop %v2546
    %v2548 = vmul.f32 %v2546, %v2547
    %v2549 = vsub.f32 1.0, %v2548
    %v2550 = vmul.f32 %v2547, %v2549
    %v2551 = vadd.f32 %v2547, %v2550
    %vm2552 = vweird.f32 %v2546
    %vm2553 = vweird.f32 %v2547
    %vm2554 = vmor %vm2552, %vm2553
    %v2555 = vsel %vm2554, %v2547, %v2551
    %v2556 = vand.u32 2147483647, %v2546
    %vm2557 = vcmp.eq.f32.partialorder %v2556, 8.507059e+37
    %v2558 = vand.u32 %v2546, 2147483648
    %v2559 = vor.u32 1.1754944e-38, %v2558
    %v2560 = vsel %vm2557, %v2559, %v2555
    %v2561 = vmul.f32 1.0, %v2560
    %2563 = vrot.lane.b32.xlu0 %v2539, 64
    %v2564 = vpop.permute.xlu0 %2563
    %v2566 = vmul.f32 %v2561, %v2564
    %2568 = vrot.lane.b32.xlu0 %v2566, 64
    %v2569 = vpop.permute.xlu0 %2568
    %v2571 = vadd.f32 %v2521, %v2569
    %v2572 = vtanh.pop %v2571
    %v2573 = vsub.f32 1.0, %v2561
    %2575 = vrot.lane.b32.xlu0 %v2572, 96
    %v2576 = vpop.permute.xlu0 %2575
    %v2578 = vmul.f32 %v2573, %v2576
    %v2579 = vmul.f32 %v2561, %v2520
    %v2580 = vadd.f32 %v2578, %v2579
    %v2581 = vpack.c.bf16 %v2580, %v2580
    %v2582 = vld [vmem:[#allocation13] sm:$0xf]
    %v2583 = vld [vmem:[#allocation13 + $0x4] sm:$0xf]
    %v2584 = vld [vmem:[#allocation13 + $0x8] sm:$0xf]
    %v2585 = vld [vmem:[#allocation13 + $0xc] sm:$0xf]
    %v2586 = vld [vmem:[#allocation15] sm:$0x1]
    %v2588 = vperm.slane %v2586, 0
    %2591 = vrot.lane.b32.xlu0 %v2581, 96
    %v2592 = vpop.permute.xlu0 %2591
    %v2597 = vunpack.c.l.b16 %v2582
    %v2598 = vunpack.c.l.b16 %v2583
    %v2599 = vunpack.c.l.b16 %v2584
    %v2600 = vunpack.c.l.b16 %v2585
    %v2601 = vpack.c.b16 %v2598, %v2597
    %v2602 = vpack.c.b16 %v2600, %v2599
    %v2606 = vsel %vm238, %v2592, 0
    %2608 = vmatpush.bf16.msra.mxu0 0
    %2609 = vmatpush.bf16.msra.mxu0 0
    %2610 = vmatpush.bf16.msra.mxu0 0
    %2611 = vmatpush.bf16.msra.mxu0 0
    %2612 = vmatpush.bf16.msra.mxu0 0
    %2613 = vmatpush.bf16.msra.mxu0 0
    %2614 = vmatpush.bf16.msra.mxu0 %v2602
    %2615 = vmatpush.bf16.msra.mxu0 %v2601
    %2616 = vmatmul.bf16.gmra.mxu0 %v2606
    %v2617 = vpop.f32.mrf.mxu0
    %v2618 = vadd.f32 %v2588, %v2617
    %v2619 = vpop.f32.mrf.mxu0
    %2620 = vdwg.mxu0
    %v2621 = vtanh.pop %v2618
    %v2622 = vpack.c.bf16 %v2621, %v2621
    %v2623 = vld [vmem:[#allocation16] sm:$0xf]
    %v2624 = vld [vmem:[#allocation16 + $0x4] sm:$0xf]
    %v2625 = vld [vmem:[#allocation16 + $0x8] sm:$0xf]
    %v2626 = vld [vmem:[#allocation16 + $0xc] sm:$0xf]
    %v2627 = vld [vmem:[#allocation16 + $0x10] sm:$0xf]
    %v2628 = vld [vmem:[#allocation16 + $0x14] sm:$0xf]
    %v2629 = vld [vmem:[#allocation16 + $0x18] sm:$0xf]
    %v2630 = vld [vmem:[#allocation16 + $0x1c] sm:$0xf]
    %v2631 = vld [vmem:[%s9] sm:$0x1]
    %v2633 = vperm.slane %v2631, 0
    %v2643 = vunpack.c.l.b16 %v2623
    %v2644 = vunpack.c.l.b16 %v2624
    %v2645 = vunpack.c.l.b16 %v2625
    %v2646 = vunpack.c.l.b16 %v2626
    %v2647 = vunpack.c.l.b16 %v2627
    %v2648 = vunpack.c.l.b16 %v2628
    %v2649 = vunpack.c.l.b16 %v2629
    %v2650 = vunpack.c.l.b16 %v2630
    %v2651 = vpack.c.b16 %v2644, %v2643
    %v2652 = vpack.c.b16 %v2646, %v2645
    %v2653 = vpack.c.b16 %v2648, %v2647
    %v2654 = vpack.c.b16 %v2650, %v2649
    %vm2659 = vcmask 523264
    %v2661 = vsel %vm2659, %v2622, 0
    %2663 = vmatpush.bf16.msra.mxu0 0
    %2664 = vmatpush.bf16.msra.mxu0 0
    %2665 = vmatpush.bf16.msra.mxu0 0
    %2666 = vmatpush.bf16.msra.mxu0 0
    %2667 = vmatpush.bf16.msra.mxu0 %v2654
    %2668 = vmatpush.bf16.msra.mxu0 %v2653
    %2669 = vmatpush.bf16.msra.mxu0 %v2652
    %2670 = vmatpush.bf16.msra.mxu0 %v2651
    %2671 = vmatmul.bf16.gmra.mxu0 %v2661
    %v2672 = vpop.f32.mrf.mxu0
    %v2673 = vadd.f32 %v2633, %v2672
    %v2674 = vpop.f32.mrf.mxu0
    %2675 = vdwg.mxu0
    %v2676 = vtanh.pop %v2673
    %v2677 = vpack.c.bf16 %v2676, %v2676
    %v2678 = vld [vmem:[#allocation18] sm:$0xf]
    %v2679 = vld [vmem:[#allocation18 + $0x4] sm:$0xf]
    %v2680 = vld [vmem:[#allocation18 + $0x8] sm:$0xf]
    %v2681 = vld [vmem:[#allocation18 + $0xc] sm:$0xf]
    %v2682 = vld [vmem:[#allocation18 + $0x10] sm:$0xf]
    %v2683 = vld [vmem:[#allocation18 + $0x14] sm:$0xf]
    %v2684 = vld [vmem:[#allocation18 + $0x18] sm:$0xf]
    %v2685 = vld [vmem:[#allocation18 + $0x1c] sm:$0xf]
    %v2686 = vld [vmem:[%s11] sm:$0x1]
    %v2688 = vperm.slane %v2686, 0
    %v2698 = vunpack.c.l.b16 %v2678
    %v2699 = vunpack.c.l.b16 %v2679
    %v2700 = vunpack.c.l.b16 %v2680
    %v2701 = vunpack.c.l.b16 %v2681
    %v2702 = vunpack.c.l.b16 %v2682
    %v2703 = vunpack.c.l.b16 %v2683
    %v2704 = vunpack.c.l.b16 %v2684
    %v2705 = vunpack.c.l.b16 %v2685
    %v2706 = vpack.c.b16 %v2699, %v2698
    %v2707 = vpack.c.b16 %v2701, %v2700
    %v2708 = vpack.c.b16 %v2703, %v2702
    %v2709 = vpack.c.b16 %v2705, %v2704
    %v2715 = vsel %vm2659, %v2677, 0
    %2717 = vmatpush.bf16.msra.mxu0 0
    %2718 = vmatpush.bf16.msra.mxu0 0
    %2719 = vmatpush.bf16.msra.mxu0 0
    %2720 = vmatpush.bf16.msra.mxu0 0
    %2721 = vmatpush.bf16.msra.mxu0 %v2709
    %2722 = vmatpush.bf16.msra.mxu0 %v2708
    %2723 = vmatpush.bf16.msra.mxu0 %v2707
    %2724 = vmatpush.bf16.msra.mxu0 %v2706
    %2725 = vmatmul.bf16.gmra.mxu0 %v2715
    %v2726 = vpop.f32.mrf.mxu0
    %v2727 = vadd.f32 %v2688, %v2726
    %v2728 = vpop.f32.mrf.mxu0
    %2729 = vdwg.mxu0
    %v2730 = vtanh.pop %v2727
    %v2731 = vpack.c.bf16 %v2730, %v2730
    %v2732 = vld [vmem:[#allocation19] sm:$0xff]
    %v2733 = vld [vmem:[#allocation19 + $0x8] sm:$0xff]
    %v2734 = vld [vmem:[#allocation19 + $0x10] sm:$0xff]
    %v2735 = vld [vmem:[#allocation19 + $0x18] sm:$0xff]
    %v2736 = vld [vmem:[#allocation19 + $0x20] sm:$0xff]
    %v2737 = vld [vmem:[#allocation19 + $0x28] sm:$0xff]
    %v2738 = vld [vmem:[#allocation19 + $0x30] sm:$0xff]
    %v2739 = vld [vmem:[#allocation19 + $0x38] sm:$0xff]
    %v2740 = vld [vmem:[%s13] sm:$0x3]
    %v2742 = vperm.slane %v2740, 0
    %v2743 = vperm.slane %v2740, 1
    %v2754 = vunpack.c.l.b16 %v2732
    %v2755 = vunpack.c.h.b16 %v2732
    %v2756 = vunpack.c.l.b16 %v2733
    %v2757 = vunpack.c.h.b16 %v2733
    %v2758 = vunpack.c.l.b16 %v2734
    %v2759 = vunpack.c.h.b16 %v2734
    %v2760 = vunpack.c.l.b16 %v2735
    %v2761 = vunpack.c.h.b16 %v2735
    %v2762 = vunpack.c.l.b16 %v2736
    %v2763 = vunpack.c.h.b16 %v2736
    %v2764 = vunpack.c.l.b16 %v2737
    %v2765 = vunpack.c.h.b16 %v2737
    %v2766 = vunpack.c.l.b16 %v2738
    %v2767 = vunpack.c.h.b16 %v2738
    %v2768 = vunpack.c.l.b16 %v2739
    %v2769 = vunpack.c.h.b16 %v2739
    %v2770 = vpack.c.b16 %v2756, %v2754
    %v2771 = vpack.c.b16 %v2757, %v2755
    %v2772 = vpack.c.b16 %v2760, %v2758
    %v2773 = vpack.c.b16 %v2761, %v2759
    %v2774 = vpack.c.b16 %v2764, %v2762
    %v2775 = vpack.c.b16 %v2765, %v2763
    %v2776 = vpack.c.b16 %v2768, %v2766
    %v2777 = vpack.c.b16 %v2769, %v2767
    %v2787 = vsel %vm2659, %v2731, 0
    %2789 = vmatpush.bf16.msra.mxu0 0
    %2790 = vmatpush.bf16.msra.mxu0 0
    %2791 = vmatpush.bf16.msra.mxu0 0
    %2792 = vmatpush.bf16.msra.mxu0 0
    %2793 = vmatpush.bf16.msra.mxu0 %v2776
    %2794 = vmatpush.bf16.msra.mxu0 %v2774
    %2795 = vmatpush.bf16.msra.mxu0 %v2772
    %2796 = vmatpush.bf16.msra.mxu0 %v2770
    %2797 = vmatmul.bf16.gmra.mxu0 %v2787
    %v2798 = vpop.f32.mrf.mxu0
    %v2799 = vadd.f32 %v2742, %v2798
    %v2800 = vpop.f32.mrf.mxu0
    %2801 = vdwg.mxu0
    %2802 = vmatpush.bf16.msra.mxu0 0
    %2803 = vmatpush.bf16.msra.mxu0 0
    %2804 = vmatpush.bf16.msra.mxu0 0
    %2805 = vmatpush.bf16.msra.mxu0 0
    %2806 = vmatpush.bf16.msra.mxu0 %v2777
    %2807 = vmatpush.bf16.msra.mxu0 %v2775
    %2808 = vmatpush.bf16.msra.mxu0 %v2773
    %2809 = vmatpush.bf16.msra.mxu0 %v2771
    %2810 = vmatmul.bf16.gmra.mxu0 %v2787
    %v2811 = vpop.f32.mrf.mxu0
    %v2812 = vadd.f32 %v2743, %v2811
    %v2813 = vpop.f32.mrf.mxu0
    %2814 = vdwg.mxu0
    %v2815 = vld [vmem:[#allocation7] sm:$0xff]
    %v2816 = vsub.f32 %v2815, %v2799
    %v2817 = vsub.f32 0.0, %v2812
    %v2818 = vmul.f32 %v2817, 1.442695
    %v2819 = vpow.pop %v2818
    %v2820 = vmul.f32 %v2816, %v2819
    %2821 = vadd.xlane.f32.xlu0 %v2812
    %v2822 = vpop.xlane.xlu0 %2821
    %v2823 = vlaneseq
    %v2824 = vand.u32 %v2823, 127
    %vm2825 = vcmp.eq.s32.totalorder %v2824, 16
    %v2826 = vsel %vm2825, %v2822, %v2820
    %2827 = vst [vmem:[#allocation21] sm:$0xff] %v2826
    // Predicated region
    $region98: #{tpu_custom_call.1} parent=1 // pred_check
      _
    $region99: #{tpu_custom_call.1} parent=1 // pred_check_branch
      %2829 = sbr.rel (0) target = $region101
    $region100: #{tpu_custom_call.1} parent=1 // pred_region
      %2831 = vsyncadd [#allocation6], 0
      %s2833 = sshll.u32 [#allocation21], 4
      %s2834 = int_to_ptr.vmem [resolvable:$true] %s2833
      %s2835 = sshll.u32 %s14, 4
      %s2836 = int_to_ptr.hbm [resolvable:$true] %s2835
      %2838 = dma.vmem_to_hbm [thread:$0]  %s2834, 128, %s2836, [#allocation6]
    $region101: #{tpu_custom_call.1} parent=1 // pred_fallthru
      _
    // Predicated region
    $region102: #{tpu_custom_call.1} parent=1 // pred_check
      _
    $region103: #{tpu_custom_call.1} parent=1 // pred_check_branch
      %2840 = sbr.rel (0) target = $region105
    $region104: #{tpu_custom_call.1} parent=1 // pred_region
      %2842 = dma.done [#allocation6], 128
    $region105: #{tpu_custom_call.1} parent=1 // pred_fallthru
      _
    %2843 = vsyncpa [#allocation5], 1
    %2844 = vsyncpa [#allocation8], 1
    %2845 = vsyncpa [#allocation11], 1
    %2846 = vsyncpa [#allocation14], 1
    %2847 = vsyncpa [#allocation17], 1
    %2848 = vsyncpa [#allocation20], 1
    %2849 = vsyncpa [#allocation6], 1

</llo_original>
